<compile_context>
chip_gen: v7x
topology: tpu7x:2x2x1
jax: 0.10.0
libtpu: 0.0.40
codegen_flags: <defaults>
</compile_context>

<pallas_src>
import math
import functools

import jax
import jax.numpy as jnp
from jax.experimental import pallas as pl
from jax.experimental.pallas import tpu as pltpu

NEG_SLOPE = 0.2
ACT_SCALE = math.sqrt(2.0)      # FusedLeakyReLU output scale
EPS = 1e-8
INV_SQRT2 = 1.0 / math.sqrt(2.0)


def _leaky_relu(x):
    return jnp.where(x >= 0, x, NEG_SLOPE * x)


def _conv3x3(pad_ref, w_ref, rows, W, C, dem, bias):
    """3x3 'SAME' conv of a zero-padded (rows+2, W+2, C) VMEM buffer against an
    im2col weight (9*C, Cout), computed as 3 accumulating MXU dots with
    K = 3*C (one per kernel row).  Peak patch temporary is ~3x smaller than a
    single (rows*W, 9*C) slab while K stays MXU-friendly.  Epilogue applies
    demodulation + bias + LeakyReLU; the sqrt(2) activation/residual scales
    are folded into the wrapper-side constants, so no scaling here."""
    acc = None
    for kh in range(3):
        chunk = jnp.concatenate(
            [pad_ref[kh:kh + rows, kw:kw + W, :] for kw in range(3)],
            axis=-1).reshape(rows * W, 3 * C)
        part = jnp.dot(chunk, w_ref[kh * 3 * C:(kh + 1) * 3 * C, :],
                       preferred_element_type=jnp.float32)
        acc = part if acc is None else acc + part
    return _leaky_relu(acc * dem + bias)


def resblock_kernel(*refs, TH, W, use_skip_conv, cdt):
    if use_skip_conv:
        (x_ref, xtop_ref, xbot_ref, mod1_ref, mod2_ref, dem1_ref, dem2_ref,
         b1_ref, b2_ref, w1_ref, w2_ref, wskip_ref,
         o_ref, xpad_ref, h1pad_ref) = refs
    else:
        (x_ref, xtop_ref, xbot_ref, mod1_ref, mod2_ref, dem1_ref, dem2_ref,
         b1_ref, b2_ref, w1_ref, w2_ref,
         o_ref, xpad_ref, h1pad_ref) = refs
        wskip_ref = None

    s = pl.program_id(1)
    n_strips = pl.num_programs(1)
    Cin = x_ref.shape[-1]
    Cmid = w1_ref.shape[-1]
    Cout = w2_ref.shape[-1]
    R1 = TH + 2                                   # h1 rows needed by conv2

    mod1 = mod1_ref[0]                            # (1, Cin)   f32
    mod2s = mod2_ref[0]                           # (1, Cmid)  f32, has sqrt(2) fold
    dem1 = dem1_ref[0]                            # (1, Cmid)  f32
    dem2 = dem2_ref[0]                            # (1, Cout)  f32

    # ---- assemble modulated, zero-padded conv1 input in VMEM ----
    # Only the two 1-pixel border columns are zeroed (cheap skinny columns);
    # the interior is fully overwritten every step.  H-halo rows come straight
    # from HBM via the 2-row halo blocks; out-of-image halos are zeroed below.
    xpad_ref[:, pl.ds(0, 1), :] = jnp.zeros((TH + 4, 1, Cin), cdt)
    xpad_ref[:, pl.ds(W + 1, 1), :] = jnp.zeros((TH + 4, 1, Cin), cdt)
    xpad_ref[pl.ds(0, 2), pl.ds(1, W), :] = (xtop_ref[0] * mod1).astype(cdt)
    xpad_ref[pl.ds(2, TH), pl.ds(1, W), :] = (x_ref[0] * mod1).astype(cdt)
    xpad_ref[pl.ds(TH + 2, 2), pl.ds(1, W), :] = (xbot_ref[0] * mod1).astype(cdt)

    @pl.when(s == 0)
    def _():  # rows above the image are zero padding
        xpad_ref[pl.ds(0, 2), :, :] = jnp.zeros((2, W + 2, Cin), cdt)

    @pl.when(s == n_strips - 1)
    def _():  # rows below the image are zero padding
        xpad_ref[pl.ds(TH + 2, 2), :, :] = jnp.zeros((2, W + 2, Cin), cdt)

    # ---- StyledConv 1: 3 accumulating K=3*Cin dots ----
    # TODO(synk): NoiseInjection weight is initialized to 0 -> exact no-op; the
    # random-noise branch (nonzero trained weight) is intentionally not modeled.
    h1 = _conv3x3(xpad_ref, w1_ref, R1, W, Cin, dem1, b1_ref[...])  # (R1*W,Cmid) f32

    # ---- assemble modulated, zero-padded conv2 input in VMEM ----
    # mod2s already carries conv1's sqrt(2) activation scale.
    h1pad_ref[:, pl.ds(0, 1), :] = jnp.zeros((R1, 1, Cmid), cdt)
    h1pad_ref[:, pl.ds(W + 1, 1), :] = jnp.zeros((R1, 1, Cmid), cdt)
    h1pad_ref[:, pl.ds(1, W), :] = (h1 * mod2s).astype(cdt).reshape(R1, W, Cmid)

    @pl.when(s == 0)
    def _():  # h1 "row above the image" must be zero padding, not conv1(oob)
        h1pad_ref[pl.ds(0, 1), :, :] = jnp.zeros((1, W + 2, Cmid), cdt)

    @pl.when(s == n_strips - 1)
    def _():
        h1pad_ref[pl.ds(R1 - 1, 1), :, :] = jnp.zeros((1, W + 2, Cmid), cdt)

    # ---- StyledConv 2: ACT_SCALE * 1/sqrt(2) == 1 -> no epilogue scaling ----
    h2 = _conv3x3(h1pad_ref, w2_ref, TH, W, Cmid, dem2, b2_ref[...])  # (TH*W,Cout)

    # ---- skip path + residual merge (1/sqrt(2) pre-folded into wskip) ----
    xc = x_ref[0].reshape(TH * W, Cin)
    if use_skip_conv:
        skip = jnp.dot(xc, wskip_ref[...],
                       preferred_element_type=jnp.float32)     # scaled 1x1 EqualConv
    else:
        skip = xc.astype(jnp.float32) * INV_SQRT2              # Identity / sqrt(2)

    o_ref[0] = (skip + h2).reshape(TH, W, Cout).astype(o_ref.dtype)


# ---------------------------------------------------------------------------
# wrapper helpers
# ---------------------------------------------------------------------------
def _round_up(x, m):
    return ((x + m - 1) // m) * m


def _tpu_physical_vmem_bytes():
    try:
        info = pltpu.get_tpu_info()
        v = getattr(info, "vmem_capacity_bytes", None)
        if v:
            return int(v)
    except Exception:
        pass
    try:
        kind = jax.devices()[0].device_kind.lower()
        if "v7" in kind:
            return 64 * 1024 * 1024
    except Exception:
        pass
    return 128 * 1024 * 1024


def _vmem_bytes_estimate(TH, W, cin, cmid, cout, cbytes, obytes):
    """Per-strip VMEM working set.  Weights/biases are single-buffered; the
    two conv patch/accumulator sets are NOT simultaneously live -> max()."""
    f32 = 4
    R1 = TH + 2
    b = 0
    b += 2 * (TH + 4) * W * cin * cbytes              # input strip + halos (dbl buf)
    b += 2 * TH * W * cout * obytes                   # output strip (dbl buf)
    b += (9 * cin * cmid + 9 * cmid * cout + cin * cout + 2 * cout) * cbytes
    b += (TH + 4) * (W + 2) * cin * cbytes            # xpad scratch
    b += R1 * (W + 2) * cmid * cbytes                 # h1pad scratch
    conv1_live = R1 * W * (3 * cin * cbytes + 2 * cmid * f32)      # chunk + acc/part
    conv2_live = (TH * W * (3 * cmid * cbytes + 2 * cout * f32)
                  + R1 * W * cmid * f32)                           # + live h1
    b += max(conv1_live, conv2_live)
    b += TH * W * cout * f32                          # residual merge temp
    return b


def _pick_row_tile(H, W, cin, cmid, cout, cbytes, obytes, vmem_budget,
                   min_strips=1):
    """Largest even divisor of H whose per-strip working set fits the budget,
    subject to producing at least `min_strips` strips (v7x 2-TC occupancy)."""
    cands = [t for t in range(H, 1, -1) if H % t == 0 and t % 2 == 0]
    if not cands:
        return H
    fit = [t for t in cands
           if _vmem_bytes_estimate(t, W, cin, cmid, cout, cbytes, obytes)
           <= vmem_budget]
    if not fit:
        fit = [cands[-1]]       # fallback: smallest tile (may still overshoot)
    ok = [t for t in fit if H // t >= min_strips]
    return ok[0] if ok else fit[-1]


def init_params(key, inch, outch, styledim):
    ks = jax.random.split(key, 5)
    p = {
        "w1": jax.random.normal(ks[0], (outch, inch, 3, 3), jnp.float32),
        "mod1_w": jax.random.normal(ks[1], (inch, styledim), jnp.float32),
        "mod1_b": jnp.ones((inch,), jnp.float32),            # EqualLinear bias_init=1
        "act1_b": jnp.zeros((outch,), jnp.float32),          # FusedLeakyReLU bias
        "w2": jax.random.normal(ks[2], (outch, outch, 3, 3), jnp.float32),
        "mod2_w": jax.random.normal(ks[3], (outch, styledim), jnp.float32),
        "mod2_b": jnp.ones((outch,), jnp.float32),
        "act2_b": jnp.zeros((outch,), jnp.float32),
    }
    if inch != outch:
        p["wskip"] = jax.random.normal(ks[4], (outch, inch, 1, 1), jnp.float32)
    return p


def resnet_block_forward(x_nchw, style, params, inch, outch, styledim, *,
                         row_tile=None, compute_dtype=jnp.bfloat16,
                         out_dtype=jnp.float32, channel_pad=128):
    B, C, H, W = x_nchw.shape
    assert C == inch
    assert H % 2 == 0, "kernel assumes an even number of rows"

    cbytes = jnp.dtype(compute_dtype).itemsize
    obytes = jnp.dtype(out_dtype).itemsize

    # ---- optional channel padding to a lane-friendly multiple (default 128) ----
    if channel_pad:
        Cin_p = _round_up(inch, channel_pad)
        Cout_p = _round_up(outch, channel_pad)
    else:
        Cin_p, Cout_p = inch, outch

    def padc(a, axis, new):
        if a.shape[axis] == new:
            return a
        pads = [(0, 0)] * a.ndim
        pads[axis] = (0, new - a.shape[axis])
        return jnp.pad(a, pads)

    w1 = padc(padc(params["w1"], 0, Cout_p), 1, Cin_p)     # (Cout_p, Cin_p, 3, 3)
    w2 = padc(padc(params["w2"], 0, Cout_p), 1, Cout_p)    # (Cout_p, Cout_p, 3, 3)
    mod1_w = padc(params["mod1_w"], 0, Cin_p)
    mod1_b = padc(params["mod1_b"], 0, Cin_p)
    mod2_w = padc(params["mod2_w"], 0, Cout_p)
    mod2_b = padc(params["mod2_b"], 0, Cout_p)
    b1 = padc(params["act1_b"], 0, Cout_p)
    b2 = padc(params["act2_b"], 0, Cout_p)
    use_skip_conv = (inch != outch)

    # ---- tiny XLA glue: style modulation + demodulation (hoisted out of kernel).
    # Scales use the ORIGINAL fan-in (EqualLinear / EqualConv semantics).
    lin_scale = 1.0 / math.sqrt(styledim)
    scale1 = 1.0 / math.sqrt(inch * 9)
    scale2 = 1.0 / math.sqrt(outch * 9)

    mod1 = style @ (mod1_w * lin_scale).T + mod1_b                 # (B, Cin_p)
    mod2 = style @ (mod2_w * lin_scale).T + mod2_b                 # (B, Cout_p)

    w1s = w1 * scale1
    w1_mat = jnp.transpose(w1s, (2, 3, 1, 0)).reshape(9 * Cin_p, Cout_p)
    wsq1 = jnp.sum(w1s * w1s, axis=(2, 3)).T                       # (Cin_p, Cout_p)
    demod1 = jax.lax.rsqrt(jnp.square(mod1) @ wsq1 + EPS)          # (B, Cout_p)

    w2s = w2 * scale2
    w2_mat = jnp.transpose(w2s, (2, 3, 1, 0)).reshape(9 * Cout_p, Cout_p)
    wsq2 = jnp.sum(w2s * w2s, axis=(2, 3)).T
    demod2 = jax.lax.rsqrt(jnp.square(mod2) @ wsq2 + EPS)          # (B, Cout_p)

    # Constant folds: conv1's FusedLeakyReLU sqrt(2) scale goes into mod2
    # (after demod2 is computed); conv2's sqrt(2) cancels with the residual
    # 1/sqrt(2); the skip 1/sqrt(2) goes into the 1x1 weight host-side.
    mod2 = mod2 * ACT_SCALE

    # Raw NHWC input (no HBM spatial padding); halves HBM traffic with bf16.
    x = jnp.transpose(x_nchw, (0, 2, 3, 1)).astype(compute_dtype)
    x = padc(x, 3, Cin_p)

    mod1 = mod1.reshape(B, 1, Cin_p).astype(jnp.float32)
    mod2 = mod2.reshape(B, 1, Cout_p).astype(jnp.float32)
    demod1 = demod1.reshape(B, 1, Cout_p).astype(jnp.float32)
    demod2 = demod2.reshape(B, 1, Cout_p).astype(jnp.float32)
    b1 = b1.reshape(1, Cout_p).astype(jnp.float32)
    b2 = b2.reshape(1, Cout_p).astype(jnp.float32)
    w1_mat = w1_mat.astype(compute_dtype)
    w2_mat = w2_mat.astype(compute_dtype)

    # ---- chip-aware tiling / VMEM limits ----
    phys_vmem = _tpu_physical_vmem_bytes()
    small_vmem = phys_vmem <= 72 * 1024 * 1024      # v7x-class: 64 MiB/TC, 2 TCs
    if row_tile is None:
        budget = (24 if small_vmem else 48) * 1024 * 1024
        min_strips = max(1, -(-2 // B)) if small_vmem else 1   # keep both TCs busy
        row_tile = _pick_row_tile(H, W, Cin_p, Cout_p, Cout_p, cbytes, obytes,
                                  budget, min_strips)
    TH = row_tile
    assert H % TH == 0 and TH % 2 == 0
    S = H // TH
    TH2 = TH // 2
    HB2 = H // 2                 # number of 2-row halo blocks along H

    # Grid-invariant operands: whole-array resident in VMEM (single-buffered).
    vmem_full = pl.BlockSpec(memory_space=pltpu.MemorySpace.VMEM)

    in_specs = [
        # raw input strip
        pl.BlockSpec((1, TH, W, Cin_p), lambda b, s: (b, s, 0, 0)),
        # 2-row top / bottom halos, read straight from x (clamped at the image
        # boundary; out-of-image halos are zeroed inside the kernel)
        pl.BlockSpec((1, 2, W, Cin_p),
                     lambda b, s: (b, jnp.maximum(s * TH2 - 1, 0), 0, 0)),
        pl.BlockSpec((1, 2, W, Cin_p),
                     lambda b, s: (b, jnp.minimum(s * TH2 + TH2, HB2 - 1), 0, 0)),
        pl.BlockSpec((1, 1, Cin_p), lambda b, s: (b, 0, 0)),    # mod1
        pl.BlockSpec((1, 1, Cout_p), lambda b, s: (b, 0, 0)),   # mod2 (sqrt2 folded)
        pl.BlockSpec((1, 1, Cout_p), lambda b, s: (b, 0, 0)),   # demod1
        pl.BlockSpec((1, 1, Cout_p), lambda b, s: (b, 0, 0)),   # demod2
        vmem_full,                                              # bias1
        vmem_full,                                              # bias2
        vmem_full,                                              # w1 (im2col)
        vmem_full,                                              # w2 (im2col)
    ]
    args = [x, x, x, mod1, mod2, demod1, demod2, b1, b2, w1_mat, w2_mat]
    if use_skip_conv:   # only pass the skip weight when it is actually used
        wskip = padc(padc(params["wskip"][:, :, 0, 0], 0, Cout_p), 1, Cin_p)
        wskip = (wskip * (INV_SQRT2 / math.sqrt(inch))).T       # residual /sqrt(2) fold
        in_specs.append(vmem_full)
        args.append(wskip.astype(compute_dtype))

    est = _vmem_bytes_estimate(TH, W, Cin_p, Cout_p, Cout_p, cbytes, obytes)
    cap = min(phys_vmem - 8 * 1024 * 1024, 100 * 1024 * 1024)   # ~56 MiB on v7x
    vmem_limit = int(min(max(32 * 1024 * 1024, 2 * est), cap))

    kernel = functools.partial(resblock_kernel, TH=TH, W=W,
                               use_skip_conv=use_skip_conv, cdt=compute_dtype)

    out_nhwc = pl.pallas_call(
        kernel,
        out_shape=jax.ShapeDtypeStruct((B, H, W, Cout_p), out_dtype),
        grid=(B, S),
        in_specs=in_specs,
        out_specs=pl.BlockSpec((1, TH, W, Cout_p), lambda b, s: (b, s, 0, 0)),
        scratch_shapes=[
            pltpu.VMEM((TH + 4, W + 2, Cin_p), compute_dtype),   # padded conv1 input
            pltpu.VMEM((TH + 2, W + 2, Cout_p), compute_dtype),  # padded conv2 input
        ],
        compiler_params=pltpu.CompilerParams(
            dimension_semantics=("parallel", "parallel"),
            vmem_limit_bytes=vmem_limit),
    )(*args)

    out_nhwc = out_nhwc[..., :outch]                 # drop lane-padding channels
    return jnp.transpose(out_nhwc, (0, 3, 1, 2))     # back to NCHW


# ---------------- pure-JAX reference (for correctness check) ----------------
def reference_forward(x_nchw, style, params, inch, outch, styledim):
    lin_scale = 1.0 / math.sqrt(styledim)

    def styled_conv(x, w, mod_w, mod_b, act_b, scale):
        mod = style @ (mod_w * lin_scale).T + mod_b                    # (B, Ci)
        weight = scale * w[None] * mod[:, None, :, None, None]         # (B,O,I,3,3)
        demod = jax.lax.rsqrt(jnp.sum(weight ** 2, axis=(2, 3, 4)) + EPS)
        weight = weight * demod[:, :, None, None, None]

        def conv_one(xb, wb):
            return jax.lax.conv_general_dilated(
                xb[None], wb, (1, 1), "SAME",
                dimension_numbers=("NCHW", "OIHW", "NCHW"),
                precision=jax.lax.Precision.HIGHEST)[0]

        out = jax.vmap(conv_one)(x, weight)
        out = out + act_b[None, :, None, None]
        return jnp.where(out >= 0, out, NEG_SLOPE * out) * ACT_SCALE

    h1 = styled_conv(x_nchw, params["w1"], params["mod1_w"], params["mod1_b"],
                     params["act1_b"], 1.0 / math.sqrt(inch * 9))
    h2 = styled_conv(h1, params["w2"], params["mod2_w"], params["mod2_b"],
                     params["act2_b"], 1.0 / math.sqrt(outch * 9))
    if inch != outch:
        skw = params["wskip"] * (1.0 / math.sqrt(inch))
        skip = jax.lax.conv_general_dilated(
            x_nchw, skw, (1, 1), "VALID",
            dimension_numbers=("NCHW", "OIHW", "NCHW"),
            precision=jax.lax.Precision.HIGHEST)
    else:
        skip = x_nchw
    return (skip + h2) / math.sqrt(2.0)


if __name__ == "__main__":
    B, inch, outch, styledim, H, W = 2, 4, 8, 16, 16, 16
    key = jax.random.PRNGKey(0)
    kx, ks, kp = jax.random.split(key, 3)
    x = jax.random.normal(kx, (B, inch, H, W), jnp.float32)
    style = jax.random.normal(ks, (B, styledim), jnp.float32)
    params = init_params(kp, inch, outch, styledim)

    ref = jax.block_until_ready(
        reference_forward(x, style, params, inch, outch, styledim))
    ref_scale = float(jnp.max(jnp.abs(ref)))

    # f32 MXU-operand path, 4 row strips (exercises halo + channel padding).
    out_f32 = jax.block_until_ready(
        resnet_block_forward(x, style, params, inch, outch, styledim,
                             row_tile=4, compute_dtype=jnp.float32))
    assert out_f32.shape == (B, outch, H, W)
    err = float(jnp.max(jnp.abs(out_f32 - ref)))
    assert err < 5e-3, f"f32 mismatch vs reference: max_err={err}"

    # bf16 MXU-operand path (default perf config); tolerance scaled for bf16.
    out_bf16 = jax.block_until_ready(
        resnet_block_forward(x, style, params, inch, outch, styledim,
                             row_tile=8, compute_dtype=jnp.bfloat16))
    err = float(jnp.max(jnp.abs(out_bf16 - ref)))
    assert err < 5e-2 * max(ref_scale, 1.0), \
        f"bf16 mismatch vs reference: max_err={err}"

    # identity-skip variant (inch == outch), auto row tile, no channel padding.
    inch2 = outch2 = 8
    x2 = jax.random.normal(jax.random.PRNGKey(1), (B, inch2, H, W), jnp.float32)
    params2 = init_params(jax.random.PRNGKey(2), inch2, outch2, styledim)
    out2 = jax.block_until_ready(
        resnet_block_forward(x2, style, params2, inch2, outch2, styledim,
                             compute_dtype=jnp.float32, channel_pad=None))
    ref2 = jax.block_until_ready(
        reference_forward(x2, style, params2, inch2, outch2, styledim))
    err2 = float(jnp.max(jnp.abs(out2 - ref2)))
    assert err2 < 5e-3, f"identity-skip mismatch vs reference: max_err={err2}"

    print("KERNEL_OK")
</pallas_src>

<mosaic_0001>
module attributes {stable_mosaic.version = 11 : i64} {
  func.func @resblock_kernel(%arg0: i32, %arg1: i32, %arg2: memref<1x4x16x128xf32, #tpu.memory_space<vmem>>, %arg3: memref<1x2x16x128xf32, #tpu.memory_space<vmem>>, %arg4: memref<1x2x16x128xf32, #tpu.memory_space<vmem>>, %arg5: memref<1x1x128xf32, #tpu.memory_space<vmem>>, %arg6: memref<1x1x128xf32, #tpu.memory_space<vmem>>, %arg7: memref<1x1x128xf32, #tpu.memory_space<vmem>>, %arg8: memref<1x1x128xf32, #tpu.memory_space<vmem>>, %arg9: memref<1x128xf32, #tpu.memory_space<vmem>>, %arg10: memref<1x128xf32, #tpu.memory_space<vmem>>, %arg11: memref<1152x128xf32, #tpu.memory_space<vmem>>, %arg12: memref<1152x128xf32, #tpu.memory_space<vmem>>, %arg13: memref<128x128xf32, #tpu.memory_space<vmem>>, %arg14: memref<1x4x16x128xf32, #tpu.memory_space<vmem>>, %arg15: memref<8x18x128xf32, #tpu.memory_space<vmem>>, %arg16: memref<6x18x128xf32, #tpu.memory_space<vmem>>) attributes {dimension_semantics = [#tpu.dimension_semantics<parallel>, #tpu.dimension_semantics<parallel>], iteration_bounds = array<i64: 2, 4>, scalar_prefetch = 0 : i64, scratch_operands = 2 : i64, tpu.core_type = #tpu.core_type<tc>, window_params = [{transform_indices = @transform_0, window_bounds = array<i64: 1, 4, 16, 128>}, {transform_indices = @transform_1, window_bounds = array<i64: 1, 2, 16, 128>}, {transform_indices = @transform_2, window_bounds = array<i64: 1, 2, 16, 128>}, {transform_indices = @transform_3, window_bounds = array<i64: 1, 1, 128>}, {transform_indices = @transform_4, window_bounds = array<i64: 1, 1, 128>}, {transform_indices = @transform_5, window_bounds = array<i64: 1, 1, 128>}, {transform_indices = @transform_6, window_bounds = array<i64: 1, 1, 128>}, {pipeline_mode = #tpu.pipeline_mode<synchronous>, transform_indices = @transform_7, window_bounds = array<i64: 1, 128>}, {pipeline_mode = #tpu.pipeline_mode<synchronous>, transform_indices = @transform_8, window_bounds = array<i64: 1, 128>}, {pipeline_mode = #tpu.pipeline_mode<synchronous>, transform_indices = @transform_9, window_bounds = array<i64: 1152, 128>}, {pipeline_mode = #tpu.pipeline_mode<synchronous>, transform_indices = @transform_10, window_bounds = array<i64: 1152, 128>}, {pipeline_mode = #tpu.pipeline_mode<synchronous>, transform_indices = @transform_11, window_bounds = array<i64: 128, 128>}, {transform_indices = @transform_12, window_bounds = array<i64: 1, 4, 16, 128>}]} {
    %c0 = arith.constant 0 : index
    %c0_0 = arith.constant 0 : index
    %c0_1 = arith.constant 0 : index
    %0 = vector.load %arg5[%c0, %c0_0, %c0_1] : memref<1x1x128xf32, #tpu.memory_space<vmem>>, vector<1x1x128xf32>
    %1 = vector.shape_cast %0 : vector<1x1x128xf32> to vector<1x128xf32>
    %c0_2 = arith.constant 0 : index
    %c0_3 = arith.constant 0 : index
    %c0_4 = arith.constant 0 : index
    %2 = vector.load %arg6[%c0_2, %c0_3, %c0_4] : memref<1x1x128xf32, #tpu.memory_space<vmem>>, vector<1x1x128xf32>
    %3 = vector.shape_cast %2 : vector<1x1x128xf32> to vector<1x128xf32>
    %c0_5 = arith.constant 0 : index
    %c0_6 = arith.constant 0 : index
    %c0_7 = arith.constant 0 : index
    %4 = vector.load %arg7[%c0_5, %c0_6, %c0_7] : memref<1x1x128xf32, #tpu.memory_space<vmem>>, vector<1x1x128xf32>
    %5 = vector.shape_cast %4 : vector<1x1x128xf32> to vector<1x128xf32>
    %c0_8 = arith.constant 0 : index
    %c0_9 = arith.constant 0 : index
    %c0_10 = arith.constant 0 : index
    %6 = vector.load %arg8[%c0_8, %c0_9, %c0_10] : memref<1x1x128xf32, #tpu.memory_space<vmem>>, vector<1x1x128xf32>
    %7 = vector.shape_cast %6 : vector<1x1x128xf32> to vector<1x128xf32>
    %cst = arith.constant 0.000000e+00 : f32
    %8 = vector.broadcast %cst : f32 to vector<8x1x128xf32>
    %c0_11 = arith.constant 0 : index
    %c0_12 = arith.constant 0 : index
    %c0_13 = arith.constant 0 : index
    %9 = vector.load %arg15[%c0_11, %c0_12, %c0_13] : memref<8x18x128xf32, #tpu.memory_space<vmem>>, vector<8x1x128xf32>
    tpu.vector_store %arg15[%c0_11, %c0_12, %c0_13], %8 {strides = array<i32>} : memref<8x18x128xf32, #tpu.memory_space<vmem>>, vector<8x1x128xf32>,
    %cst_14 = arith.constant 0.000000e+00 : f32
    %10 = vector.broadcast %cst_14 : f32 to vector<8x1x128xf32>
    %c0_15 = arith.constant 0 : index
    %c17 = arith.constant 17 : index
    %c0_16 = arith.constant 0 : index
    %11 = vector.load %arg15[%c0_15, %c17, %c0_16] : memref<8x18x128xf32, #tpu.memory_space<vmem>>, vector<8x1x128xf32>
    tpu.vector_store %arg15[%c0_15, %c17, %c0_16], %10 {strides = array<i32>} : memref<8x18x128xf32, #tpu.memory_space<vmem>>, vector<8x1x128xf32>,
    %c0_17 = arith.constant 0 : index
    %c0_18 = arith.constant 0 : index
    %c0_19 = arith.constant 0 : index
    %c0_20 = arith.constant 0 : index
    %12 = vector.load %arg3[%c0_17, %c0_18, %c0_19, %c0_20] : memref<1x2x16x128xf32, #tpu.memory_space<vmem>>, vector<1x2x16x128xf32>
    %13 = vector.shape_cast %12 : vector<1x2x16x128xf32> to vector<2x16x128xf32>
    %14 = vector.shape_cast %1 : vector<1x128xf32> to vector<1x1x128xf32>
    %15 = vector.broadcast %14 : vector<1x1x128xf32> to vector<2x16x128xf32>
    %16 = arith.mulf %13, %15 : vector<2x16x128xf32>
    %c0_21 = arith.constant 0 : index
    %c1 = arith.constant 1 : index
    %c0_22 = arith.constant 0 : index
    %17 = vector.load %arg15[%c0_21, %c1, %c0_22] : memref<8x18x128xf32, #tpu.memory_space<vmem>>, vector<2x16x128xf32>
    tpu.vector_store %arg15[%c0_21, %c1, %c0_22], %16 {strides = array<i32>} : memref<8x18x128xf32, #tpu.memory_space<vmem>>, vector<2x16x128xf32>,
    %c0_23 = arith.constant 0 : index
    %c0_24 = arith.constant 0 : index
    %c0_25 = arith.constant 0 : index
    %c0_26 = arith.constant 0 : index
    %18 = vector.load %arg2[%c0_23, %c0_24, %c0_25, %c0_26] : memref<1x4x16x128xf32, #tpu.memory_space<vmem>>, vector<1x4x16x128xf32>
    %19 = vector.shape_cast %18 : vector<1x4x16x128xf32> to vector<4x16x128xf32>
    %20 = vector.shape_cast %1 : vector<1x128xf32> to vector<1x1x128xf32>
    %21 = vector.broadcast %20 : vector<1x1x128xf32> to vector<4x16x128xf32>
    %22 = arith.mulf %19, %21 : vector<4x16x128xf32>
    %c2 = arith.constant 2 : index
    %c1_27 = arith.constant 1 : index
    %c0_28 = arith.constant 0 : index
    %23 = vector.load %arg15[%c2, %c1_27, %c0_28] : memref<8x18x128xf32, #tpu.memory_space<vmem>>, vector<4x16x128xf32>
    tpu.vector_store %arg15[%c2, %c1_27, %c0_28], %22 {strides = array<i32>} : memref<8x18x128xf32, #tpu.memory_space<vmem>>, vector<4x16x128xf32>,
    %c0_29 = arith.constant 0 : index
    %c0_30 = arith.constant 0 : index
    %c0_31 = arith.constant 0 : index
    %c0_32 = arith.constant 0 : index
    %24 = vector.load %arg4[%c0_29, %c0_30, %c0_31, %c0_32] : memref<1x2x16x128xf32, #tpu.memory_space<vmem>>, vector<1x2x16x128xf32>
    %25 = vector.shape_cast %24 : vector<1x2x16x128xf32> to vector<2x16x128xf32>
    %26 = vector.shape_cast %1 : vector<1x128xf32> to vector<1x1x128xf32>
    %27 = vector.broadcast %26 : vector<1x1x128xf32> to vector<2x16x128xf32>
    %28 = arith.mulf %25, %27 : vector<2x16x128xf32>
    %c6 = arith.constant 6 : index
    %c1_33 = arith.constant 1 : index
    %c0_34 = arith.constant 0 : index
    %29 = vector.load %arg15[%c6, %c1_33, %c0_34] : memref<8x18x128xf32, #tpu.memory_space<vmem>>, vector<2x16x128xf32>
    tpu.vector_store %arg15[%c6, %c1_33, %c0_34], %28 {strides = array<i32>} : memref<8x18x128xf32, #tpu.memory_space<vmem>>, vector<2x16x128xf32>,
    %c0_i32 = arith.constant 0 : i32
    %30 = arith.cmpi eq, %arg1, %c0_i32 : i32
    %31 = arith.extui %30 : i1 to i32
    %c0_i32_35 = arith.constant 0 : i32
    %32 = arith.cmpi ne, %31, %c0_i32_35 : i32
    scf.if %32 {
      %cst_141 = arith.constant 0.000000e+00 : f32
      %126 = vector.broadcast %cst_141 : f32 to vector<2x18x128xf32>
      %c0_142 = arith.constant 0 : index
      %c0_143 = arith.constant 0 : index
      %c0_144 = arith.constant 0 : index
      %127 = vector.load %arg15[%c0_142, %c0_143, %c0_144] : memref<8x18x128xf32, #tpu.memory_space<vmem>>, vector<2x18x128xf32>
      tpu.vector_store %arg15[%c0_142, %c0_143, %c0_144], %126 {strides = array<i32>} : memref<8x18x128xf32, #tpu.memory_space<vmem>>, vector<2x18x128xf32>,
    } else {
    }
    %c3_i32 = arith.constant 3 : i32
    %33 = arith.cmpi eq, %arg1, %c3_i32 : i32
    %34 = arith.extui %33 : i1 to i32
    %c0_i32_36 = arith.constant 0 : i32
    %35 = arith.cmpi ne, %34, %c0_i32_36 : i32
    scf.if %35 {
      %cst_141 = arith.constant 0.000000e+00 : f32
      %126 = vector.broadcast %cst_141 : f32 to vector<2x18x128xf32>
      %c6_142 = arith.constant 6 : index
      %c0_143 = arith.constant 0 : index
      %c0_144 = arith.constant 0 : index
      %127 = vector.load %arg15[%c6_142, %c0_143, %c0_144] : memref<8x18x128xf32, #tpu.memory_space<vmem>>, vector<2x18x128xf32>
      tpu.vector_store %arg15[%c6_142, %c0_143, %c0_144], %126 {strides = array<i32>} : memref<8x18x128xf32, #tpu.memory_space<vmem>>, vector<2x18x128xf32>,
    } else {
    }
    %c0_37 = arith.constant 0 : index
    %c0_38 = arith.constant 0 : index
    %36 = vector.load %arg9[%c0_37, %c0_38] : memref<1x128xf32, #tpu.memory_space<vmem>>, vector<1x128xf32>
    %c0_39 = arith.constant 0 : index
    %c0_40 = arith.constant 0 : index
    %c0_41 = arith.constant 0 : index
    %37 = vector.load %arg15[%c0_39, %c0_40, %c0_41] : memref<8x18x128xf32, #tpu.memory_space<vmem>>, vector<6x16x128xf32>
    %c0_42 = arith.constant 0 : index
    %c1_43 = arith.constant 1 : index
    %c0_44 = arith.constant 0 : index
    %38 = vector.load %arg15[%c0_42, %c1_43, %c0_44] : memref<8x18x128xf32, #tpu.memory_space<vmem>>, vector<6x16x128xf32>
    %c0_45 = arith.constant 0 : index
    %c2_46 = arith.constant 2 : index
    %c0_47 = arith.constant 0 : index
    %39 = vector.load %arg15[%c0_45, %c2_46, %c0_47] : memref<8x18x128xf32, #tpu.memory_space<vmem>>, vector<6x16x128xf32>
    %40 = tpu.concatenate %37, %38, %39 in 2 : vector<6x16x128xf32>, vector<6x16x128xf32>, vector<6x16x128xf32> -> vector<6x16x384xf32>
    %41 = vector.shape_cast %40 : vector<6x16x384xf32> to vector<96x384xf32>
    %c0_48 = arith.constant 0 : index
    %c0_49 = arith.constant 0 : index
    %42 = vector.load %arg11[%c0_48, %c0_49] : memref<1152x128xf32, #tpu.memory_space<vmem>>, vector<384x128xf32>
    %cst_50 = arith.constant dense<0.000000e+00> : vector<96x128xf32>
    %43 = tpu.matmul %41, %42, %cst_50 {dimension_numbers = #tpu.dot_dimension_numbers<[1], [0], [0], [1], [0, 0, 1, 1], [], []>} : vector<96x384xf32>, vector<384x128xf32>, vector<96x128xf32> -> vector<96x128xf32>
    %c1_51 = arith.constant 1 : index
    %c0_52 = arith.constant 0 : index
    %c0_53 = arith.constant 0 : index
    %44 = vector.load %arg15[%c1_51, %c0_52, %c0_53] : memref<8x18x128xf32, #tpu.memory_space<vmem>>, vector<6x16x128xf32>
    %c1_54 = arith.constant 1 : index
    %c1_55 = arith.constant 1 : index
    %c0_56 = arith.constant 0 : index
    %45 = vector.load %arg15[%c1_54, %c1_55, %c0_56] : memref<8x18x128xf32, #tpu.memory_space<vmem>>, vector<6x16x128xf32>
    %c1_57 = arith.constant 1 : index
    %c2_58 = arith.constant 2 : index
    %c0_59 = arith.constant 0 : index
    %46 = vector.load %arg15[%c1_57, %c2_58, %c0_59] : memref<8x18x128xf32, #tpu.memory_space<vmem>>, vector<6x16x128xf32>
    %47 = tpu.concatenate %44, %45, %46 in 2 : vector<6x16x128xf32>, vector<6x16x128xf32>, vector<6x16x128xf32> -> vector<6x16x384xf32>
    %48 = vector.shape_cast %47 : vector<6x16x384xf32> to vector<96x384xf32>
    %c384 = arith.constant 384 : index
    %c0_60 = arith.constant 0 : index
    %49 = vector.load %arg11[%c384, %c0_60] : memref<1152x128xf32, #tpu.memory_space<vmem>>, vector<384x128xf32>
    %cst_61 = arith.constant dense<0.000000e+00> : vector<96x128xf32>
    %50 = tpu.matmul %48, %49, %cst_61 {dimension_numbers = #tpu.dot_dimension_numbers<[1], [0], [0], [1], [0, 0, 1, 1], [], []>} : vector<96x384xf32>, vector<384x128xf32>, vector<96x128xf32> -> vector<96x128xf32>
    %51 = arith.addf %43, %50 : vector<96x128xf32>
    %c2_62 = arith.constant 2 : index
    %c0_63 = arith.constant 0 : index
    %c0_64 = arith.constant 0 : index
    %52 = vector.load %arg15[%c2_62, %c0_63, %c0_64] : memref<8x18x128xf32, #tpu.memory_space<vmem>>, vector<6x16x128xf32>
    %c2_65 = arith.constant 2 : index
    %c1_66 = arith.constant 1 : index
    %c0_67 = arith.constant 0 : index
    %53 = vector.load %arg15[%c2_65, %c1_66, %c0_67] : memref<8x18x128xf32, #tpu.memory_space<vmem>>, vector<6x16x128xf32>
    %c2_68 = arith.constant 2 : index
    %c2_69 = arith.constant 2 : index
    %c0_70 = arith.constant 0 : index
    %54 = vector.load %arg15[%c2_68, %c2_69, %c0_70] : memref<8x18x128xf32, #tpu.memory_space<vmem>>, vector<6x16x128xf32>
    %55 = tpu.concatenate %52, %53, %54 in 2 : vector<6x16x128xf32>, vector<6x16x128xf32>, vector<6x16x128xf32> -> vector<6x16x384xf32>
    %56 = vector.shape_cast %55 : vector<6x16x384xf32> to vector<96x384xf32>
    %c768 = arith.constant 768 : index
    %c0_71 = arith.constant 0 : index
    %57 = vector.load %arg11[%c768, %c0_71] : memref<1152x128xf32, #tpu.memory_space<vmem>>, vector<384x128xf32>
    %cst_72 = arith.constant dense<0.000000e+00> : vector<96x128xf32>
    %58 = tpu.matmul %56, %57, %cst_72 {dimension_numbers = #tpu.dot_dimension_numbers<[1], [0], [0], [1], [0, 0, 1, 1], [], []>} : vector<96x384xf32>, vector<384x128xf32>, vector<96x128xf32> -> vector<96x128xf32>
    %59 = arith.addf %51, %58 : vector<96x128xf32>
    %60 = vector.broadcast %5 : vector<1x128xf32> to vector<96x128xf32>
    %61 = arith.mulf %59, %60 : vector<96x128xf32>
    %62 = vector.broadcast %36 : vector<1x128xf32> to vector<96x128xf32>
    %63 = arith.addf %61, %62 : vector<96x128xf32>
    %cst_73 = arith.constant 0.000000e+00 : f32
    %64 = vector.broadcast %cst_73 : f32 to vector<96x128xf32>
    %65 = arith.cmpf oge, %63, %64 : vector<96x128xf32>
    %cst_74 = arith.constant 2.000000e-01 : f32
    %66 = vector.broadcast %cst_74 : f32 to vector<96x128xf32>
    %67 = arith.mulf %66, %63 : vector<96x128xf32>
    %68 = arith.select %65, %63, %67 : vector<96x128xi1>, vector<96x128xf32>
    %cst_75 = arith.constant 0.000000e+00 : f32
    %69 = vector.broadcast %cst_75 : f32 to vector<6x1x128xf32>
    %c0_76 = arith.constant 0 : index
    %c0_77 = arith.constant 0 : index
    %c0_78 = arith.constant 0 : index
    %70 = vector.load %arg16[%c0_76, %c0_77, %c0_78] : memref<6x18x128xf32, #tpu.memory_space<vmem>>, vector<6x1x128xf32>
    tpu.vector_store %arg16[%c0_76, %c0_77, %c0_78], %69 {strides = array<i32>} : memref<6x18x128xf32, #tpu.memory_space<vmem>>, vector<6x1x128xf32>,
    %cst_79 = arith.constant 0.000000e+00 : f32
    %71 = vector.broadcast %cst_79 : f32 to vector<6x1x128xf32>
    %c0_80 = arith.constant 0 : index
    %c17_81 = arith.constant 17 : index
    %c0_82 = arith.constant 0 : index
    %72 = vector.load %arg16[%c0_80, %c17_81, %c0_82] : memref<6x18x128xf32, #tpu.memory_space<vmem>>, vector<6x1x128xf32>
    tpu.vector_store %arg16[%c0_80, %c17_81, %c0_82], %71 {strides = array<i32>} : memref<6x18x128xf32, #tpu.memory_space<vmem>>, vector<6x1x128xf32>,
    %73 = vector.broadcast %3 : vector<1x128xf32> to vector<96x128xf32>
    %74 = arith.mulf %68, %73 : vector<96x128xf32>
    %75 = vector.shape_cast %74 : vector<96x128xf32> to vector<6x16x128xf32>
    %c0_83 = arith.constant 0 : index
    %c1_84 = arith.constant 1 : index
    %c0_85 = arith.constant 0 : index
    %76 = vector.load %arg16[%c0_83, %c1_84, %c0_85] : memref<6x18x128xf32, #tpu.memory_space<vmem>>, vector<6x16x128xf32>
    tpu.vector_store %arg16[%c0_83, %c1_84, %c0_85], %75 {strides = array<i32>} : memref<6x18x128xf32, #tpu.memory_space<vmem>>, vector<6x16x128xf32>,
    %c0_i32_86 = arith.constant 0 : i32
    %77 = arith.cmpi eq, %arg1, %c0_i32_86 : i32
    %78 = arith.extui %77 : i1 to i32
    %c0_i32_87 = arith.constant 0 : i32
    %79 = arith.cmpi ne, %78, %c0_i32_87 : i32
    scf.if %79 {
      %cst_141 = arith.constant 0.000000e+00 : f32
      %126 = vector.broadcast %cst_141 : f32 to vector<1x18x128xf32>
      %c0_142 = arith.constant 0 : index
      %c0_143 = arith.constant 0 : index
      %c0_144 = arith.constant 0 : index
      %127 = vector.load %arg16[%c0_142, %c0_143, %c0_144] : memref<6x18x128xf32, #tpu.memory_space<vmem>>, vector<1x18x128xf32>
      tpu.vector_store %arg16[%c0_142, %c0_143, %c0_144], %126 {strides = array<i32>} : memref<6x18x128xf32, #tpu.memory_space<vmem>>, vector<1x18x128xf32>,
    } else {
    }
    %c3_i32_88 = arith.constant 3 : i32
    %80 = arith.cmpi eq, %arg1, %c3_i32_88 : i32
    %81 = arith.extui %80 : i1 to i32
    %c0_i32_89 = arith.constant 0 : i32
    %82 = arith.cmpi ne, %81, %c0_i32_89 : i32
    scf.if %82 {
      %cst_141 = arith.constant 0.000000e+00 : f32
      %126 = vector.broadcast %cst_141 : f32 to vector<1x18x128xf32>
      %c5 = arith.constant 5 : index
      %c0_142 = arith.constant 0 : index
      %c0_143 = arith.constant 0 : index
      %127 = vector.load %arg16[%c5, %c0_142, %c0_143] : memref<6x18x128xf32, #tpu.memory_space<vmem>>, vector<1x18x128xf32>
      tpu.vector_store %arg16[%c5, %c0_142, %c0_143], %126 {strides = array<i32>} : memref<6x18x128xf32, #tpu.memory_space<vmem>>, vector<1x18x128xf32>,
    } else {
    }
    %c0_90 = arith.constant 0 : index
    %c0_91 = arith.constant 0 : index
    %83 = vector.load %arg10[%c0_90, %c0_91] : memref<1x128xf32, #tpu.memory_space<vmem>>, vector<1x128xf32>
    %c0_92 = arith.constant 0 : index
    %c0_93 = arith.constant 0 : index
    %c0_94 = arith.constant 0 : index
    %84 = vector.load %arg16[%c0_92, %c0_93, %c0_94] : memref<6x18x128xf32, #tpu.memory_space<vmem>>, vector<4x16x128xf32>
    %c0_95 = arith.constant 0 : index
    %c1_96 = arith.constant 1 : index
    %c0_97 = arith.constant 0 : index
    %85 = vector.load %arg16[%c0_95, %c1_96, %c0_97] : memref<6x18x128xf32, #tpu.memory_space<vmem>>, vector<4x16x128xf32>
    %c0_98 = arith.constant 0 : index
    %c2_99 = arith.constant 2 : index
    %c0_100 = arith.constant 0 : index
    %86 = vector.load %arg16[%c0_98, %c2_99, %c0_100] : memref<6x18x128xf32, #tpu.memory_space<vmem>>, vector<4x16x128xf32>
    %87 = tpu.concatenate %84, %85, %86 in 2 : vector<4x16x128xf32>, vector<4x16x128xf32>, vector<4x16x128xf32> -> vector<4x16x384xf32>
    %88 = vector.shape_cast %87 : vector<4x16x384xf32> to vector<64x384xf32>
    %c0_101 = arith.constant 0 : index
    %c0_102 = arith.constant 0 : index
    %89 = vector.load %arg12[%c0_101, %c0_102] : memref<1152x128xf32, #tpu.memory_space<vmem>>, vector<384x128xf32>
    %cst_103 = arith.constant dense<0.000000e+00> : vector<64x128xf32>
    %90 = tpu.matmul %88, %89, %cst_103 {dimension_numbers = #tpu.dot_dimension_numbers<[1], [0], [0], [1], [0, 0, 1, 1], [], []>} : vector<64x384xf32>, vector<384x128xf32>, vector<64x128xf32> -> vector<64x128xf32>
    %c1_104 = arith.constant 1 : index
    %c0_105 = arith.constant 0 : index
    %c0_106 = arith.constant 0 : index
    %91 = vector.load %arg16[%c1_104, %c0_105, %c0_106] : memref<6x18x128xf32, #tpu.memory_space<vmem>>, vector<4x16x128xf32>
    %c1_107 = arith.constant 1 : index
    %c1_108 = arith.constant 1 : index
    %c0_109 = arith.constant 0 : index
    %92 = vector.load %arg16[%c1_107, %c1_108, %c0_109] : memref<6x18x128xf32, #tpu.memory_space<vmem>>, vector<4x16x128xf32>
    %c1_110 = arith.constant 1 : index
    %c2_111 = arith.constant 2 : index
    %c0_112 = arith.constant 0 : index
    %93 = vector.load %arg16[%c1_110, %c2_111, %c0_112] : memref<6x18x128xf32, #tpu.memory_space<vmem>>, vector<4x16x128xf32>
    %94 = tpu.concatenate %91, %92, %93 in 2 : vector<4x16x128xf32>, vector<4x16x128xf32>, vector<4x16x128xf32> -> vector<4x16x384xf32>
    %95 = vector.shape_cast %94 : vector<4x16x384xf32> to vector<64x384xf32>
    %c384_113 = arith.constant 384 : index
    %c0_114 = arith.constant 0 : index
    %96 = vector.load %arg12[%c384_113, %c0_114] : memref<1152x128xf32, #tpu.memory_space<vmem>>, vector<384x128xf32>
    %cst_115 = arith.constant dense<0.000000e+00> : vector<64x128xf32>
    %97 = tpu.matmul %95, %96, %cst_115 {dimension_numbers = #tpu.dot_dimension_numbers<[1], [0], [0], [1], [0, 0, 1, 1], [], []>} : vector<64x384xf32>, vector<384x128xf32>, vector<64x128xf32> -> vector<64x128xf32>
    %98 = arith.addf %90, %97 : vector<64x128xf32>
    %c2_116 = arith.constant 2 : index
    %c0_117 = arith.constant 0 : index
    %c0_118 = arith.constant 0 : index
    %99 = vector.load %arg16[%c2_116, %c0_117, %c0_118] : memref<6x18x128xf32, #tpu.memory_space<vmem>>, vector<4x16x128xf32>
    %c2_119 = arith.constant 2 : index
    %c1_120 = arith.constant 1 : index
    %c0_121 = arith.constant 0 : index
    %100 = vector.load %arg16[%c2_119, %c1_120, %c0_121] : memref<6x18x128xf32, #tpu.memory_space<vmem>>, vector<4x16x128xf32>
    %c2_122 = arith.constant 2 : index
    %c2_123 = arith.constant 2 : index
    %c0_124 = arith.constant 0 : index
    %101 = vector.load %arg16[%c2_122, %c2_123, %c0_124] : memref<6x18x128xf32, #tpu.memory_space<vmem>>, vector<4x16x128xf32>
    %102 = tpu.concatenate %99, %100, %101 in 2 : vector<4x16x128xf32>, vector<4x16x128xf32>, vector<4x16x128xf32> -> vector<4x16x384xf32>
    %103 = vector.shape_cast %102 : vector<4x16x384xf32> to vector<64x384xf32>
    %c768_125 = arith.constant 768 : index
    %c0_126 = arith.constant 0 : index
    %104 = vector.load %arg12[%c768_125, %c0_126] : memref<1152x128xf32, #tpu.memory_space<vmem>>, vector<384x128xf32>
    %cst_127 = arith.constant dense<0.000000e+00> : vector<64x128xf32>
    %105 = tpu.matmul %103, %104, %cst_127 {dimension_numbers = #tpu.dot_dimension_numbers<[1], [0], [0], [1], [0, 0, 1, 1], [], []>} : vector<64x384xf32>, vector<384x128xf32>, vector<64x128xf32> -> vector<64x128xf32>
    %106 = arith.addf %98, %105 : vector<64x128xf32>
    %107 = vector.broadcast %7 : vector<1x128xf32> to vector<64x128xf32>
    %108 = arith.mulf %106, %107 : vector<64x128xf32>
    %109 = vector.broadcast %83 : vector<1x128xf32> to vector<64x128xf32>
    %110 = arith.addf %108, %109 : vector<64x128xf32>
    %cst_128 = arith.constant 0.000000e+00 : f32
    %111 = vector.broadcast %cst_128 : f32 to vector<64x128xf32>
    %112 = arith.cmpf oge, %110, %111 : vector<64x128xf32>
    %cst_129 = arith.constant 2.000000e-01 : f32
    %113 = vector.broadcast %cst_129 : f32 to vector<64x128xf32>
    %114 = arith.mulf %113, %110 : vector<64x128xf32>
    %115 = arith.select %112, %110, %114 : vector<64x128xi1>, vector<64x128xf32>
    %c0_130 = arith.constant 0 : index
    %c0_131 = arith.constant 0 : index
    %c0_132 = arith.constant 0 : index
    %c0_133 = arith.constant 0 : index
    %116 = vector.load %arg2[%c0_130, %c0_131, %c0_132, %c0_133] : memref<1x4x16x128xf32, #tpu.memory_space<vmem>>, vector<1x4x16x128xf32>
    %117 = vector.shape_cast %116 : vector<1x4x16x128xf32> to vector<4x16x128xf32>
    %118 = vector.shape_cast %117 : vector<4x16x128xf32> to vector<64x128xf32>
    %c0_134 = arith.constant 0 : index
    %c0_135 = arith.constant 0 : index
    %119 = vector.load %arg13[%c0_134, %c0_135] : memref<128x128xf32, #tpu.memory_space<vmem>>, vector<128x128xf32>
    %cst_136 = arith.constant dense<0.000000e+00> : vector<64x128xf32>
    %120 = tpu.matmul %118, %119, %cst_136 {dimension_numbers = #tpu.dot_dimension_numbers<[1], [0], [0], [1], [0, 0, 1, 1], [], []>} : vector<64x128xf32>, vector<128x128xf32>, vector<64x128xf32> -> vector<64x128xf32>
    %121 = arith.addf %120, %115 : vector<64x128xf32>
    %122 = vector.shape_cast %121 : vector<64x128xf32> to vector<4x16x128xf32>
    %c0_137 = arith.constant 0 : index
    %c0_138 = arith.constant 0 : index
    %c0_139 = arith.constant 0 : index
    %c0_140 = arith.constant 0 : index
    %123 = vector.load %arg14[%c0_137, %c0_138, %c0_139, %c0_140] : memref<1x4x16x128xf32, #tpu.memory_space<vmem>>, vector<1x4x16x128xf32>
    %124 = vector.shape_cast %123 : vector<1x4x16x128xf32> to vector<4x16x128xf32>
    %125 = vector.shape_cast %122 : vector<4x16x128xf32> to vector<1x4x16x128xf32>
    tpu.vector_store %arg14[%c0_137, %c0_138, %c0_139, %c0_140], %125 {strides = array<i32>} : memref<1x4x16x128xf32, #tpu.memory_space<vmem>>, vector<1x4x16x128xf32>,
    return
  }
  func.func @transform_0(%arg0: i32, %arg1: i32) -> (i32, i32, i32, i32) {
    %c0_i32 = arith.constant 0 : i32
    %c0_i32_0 = arith.constant 0 : i32
    %c0_i32_1 = arith.constant 0 : i32
    return %arg0, %arg1, %c0_i32, %c0_i32_0 : i32, i32, i32, i32
  }
  func.func @transform_1(%arg0: i32, %arg1: i32) -> (i32, i32, i32, i32) {
    %c2_i32 = arith.constant 2 : i32
    %0 = arith.muli %arg1, %c2_i32 : i32
    %c1_i32 = arith.constant 1 : i32
    %1 = arith.subi %0, %c1_i32 : i32
    %c0_i32 = arith.constant 0 : i32
    %2 = arith.maxsi %1, %c0_i32 : i32
    %c0_i32_0 = arith.constant 0 : i32
    %c0_i32_1 = arith.constant 0 : i32
    %c0_i32_2 = arith.constant 0 : i32
    return %arg0, %2, %c0_i32_0, %c0_i32_1 : i32, i32, i32, i32
  }
  func.func @transform_2(%arg0: i32, %arg1: i32) -> (i32, i32, i32, i32) {
    %c2_i32 = arith.constant 2 : i32
    %0 = arith.muli %arg1, %c2_i32 : i32
    %c2_i32_0 = arith.constant 2 : i32
    %1 = arith.addi %0, %c2_i32_0 : i32
    %c7_i32 = arith.constant 7 : i32
    %2 = arith.minsi %1, %c7_i32 : i32
    %c0_i32 = arith.constant 0 : i32
    %c0_i32_1 = arith.constant 0 : i32
    %c0_i32_2 = arith.constant 0 : i32
    return %arg0, %2, %c0_i32, %c0_i32_1 : i32, i32, i32, i32
  }
  func.func @transform_3(%arg0: i32, %arg1: i32) -> (i32, i32, i32) {
    %c0_i32 = arith.constant 0 : i32
    %c0_i32_0 = arith.constant 0 : i32
    %c0_i32_1 = arith.constant 0 : i32
    return %arg0, %c0_i32, %c0_i32_0 : i32, i32, i32
  }
  func.func @transform_4(%arg0: i32, %arg1: i32) -> (i32, i32, i32) {
    %c0_i32 = arith.constant 0 : i32
    %c0_i32_0 = arith.constant 0 : i32
    %c0_i32_1 = arith.constant 0 : i32
    return %arg0, %c0_i32, %c0_i32_0 : i32, i32, i32
  }
  func.func @transform_5(%arg0: i32, %arg1: i32) -> (i32, i32, i32) {
    %c0_i32 = arith.constant 0 : i32
    %c0_i32_0 = arith.constant 0 : i32
    %c0_i32_1 = arith.constant 0 : i32
    return %arg0, %c0_i32, %c0_i32_0 : i32, i32, i32
  }
  func.func @transform_6(%arg0: i32, %arg1: i32) -> (i32, i32, i32) {
    %c0_i32 = arith.constant 0 : i32
    %c0_i32_0 = arith.constant 0 : i32
    %c0_i32_1 = arith.constant 0 : i32
    return %arg0, %c0_i32, %c0_i32_0 : i32, i32, i32
  }
  func.func @transform_7(%arg0: i32, %arg1: i32) -> (i32, i32) {
    %c0_i32 = arith.constant 0 : i32
    %c0_i32_0 = arith.constant 0 : i32
    %c0_i32_1 = arith.constant 0 : i32
    return %c0_i32, %c0_i32_0 : i32, i32
  }
  func.func @transform_8(%arg0: i32, %arg1: i32) -> (i32, i32) {
    %c0_i32 = arith.constant 0 : i32
    %c0_i32_0 = arith.constant 0 : i32
    %c0_i32_1 = arith.constant 0 : i32
    return %c0_i32, %c0_i32_0 : i32, i32
  }
  func.func @transform_9(%arg0: i32, %arg1: i32) -> (i32, i32) {
    %c0_i32 = arith.constant 0 : i32
    %c0_i32_0 = arith.constant 0 : i32
    %c0_i32_1 = arith.constant 0 : i32
    return %c0_i32, %c0_i32_0 : i32, i32
  }
  func.func @transform_10(%arg0: i32, %arg1: i32) -> (i32, i32) {
    %c0_i32 = arith.constant 0 : i32
    %c0_i32_0 = arith.constant 0 : i32
    %c0_i32_1 = arith.constant 0 : i32
    return %c0_i32, %c0_i32_0 : i32, i32
  }
  func.func @transform_11(%arg0: i32, %arg1: i32) -> (i32, i32) {
    %c0_i32 = arith.constant 0 : i32
    %c0_i32_0 = arith.constant 0 : i32
    %c0_i32_1 = arith.constant 0 : i32
    return %c0_i32, %c0_i32_0 : i32, i32
  }
  func.func @transform_12(%arg0: i32, %arg1: i32) -> (i32, i32, i32, i32) {
    %c0_i32 = arith.constant 0 : i32
    %c0_i32_0 = arith.constant 0 : i32
    %c0_i32_1 = arith.constant 0 : i32
    return %arg0, %arg1, %c0_i32, %c0_i32_0 : i32, i32, i32, i32
  }
}

</mosaic_0001>

<llo_original>
// kernel: tpu_custom_call.1
$region0: #{tpu_custom_call.1}
  #allocation0 [shape = 'u32[]', space=smem, size = 0x4, offset = 0x4, fixed_abs, tag = 'smem constant byte address 0x4 - core index']
  #allocation1 [shape = 'u32[144,128]{1,0:T(1,128)}', space=vmem, size = 0x12000, scoped, tag = 'internal scratch']
  #allocation2 [shape = 'f32[8,18,128]{2,1,0:T(8,128)}', space=vmem, size = 0x18000, scoped, tag = 'scratch operand']
  #allocation3 [shape = 'f32[6,18,128]{2,1,0:T(8,128)}', space=vmem, size = 0x12000, scoped, tag = 'scratch operand']
  %s0 = inlined_call_operand.hbm [shape: f32[2,16,16,128], index: 0, kind: input, shape index: {}]
  %s1 = inlined_call_operand.hbm [shape: f32[2,16,16,128], index: 1, kind: input, shape index: {}]
  %s2 = inlined_call_operand.hbm [shape: f32[2,16,16,128], index: 2, kind: input, shape index: {}]
  %s3 = inlined_call_operand.vmem [shape: f32[2,1,128], index: 3, kind: input, shape index: {}]
  %s4 = inlined_call_operand.vmem [shape: f32[2,1,128], index: 4, kind: input, shape index: {}]
  %s5 = inlined_call_operand.vmem [shape: f32[2,1,128], index: 5, kind: input, shape index: {}]
  %s6 = inlined_call_operand.vmem [shape: f32[2,1,128], index: 6, kind: input, shape index: {}]
  %s7 = inlined_call_operand.vmem [shape: f32[1,128], index: 7, kind: input, shape index: {}]
  %s8 = inlined_call_operand.vmem [shape: f32[1,128], index: 8, kind: input, shape index: {}]
  %s9 = inlined_call_operand.hbm [shape: f32[1152,128], index: 9, kind: input, shape index: {}]
  %s10 = inlined_call_operand.hbm [shape: f32[1152,128], index: 10, kind: input, shape index: {}]
  %s11 = inlined_call_operand.hbm [shape: f32[128,128], index: 11, kind: input, shape index: {}]
  %s12 = inlined_call_operand.hbm [shape: f32[2,16,16,128], index: 12, kind: output, shape index: {}]
  %s13 = sld [smem:[#allocation0]]
  $region121: #{tpu_custom_call.1} parent=0
    _
  %s15 = ssub.s32 1, %s13
  %s16 = scalar_select 0, %s15, %s13
  $region1: #{tpu_custom_call.1} parent=0
    #allocation4 [shape = 'u8[65536]{0}', space=vmem, size = 0x10000, scoped, tag = 'input window, operand 0']
    #allocation5 [shape = 's32[2]{0}', space=sflag, size = 0x8, scoped, tag = 'scoped memory for tpu_custom_call.1']
    #allocation6 [shape = 's32[2]{0}', space=sflag, size = 0x8, scoped, tag = 'scoped memory for tpu_custom_call.1']
    #allocation7 [shape = 'u8[32768]{0}', space=vmem, size = 0x8000, scoped, tag = 'input window, operand 1']
    #allocation8 [shape = 's32[2]{0}', space=sflag, size = 0x8, scoped, tag = 'scoped memory for tpu_custom_call.1']
    #allocation9 [shape = 'u8[32768]{0}', space=vmem, size = 0x8000, scoped, tag = 'input window, operand 2']
    #allocation10 [shape = 'u8[589824]{0}', space=vmem, size = 0x90000, scoped, tag = 'input window, operand 9, single buffered']
    #allocation11 [shape = 's32[1]{0}', space=sflag, size = 0x4, scoped, tag = 'scoped memory for tpu_custom_call.1']
    #allocation12 [shape = 'u8[589824]{0}', space=vmem, size = 0x90000, scoped, tag = 'input window, operand 10, single buffered']
    #allocation13 [shape = 'u8[65536]{0}', space=vmem, size = 0x10000, scoped, tag = 'input window, operand 11, single buffered']
    #allocation14 [shape = 's32[1]{0}', space=sflag, size = 0x4, scoped, tag = 'scoped memory for tpu_custom_call.1']
    #allocation15 [shape = 'u8[65536]{0}', space=vmem, size = 0x10000, scoped, tag = 'output window, operand 0']
    %17 = vsyncpa [#allocation5], 0
    %s18 = scalar_lea.sflag [#allocation5], 1
    %19 = vsyncpa %s18, 0
    %20 = vsyncpa [#allocation8], 0
    %s21 = scalar_lea.sflag [#allocation8], 1
    %22 = vsyncpa %s21, 0
    %23 = vsyncpa [#allocation11], 0
    %24 = vsyncpa [#allocation14], 0
    %25 = vsyncpa [#allocation6], 0
    %s26 = scalar_lea.sflag [#allocation6], 1
    %27 = vsyncpa %s26, 0
    loop: start=0, step=1, limit=10
    $region2: #{tpu_custom_call.1} parent=1 // loop_pre_header
      _
    $region3: #{tpu_custom_call.1} parent=1 // loop_header
      %s29 = sphi 0, %s33
      %p30 = scmp.ge.s32.totalorder %s29, 10
      %s36 = sphi 0, %s48
      %s37 = sphi 0, %s44
      %s38 = sphi 0, %s36
      %s39 = sphi 0, %s37
      %s40 = sphi 0, %s38
      %s41 = sphi 0, %s39
      %s53 = sphi 0, %s55
      %s56 = sphi 0, %s53
      %s57 = sphi 0, %s56
      %s73 = sphi 0, %s57
      %s89 = sphi 0, %s91
      %s92 = sphi 0, %s89
      %s93 = sphi 0, %s92
      %s109 = sphi 0, %s93
      %s125 = sphi 0, %s127
      %s128 = sphi 0, %s125
      %s129 = sphi 0, %s128
      %s145 = sphi 0, %s129
      %s151 = sphi 0, %s153
      %s154 = sphi 0, %s151
      %s155 = sphi 0, %s154
      %s171 = sphi 0, %s155
      %s177 = sphi 0, %s179
      %s180 = sphi 0, %s177
      %s181 = sphi 0, %s180
      %s197 = sphi 0, %s181
      %s203 = sphi 0, %s205
      %s206 = sphi 0, %s203
      %s207 = sphi 0, %s206
      %s223 = sphi 0, %s207
      %s229 = sphi 0, %s231
      %s232 = sphi 0, %s229
      %s233 = sphi 0, %s232
      %s249 = sphi 0, %s233
      %s253 = sphi 0, %s253
      %s255 = sphi 0, %s253
      %s256 = sphi 0, %s255
      %s270 = sphi 0, %s256
      %s274 = sphi 0, %s274
      %s276 = sphi 0, %s274
      %s277 = sphi 0, %s276
      %s291 = sphi 0, %s277
      %s295 = sphi 0, %s295
      %s297 = sphi 0, %s295
      %s298 = sphi 0, %s297
      %s312 = sphi 0, %s298
      %s316 = sphi 0, %s316
      %s318 = sphi 0, %s316
      %s319 = sphi 0, %s318
      %s333 = sphi 0, %s319
      %s337 = sphi 0, %s337
      %s339 = sphi 0, %s337
      %s340 = sphi 0, %s339
      %s354 = sphi 0, %s340
      %s362 = sphi 0, %s364
      %s365 = sphi 0, %s362
      %s366 = sphi 0, %s365
      %s382 = sphi 0, %s366
    $region4: #{tpu_custom_call.1} parent=1 // loop_header_branch
      %32 = sbr.rel (%p30) target = $region8
    $region5: #{tpu_custom_call.1} parent=1 // loop_body
      %s34 = ssub.s32 %s29, 1
      %s35 = ssub.s32 %s29, 2
      %s42 = sadd.s32 1, %s37
      %p43 = scmp.ge.s32.totalorder %s42, 4
      %s44 = scalar_select %p43, 0, %s42
      %s45 = sadd.s32 1, %s36
      %s46 = scalar_select %p43, %s45, %s36
      %p47 = scmp.ge.s32.totalorder %s46, 2
      %s48 = scalar_select %p47, 0, %s46
      %s49 = ssub.s32 %s36, %s48
      %s50 = ssub.s32 %s37, %s44
      %s51 = sor.u32 %s49, %s50
      %p52 = scmp.eq.s32.totalorder %s51, 0
      %s54 = sadd.s32 %s53, 1
      %s55 = scalar_select %p52, %s53, %s54
      %p58 = pneg %p52
      %p59 = scmp.eq.s32.totalorder %s29, 7
      %p60 = por %p58, %p59
      %p61 = scmp.ne.s32.totalorder %s53, %s56
      %p62 = scmp.eq.s32.totalorder %s29, 0
      %p63 = por %p61, %p62
      %p64 = scmp.ne.s32.totalorder %s53, %s56
      %p65 = scmp.eq.s32.totalorder %s34, 7
      %p66 = por %p64, %p65
      %p67 = scmp.ne.s32.totalorder %s56, %s57
      %p68 = scmp.eq.s32.totalorder %s34, 0
      %p69 = por %p67, %p68
      %p70 = scmp.ne.s32.totalorder %s56, %s57
      %p71 = scmp.eq.s32.totalorder %s35, 7
      %p72 = por %p70, %p71
      %p74 = scmp.ne.s32.totalorder %s57, %s73
      %p75 = scmp.eq.s32.totalorder %s35, 0
      %p76 = por %p74, %p75
      %s77 = smul.u32 %s37, 2
      %s78 = ssub.s32 %s77, 1
      %p79 = scmp.gt.s32.totalorder %s78, 0
      %s80 = scalar_select %p79, %s78, 0
      %s81 = smul.u32 %s44, 2
      %s82 = ssub.s32 %s81, 1
      %p83 = scmp.gt.s32.totalorder %s82, 0
      %s84 = scalar_select %p83, %s82, 0
      %s85 = ssub.s32 %s36, %s48
      %s86 = ssub.s32 %s80, %s84
      %s87 = sor.u32 %s85, %s86
      %p88 = scmp.eq.s32.totalorder %s87, 0
      %s90 = sadd.s32 %s89, 1
      %s91 = scalar_select %p88, %s89, %s90
      %p94 = pneg %p88
      %p95 = scmp.eq.s32.totalorder %s29, 7
      %p96 = por %p94, %p95
      %p97 = scmp.ne.s32.totalorder %s89, %s92
      %p98 = scmp.eq.s32.totalorder %s29, 0
      %p99 = por %p97, %p98
      %p100 = scmp.ne.s32.totalorder %s89, %s92
      %p101 = scmp.eq.s32.totalorder %s34, 7
      %p102 = por %p100, %p101
      %p103 = scmp.ne.s32.totalorder %s92, %s93
      %p104 = scmp.eq.s32.totalorder %s34, 0
      %p105 = por %p103, %p104
      %p106 = scmp.ne.s32.totalorder %s92, %s93
      %p107 = scmp.eq.s32.totalorder %s35, 7
      %p108 = por %p106, %p107
      %p110 = scmp.ne.s32.totalorder %s93, %s109
      %p111 = scmp.eq.s32.totalorder %s35, 0
      %p112 = por %p110, %p111
      %s113 = smul.u32 %s37, 2
      %s114 = sadd.s32 %s113, 2
      %p115 = scmp.lt.s32.totalorder %s114, 7
      %s116 = scalar_select %p115, %s114, 7
      %s117 = smul.u32 %s44, 2
      %s118 = sadd.s32 %s117, 2
      %p119 = scmp.lt.s32.totalorder %s118, 7
      %s120 = scalar_select %p119, %s118, 7
      %s121 = ssub.s32 %s36, %s48
      %s122 = ssub.s32 %s116, %s120
      %s123 = sor.u32 %s121, %s122
      %p124 = scmp.eq.s32.totalorder %s123, 0
      %s126 = sadd.s32 %s125, 1
      %s127 = scalar_select %p124, %s125, %s126
      %p130 = pneg %p124
      %p131 = scmp.eq.s32.totalorder %s29, 7
      %p132 = por %p130, %p131
      %p133 = scmp.ne.s32.totalorder %s125, %s128
      %p134 = scmp.eq.s32.totalorder %s29, 0
      %p135 = por %p133, %p134
      %p136 = scmp.ne.s32.totalorder %s125, %s128
      %p137 = scmp.eq.s32.totalorder %s34, 7
      %p138 = por %p136, %p137
      %p139 = scmp.ne.s32.totalorder %s128, %s129
      %p140 = scmp.eq.s32.totalorder %s34, 0
      %p141 = por %p139, %p140
      %p142 = scmp.ne.s32.totalorder %s128, %s129
      %p143 = scmp.eq.s32.totalorder %s35, 7
      %p144 = por %p142, %p143
      %p146 = scmp.ne.s32.totalorder %s129, %s145
      %p147 = scmp.eq.s32.totalorder %s35, 0
      %p148 = por %p146, %p147
      %s149 = ssub.s32 %s36, %s48
      %p150 = scmp.eq.s32.totalorder %s149, 0
      %s152 = sadd.s32 %s151, 1
      %s153 = scalar_select %p150, %s151, %s152
      %p156 = pneg %p150
      %p157 = scmp.eq.s32.totalorder %s29, 7
      %p158 = por %p156, %p157
      %p159 = scmp.ne.s32.totalorder %s151, %s154
      %p160 = scmp.eq.s32.totalorder %s29, 0
      %p161 = por %p159, %p160
      %p162 = scmp.ne.s32.totalorder %s151, %s154
      %p163 = scmp.eq.s32.totalorder %s34, 7
      %p164 = por %p162, %p163
      %p165 = scmp.ne.s32.totalorder %s154, %s155
      %p166 = scmp.eq.s32.totalorder %s34, 0
      %p167 = por %p165, %p166
      %p168 = scmp.ne.s32.totalorder %s154, %s155
      %p169 = scmp.eq.s32.totalorder %s35, 7
      %p170 = por %p168, %p169
      %p172 = scmp.ne.s32.totalorder %s155, %s171
      %p173 = scmp.eq.s32.totalorder %s35, 0
      %p174 = por %p172, %p173
      %s175 = ssub.s32 %s36, %s48
      %p176 = scmp.eq.s32.totalorder %s175, 0
      %s178 = sadd.s32 %s177, 1
      %s179 = scalar_select %p176, %s177, %s178
      %p182 = pneg %p176
      %p183 = scmp.eq.s32.totalorder %s29, 7
      %p184 = por %p182, %p183
      %p185 = scmp.ne.s32.totalorder %s177, %s180
      %p186 = scmp.eq.s32.totalorder %s29, 0
      %p187 = por %p185, %p186
      %p188 = scmp.ne.s32.totalorder %s177, %s180
      %p189 = scmp.eq.s32.totalorder %s34, 7
      %p190 = por %p188, %p189
      %p191 = scmp.ne.s32.totalorder %s180, %s181
      %p192 = scmp.eq.s32.totalorder %s34, 0
      %p193 = por %p191, %p192
      %p194 = scmp.ne.s32.totalorder %s180, %s181
      %p195 = scmp.eq.s32.totalorder %s35, 7
      %p196 = por %p194, %p195
      %p198 = scmp.ne.s32.totalorder %s181, %s197
      %p199 = scmp.eq.s32.totalorder %s35, 0
      %p200 = por %p198, %p199
      %s201 = ssub.s32 %s36, %s48
      %p202 = scmp.eq.s32.totalorder %s201, 0
      %s204 = sadd.s32 %s203, 1
      %s205 = scalar_select %p202, %s203, %s204
      %p208 = pneg %p202
      %p209 = scmp.eq.s32.totalorder %s29, 7
      %p210 = por %p208, %p209
      %p211 = scmp.ne.s32.totalorder %s203, %s206
      %p212 = scmp.eq.s32.totalorder %s29, 0
      %p213 = por %p211, %p212
      %p214 = scmp.ne.s32.totalorder %s203, %s206
      %p215 = scmp.eq.s32.totalorder %s34, 7
      %p216 = por %p214, %p215
      %p217 = scmp.ne.s32.totalorder %s206, %s207
      %p218 = scmp.eq.s32.totalorder %s34, 0
      %p219 = por %p217, %p218
      %p220 = scmp.ne.s32.totalorder %s206, %s207
      %p221 = scmp.eq.s32.totalorder %s35, 7
      %p222 = por %p220, %p221
      %p224 = scmp.ne.s32.totalorder %s207, %s223
      %p225 = scmp.eq.s32.totalorder %s35, 0
      %p226 = por %p224, %p225
      %s227 = ssub.s32 %s36, %s48
      %p228 = scmp.eq.s32.totalorder %s227, 0
      %s230 = sadd.s32 %s229, 1
      %s231 = scalar_select %p228, %s229, %s230
      %p234 = pneg %p228
      %p235 = scmp.eq.s32.totalorder %s29, 7
      %p236 = por %p234, %p235
      %p237 = scmp.ne.s32.totalorder %s229, %s232
      %p238 = scmp.eq.s32.totalorder %s29, 0
      %p239 = por %p237, %p238
      %p240 = scmp.ne.s32.totalorder %s229, %s232
      %p241 = scmp.eq.s32.totalorder %s34, 7
      %p242 = por %p240, %p241
      %p243 = scmp.ne.s32.totalorder %s232, %s233
      %p244 = scmp.eq.s32.totalorder %s34, 0
      %p245 = por %p243, %p244
      %p246 = scmp.ne.s32.totalorder %s232, %s233
      %p247 = scmp.eq.s32.totalorder %s35, 7
      %p248 = por %p246, %p247
      %p250 = scmp.ne.s32.totalorder %s233, %s249
      %p251 = scmp.eq.s32.totalorder %s35, 0
      %p252 = por %p250, %p251
      %s254 = sadd.s32 %s253, 1
      %p257 = scmp.eq.s32.totalorder %s29, 7
      %p258 = scmp.ne.s32.totalorder %s253, %s255
      %p259 = scmp.eq.s32.totalorder %s29, 0
      %p260 = por %p258, %p259
      %p261 = scmp.ne.s32.totalorder %s253, %s255
      %p262 = scmp.eq.s32.totalorder %s34, 7
      %p263 = por %p261, %p262
      %p264 = scmp.ne.s32.totalorder %s255, %s256
      %p265 = scmp.eq.s32.totalorder %s34, 0
      %p266 = por %p264, %p265
      %p267 = scmp.ne.s32.totalorder %s255, %s256
      %p268 = scmp.eq.s32.totalorder %s35, 7
      %p269 = por %p267, %p268
      %p271 = scmp.ne.s32.totalorder %s256, %s270
      %p272 = scmp.eq.s32.totalorder %s35, 0
      %p273 = por %p271, %p272
      %s275 = sadd.s32 %s274, 1
      %p278 = scmp.eq.s32.totalorder %s29, 7
      %p279 = scmp.ne.s32.totalorder %s274, %s276
      %p280 = scmp.eq.s32.totalorder %s29, 0
      %p281 = por %p279, %p280
      %p282 = scmp.ne.s32.totalorder %s274, %s276
      %p283 = scmp.eq.s32.totalorder %s34, 7
      %p284 = por %p282, %p283
      %p285 = scmp.ne.s32.totalorder %s276, %s277
      %p286 = scmp.eq.s32.totalorder %s34, 0
      %p287 = por %p285, %p286
      %p288 = scmp.ne.s32.totalorder %s276, %s277
      %p289 = scmp.eq.s32.totalorder %s35, 7
      %p290 = por %p288, %p289
      %p292 = scmp.ne.s32.totalorder %s277, %s291
      %p293 = scmp.eq.s32.totalorder %s35, 0
      %p294 = por %p292, %p293
      %s296 = sadd.s32 %s295, 1
      %p299 = scmp.eq.s32.totalorder %s29, 7
      %p300 = scmp.ne.s32.totalorder %s295, %s297
      %p301 = scmp.eq.s32.totalorder %s29, 0
      %p302 = por %p300, %p301
      %p303 = scmp.ne.s32.totalorder %s295, %s297
      %p304 = scmp.eq.s32.totalorder %s34, 7
      %p305 = por %p303, %p304
      %p306 = scmp.ne.s32.totalorder %s297, %s298
      %p307 = scmp.eq.s32.totalorder %s34, 0
      %p308 = por %p306, %p307
      %p309 = scmp.ne.s32.totalorder %s297, %s298
      %p310 = scmp.eq.s32.totalorder %s35, 7
      %p311 = por %p309, %p310
      %p313 = scmp.ne.s32.totalorder %s298, %s312
      %p314 = scmp.eq.s32.totalorder %s35, 0
      %p315 = por %p313, %p314
      %s317 = sadd.s32 %s316, 1
      %p320 = scmp.eq.s32.totalorder %s29, 7
      %p321 = scmp.ne.s32.totalorder %s316, %s318
      %p322 = scmp.eq.s32.totalorder %s29, 0
      %p323 = por %p321, %p322
      %p324 = scmp.ne.s32.totalorder %s316, %s318
      %p325 = scmp.eq.s32.totalorder %s34, 7
      %p326 = por %p324, %p325
      %p327 = scmp.ne.s32.totalorder %s318, %s319
      %p328 = scmp.eq.s32.totalorder %s34, 0
      %p329 = por %p327, %p328
      %p330 = scmp.ne.s32.totalorder %s318, %s319
      %p331 = scmp.eq.s32.totalorder %s35, 7
      %p332 = por %p330, %p331
      %p334 = scmp.ne.s32.totalorder %s319, %s333
      %p335 = scmp.eq.s32.totalorder %s35, 0
      %p336 = por %p334, %p335
      %s338 = sadd.s32 %s337, 1
      %p341 = scmp.eq.s32.totalorder %s29, 7
      %p342 = scmp.ne.s32.totalorder %s337, %s339
      %p343 = scmp.eq.s32.totalorder %s29, 0
      %p344 = por %p342, %p343
      %p345 = scmp.ne.s32.totalorder %s337, %s339
      %p346 = scmp.eq.s32.totalorder %s34, 7
      %p347 = por %p345, %p346
      %p348 = scmp.ne.s32.totalorder %s339, %s340
      %p349 = scmp.eq.s32.totalorder %s34, 0
      %p350 = por %p348, %p349
      %p351 = scmp.ne.s32.totalorder %s339, %s340
      %p352 = scmp.eq.s32.totalorder %s35, 7
      %p353 = por %p351, %p352
      %p355 = scmp.ne.s32.totalorder %s340, %s354
      %p356 = scmp.eq.s32.totalorder %s35, 0
      %p357 = por %p355, %p356
      %s358 = ssub.s32 %s36, %s48
      %s359 = ssub.s32 %s37, %s44
      %s360 = sor.u32 %s358, %s359
      %p361 = scmp.eq.s32.totalorder %s360, 0
      %s363 = sadd.s32 %s362, 1
      %s364 = scalar_select %p361, %s362, %s363
      %p367 = pneg %p361
      %p368 = scmp.eq.s32.totalorder %s29, 7
      %p369 = por %p367, %p368
      %p370 = scmp.ne.s32.totalorder %s362, %s365
      %p371 = scmp.eq.s32.totalorder %s29, 0
      %p372 = por %p370, %p371
      %p373 = scmp.ne.s32.totalorder %s362, %s365
      %p374 = scmp.eq.s32.totalorder %s34, 7
      %p375 = por %p373, %p374
      %p376 = scmp.ne.s32.totalorder %s365, %s366
      %p377 = scmp.eq.s32.totalorder %s34, 0
      %p378 = por %p376, %p377
      %p379 = scmp.ne.s32.totalorder %s365, %s366
      %p380 = scmp.eq.s32.totalorder %s35, 7
      %p381 = por %p379, %p380
      %p383 = scmp.ne.s32.totalorder %s366, %s382
      %p384 = scmp.eq.s32.totalorder %s35, 0
      %p385 = por %p383, %p384
      %p386 = scmp.le.s32.totalorder 1, %s29
      %p387 = scmp.lt.s32.totalorder %s29, 9
      %p388 = pnand %p386, %p387
      %p389 = pneg %p388
      // Predicated region
      $region9: #{tpu_custom_call.1} parent=5 // pred_check
        _
      $region10: #{tpu_custom_call.1} parent=5 // pred_check_branch
        %391 = sbr.rel (%p388) target = $region12
      $region11: #{tpu_custom_call.1} parent=5 // pred_region
        %s392 = ssub.s32 %s29, 1
        // Predicated region
        $region13: #{tpu_custom_call.1} parent=11 // pred_check
          %p393 = pneg %p266
        $region14: #{tpu_custom_call.1} parent=11 // pred_check_branch
          %395 = sbr.rel (%p393) target = $region16
        $region15: #{tpu_custom_call.1} parent=11 // pred_region
          _
        $region16: #{tpu_custom_call.1} parent=11 // pred_fallthru
          _
        // Predicated region
        $region17: #{tpu_custom_call.1} parent=11 // pred_check
          %p396 = pneg %p287
        $region18: #{tpu_custom_call.1} parent=11 // pred_check_branch
          %398 = sbr.rel (%p396) target = $region20
        $region19: #{tpu_custom_call.1} parent=11 // pred_region
          _
        $region20: #{tpu_custom_call.1} parent=11 // pred_fallthru
          _
        // Predicated region
        $region21: #{tpu_custom_call.1} parent=11 // pred_check
          %p399 = pneg %p308
        $region22: #{tpu_custom_call.1} parent=11 // pred_check_branch
          %401 = sbr.rel (%p399) target = $region24
        $region23: #{tpu_custom_call.1} parent=11 // pred_region
          %s403 = ssub.s32 18432, 18432
          %404 = vsyncadd [#allocation11], %s403
          %s405 = sshll.u32 [#allocation10], 4
          %s406 = int_to_ptr.vmem [resolvable:$true] %s405
          %411 = dma.hbm_to_vmem [thread:$0]  %s9, 18432, %s406, [#allocation11], 128, 128, 8
        $region24: #{tpu_custom_call.1} parent=11 // pred_fallthru
          _
        // Predicated region
        $region25: #{tpu_custom_call.1} parent=11 // pred_check
          %p412 = pneg %p329
        $region26: #{tpu_custom_call.1} parent=11 // pred_check_branch
          %414 = sbr.rel (%p412) target = $region28
        $region27: #{tpu_custom_call.1} parent=11 // pred_region
          %s416 = ssub.s32 18432, 18432
          %417 = vsyncadd [#allocation11], %s416
          %s418 = sshll.u32 [#allocation12], 4
          %s419 = int_to_ptr.vmem [resolvable:$true] %s418
          %424 = dma.hbm_to_vmem [thread:$0]  %s10, 18432, %s419, [#allocation11], 128, 128, 8
        $region28: #{tpu_custom_call.1} parent=11 // pred_fallthru
          _
        // Predicated region
        $region29: #{tpu_custom_call.1} parent=11 // pred_check
          %p425 = pneg %p350
        $region30: #{tpu_custom_call.1} parent=11 // pred_check_branch
          %427 = sbr.rel (%p425) target = $region32
        $region31: #{tpu_custom_call.1} parent=11 // pred_region
          %s429 = ssub.s32 2048, 2048
          %430 = vsyncadd [#allocation14], %s429
          %s431 = sshll.u32 [#allocation13], 4
          %s432 = int_to_ptr.vmem [resolvable:$true] %s431
          %437 = dma.hbm_to_vmem [thread:$0]  %s11, 2048, %s432, [#allocation14], 128, 128, 8
        $region32: #{tpu_custom_call.1} parent=11 // pred_fallthru
          _
      $region12: #{tpu_custom_call.1} parent=5 // pred_fallthru
        _
      %p438 = scmp.lt.s32.totalorder %s29, 8
      // Predicated region
      $region33: #{tpu_custom_call.1} parent=5 // pred_check
        %p439 = pneg %p438
      $region34: #{tpu_custom_call.1} parent=5 // pred_check_branch
        %441 = sbr.rel (%p439) target = $region36
      $region35: #{tpu_custom_call.1} parent=5 // pred_region
        // Predicated region
        $region37: #{tpu_custom_call.1} parent=35 // pred_check
          %p442 = pneg %p63
        $region38: #{tpu_custom_call.1} parent=35 // pred_check_branch
          %444 = sbr.rel (%p442) target = $region40
        $region39: #{tpu_custom_call.1} parent=35 // pred_region
          %s445 = sand.u32 %s53, 1
          %s446 = scalar_lea.sflag [#allocation5], %s445
          %s447 = sand.u32 %s53, 1
          %s448 = smul.addr %s447, 64
          %s449 = scalar_lea.vmem [#allocation4], %s448
          %s450 = smul.u32 4, %s37
          %s452 = ssub.s32 1024, 1024
          %453 = vsyncadd %s446, %s452
          %s454 = smul.addr %s450, 2
          %s455 = smul.addr %s36, 32
          %s456 = sadd.s32 %s454, %s455
          %s457 = smul.addr %s456, 128
          %s458 = scalar_lea.hbm %s0, %s457
          %s459 = sshll.u32 %s449, 4
          %s460 = int_to_ptr.vmem [resolvable:$true] %s459
          %465 = dma.hbm_to_vmem [thread:$0]  %s458, 1024, %s460, %s446, 128, 128, 8
        $region40: #{tpu_custom_call.1} parent=35 // pred_fallthru
          _
        // Predicated region
        $region41: #{tpu_custom_call.1} parent=35 // pred_check
          %p466 = pneg %p99
        $region42: #{tpu_custom_call.1} parent=35 // pred_check_branch
          %468 = sbr.rel (%p466) target = $region44
        $region43: #{tpu_custom_call.1} parent=35 // pred_region
          %s469 = sand.u32 %s29, 1
          %s470 = scalar_lea.sflag [#allocation8], %s469
          %s471 = sand.u32 %s89, 1
          %s472 = smul.addr %s471, 32
          %s473 = scalar_lea.vmem [#allocation7], %s472
          %s474 = smul.u32 %s37, 2
          %s475 = ssub.s32 %s474, 1
          %p476 = scmp.gt.s32.totalorder %s475, 0
          %s477 = scalar_select %p476, %s475, 0
          %s478 = smul.u32 2, %s477
          %s480 = ssub.s32 512, 512
          %481 = vsyncadd %s470, %s480
          %s482 = smul.addr %s478, 2
          %s483 = smul.addr %s36, 32
          %s484 = sadd.s32 %s482, %s483
          %s485 = smul.addr %s484, 128
          %s486 = scalar_lea.hbm %s1, %s485
          %s487 = sshll.u32 %s473, 4
          %s488 = int_to_ptr.vmem [resolvable:$true] %s487
          %493 = dma.hbm_to_vmem [thread:$0]  %s486, 512, %s488, %s470, 128, 128, 8
        $region44: #{tpu_custom_call.1} parent=35 // pred_fallthru
          _
        // Predicated region
        $region45: #{tpu_custom_call.1} parent=35 // pred_check
          %p494 = pneg %p135
        $region46: #{tpu_custom_call.1} parent=35 // pred_check_branch
          %496 = sbr.rel (%p494) target = $region48
        $region47: #{tpu_custom_call.1} parent=35 // pred_region
          %s497 = sand.u32 %s29, 1
          %s498 = scalar_lea.sflag [#allocation8], %s497
          %s499 = sand.u32 %s125, 1
          %s500 = smul.addr %s499, 32
          %s501 = scalar_lea.vmem [#allocation9], %s500
          %s502 = smul.u32 %s37, 2
          %s503 = sadd.s32 %s502, 2
          %p504 = scmp.lt.s32.totalorder %s503, 7
          %s505 = scalar_select %p504, %s503, 7
          %s506 = smul.u32 2, %s505
          %s508 = ssub.s32 512, 512
          %509 = vsyncadd %s498, %s508
          %s510 = smul.addr %s506, 2
          %s511 = smul.addr %s36, 32
          %s512 = sadd.s32 %s510, %s511
          %s513 = smul.addr %s512, 128
          %s514 = scalar_lea.hbm %s2, %s513
          %s515 = sshll.u32 %s501, 4
          %s516 = int_to_ptr.vmem [resolvable:$true] %s515
          %521 = dma.hbm_to_vmem [thread:$0]  %s514, 512, %s516, %s498, 128, 128, 8
        $region48: #{tpu_custom_call.1} parent=35 // pred_fallthru
          _
        // Predicated region
        $region49: #{tpu_custom_call.1} parent=35 // pred_check
          %p522 = pneg %p161
        $region50: #{tpu_custom_call.1} parent=35 // pred_check_branch
          %524 = sbr.rel (%p522) target = $region52
        $region51: #{tpu_custom_call.1} parent=35 // pred_region
          %p525 = scmp.lt.s32.totalorder %s36, 1
          %s526 = scalar_select %p525, %s36, 1
          %s527 = scalar_lea.vmem %s3, %s526
        $region52: #{tpu_custom_call.1} parent=35 // pred_fallthru
          _
        // Predicated region
        $region53: #{tpu_custom_call.1} parent=35 // pred_check
          %p528 = pneg %p187
        $region54: #{tpu_custom_call.1} parent=35 // pred_check_branch
          %530 = sbr.rel (%p528) target = $region56
        $region55: #{tpu_custom_call.1} parent=35 // pred_region
          %p531 = scmp.lt.s32.totalorder %s36, 1
          %s532 = scalar_select %p531, %s36, 1
          %s533 = scalar_lea.vmem %s4, %s532
        $region56: #{tpu_custom_call.1} parent=35 // pred_fallthru
          _
        // Predicated region
        $region57: #{tpu_custom_call.1} parent=35 // pred_check
          %p534 = pneg %p213
        $region58: #{tpu_custom_call.1} parent=35 // pred_check_branch
          %536 = sbr.rel (%p534) target = $region60
        $region59: #{tpu_custom_call.1} parent=35 // pred_region
          %p537 = scmp.lt.s32.totalorder %s36, 1
          %s538 = scalar_select %p537, %s36, 1
          %s539 = scalar_lea.vmem %s5, %s538
        $region60: #{tpu_custom_call.1} parent=35 // pred_fallthru
          _
        // Predicated region
        $region61: #{tpu_custom_call.1} parent=35 // pred_check
          %p540 = pneg %p239
        $region62: #{tpu_custom_call.1} parent=35 // pred_check_branch
          %542 = sbr.rel (%p540) target = $region64
        $region63: #{tpu_custom_call.1} parent=35 // pred_region
          %p543 = scmp.lt.s32.totalorder %s36, 1
          %s544 = scalar_select %p543, %s36, 1
          %s545 = scalar_lea.vmem %s6, %s544
        $region64: #{tpu_custom_call.1} parent=35 // pred_fallthru
          _
      $region36: #{tpu_custom_call.1} parent=5 // pred_fallthru
        _
      %p546 = scmp.le.s32.totalorder 1, %s29
      %p547 = scmp.lt.s32.totalorder %s29, 9
      %p548 = pnand %p546, %p547
      %p549 = pneg %p548
      // Predicated region
      $region65: #{tpu_custom_call.1} parent=5 // pred_check
        _
      $region66: #{tpu_custom_call.1} parent=5 // pred_check_branch
        %551 = sbr.rel (%p548) target = $region68
      $region67: #{tpu_custom_call.1} parent=5 // pred_region
        %s552 = ssub.s32 %s29, 1
        %s553 = sand.u32 %s56, 1
        %s554 = scalar_lea.sflag [#allocation5], %s553
        %s555 = sand.u32 %s56, 1
        %s556 = smul.addr %s555, 64
        %s557 = scalar_lea.vmem [#allocation4], %s556
        // Predicated region
        $region69: #{tpu_custom_call.1} parent=67 // pred_check
          %p558 = pneg %p69
        $region70: #{tpu_custom_call.1} parent=67 // pred_check_branch
          %560 = sbr.rel (%p558) target = $region72
        $region71: #{tpu_custom_call.1} parent=67 // pred_region
          %561 = dma.done %s554, 1024
        $region72: #{tpu_custom_call.1} parent=67 // pred_fallthru
          _
        %s562 = sand.u32 %s34, 1
        %s563 = scalar_lea.sflag [#allocation8], %s562
        %s564 = sand.u32 %s92, 1
        %s565 = smul.addr %s564, 32
        %s566 = scalar_lea.vmem [#allocation7], %s565
        // Predicated region
        $region73: #{tpu_custom_call.1} parent=67 // pred_check
          %p567 = pneg %p105
        $region74: #{tpu_custom_call.1} parent=67 // pred_check_branch
          %569 = sbr.rel (%p567) target = $region76
        $region75: #{tpu_custom_call.1} parent=67 // pred_region
          %570 = dma.done %s563, 512
        $region76: #{tpu_custom_call.1} parent=67 // pred_fallthru
          _
        %s571 = sand.u32 %s34, 1
        %s572 = scalar_lea.sflag [#allocation8], %s571
        %s573 = sand.u32 %s128, 1
        %s574 = smul.addr %s573, 32
        %s575 = scalar_lea.vmem [#allocation9], %s574
        // Predicated region
        $region77: #{tpu_custom_call.1} parent=67 // pred_check
          %p576 = pneg %p141
        $region78: #{tpu_custom_call.1} parent=67 // pred_check_branch
          %578 = sbr.rel (%p576) target = $region80
        $region79: #{tpu_custom_call.1} parent=67 // pred_region
          %579 = dma.done %s572, 512
        $region80: #{tpu_custom_call.1} parent=67 // pred_fallthru
          _
        // Predicated region
        $region81: #{tpu_custom_call.1} parent=67 // pred_check
          %p580 = pneg %p308
        $region82: #{tpu_custom_call.1} parent=67 // pred_check_branch
          %582 = sbr.rel (%p580) target = $region84
        $region83: #{tpu_custom_call.1} parent=67 // pred_region
          %583 = dma.done [#allocation11], 18432
        $region84: #{tpu_custom_call.1} parent=67 // pred_fallthru
          _
        // Predicated region
        $region85: #{tpu_custom_call.1} parent=67 // pred_check
          %p584 = pneg %p329
        $region86: #{tpu_custom_call.1} parent=67 // pred_check_branch
          %586 = sbr.rel (%p584) target = $region88
        $region87: #{tpu_custom_call.1} parent=67 // pred_region
          %587 = dma.done [#allocation11], 18432
        $region88: #{tpu_custom_call.1} parent=67 // pred_fallthru
          _
        // Predicated region
        $region89: #{tpu_custom_call.1} parent=67 // pred_check
          %p588 = pneg %p350
        $region90: #{tpu_custom_call.1} parent=67 // pred_check_branch
          %590 = sbr.rel (%p588) target = $region92
        $region91: #{tpu_custom_call.1} parent=67 // pred_region
          %591 = dma.done [#allocation14], 2048
        $region92: #{tpu_custom_call.1} parent=67 // pred_fallthru
          _
        %s592 = sand.u32 %s56, 1
        %s593 = scalar_lea.sflag [#allocation5], %s592
        %s594 = sand.u32 %s56, 1
        %s595 = smul.addr %s594, 64
        %s596 = scalar_lea.vmem [#allocation4], %s595
        %p597 = pneg %p69
        %p598 = pneg %p66
        %s599 = sand.u32 %s34, 1
        %s600 = scalar_lea.sflag [#allocation8], %s599
        %s601 = sand.u32 %s92, 1
        %s602 = smul.addr %s601, 32
        %s603 = scalar_lea.vmem [#allocation7], %s602
        %p604 = pneg %p105
        %p605 = pneg %p102
        %s606 = sand.u32 %s34, 1
        %s607 = scalar_lea.sflag [#allocation8], %s606
        %s608 = sand.u32 %s128, 1
        %s609 = smul.addr %s608, 32
        %s610 = scalar_lea.vmem [#allocation9], %s609
        %p611 = pneg %p141
        %p612 = pneg %p138
        %p613 = scmp.lt.s32.totalorder %s38, 1
        %s614 = scalar_select %p613, %s38, 1
        %s615 = scalar_lea.vmem %s3, %s614
        %p616 = pneg %p167
        %p617 = pneg %p164
        %p618 = scmp.lt.s32.totalorder %s38, 1
        %s619 = scalar_select %p618, %s38, 1
        %s620 = scalar_lea.vmem %s4, %s619
        %p621 = pneg %p193
        %p622 = pneg %p190
        %p623 = scmp.lt.s32.totalorder %s38, 1
        %s624 = scalar_select %p623, %s38, 1
        %s625 = scalar_lea.vmem %s5, %s624
        %p626 = pneg %p219
        %p627 = pneg %p216
        %p628 = scmp.lt.s32.totalorder %s38, 1
        %s629 = scalar_select %p628, %s38, 1
        %s630 = scalar_lea.vmem %s6, %s629
        %p631 = pneg %p245
        %p632 = pneg %p242
        %p633 = pneg %p266
        %p634 = pneg %p263
        %p635 = pneg %p287
        %p636 = pneg %p284
        %p637 = pneg %p308
        %p638 = pneg %p305
        %p639 = pneg %p329
        %p640 = pneg %p326
        %p641 = pneg %p350
        %p642 = pneg %p347
        %p643 = pneg %p378
        %p644 = pneg %p375
        %s645 = sand.u32 %s365, 1
        %s646 = scalar_lea.sflag [#allocation6], %s645
        %s647 = sand.u32 %s365, 1
        %s648 = smul.addr %s647, 64
        %s649 = scalar_lea.vmem [#allocation15], %s648
        %s650 = smul.u32 4, %s39
        %s651 = smul.u32 %s39, 2
        %s652 = ssub.s32 %s651, 1
        %p653 = scmp.gt.s32.totalorder %s652, 0
        %s654 = scalar_select %p653, %s652, 0
        %s655 = smul.u32 2, %s654
        %s656 = smul.u32 %s39, 2
        %s657 = sadd.s32 %s656, 2
        %p658 = scmp.lt.s32.totalorder %s657, 7
        %s659 = scalar_select %p658, %s657, 7
        %s660 = smul.u32 2, %s659
        %p661 = scmp.lt.s32.totalorder %s38, 1
        %s662 = scalar_select %p661, %s38, 1
        %s663 = scalar_lea.vmem %s3, %s662
        %p664 = scmp.lt.s32.totalorder %s38, 1
        %s665 = scalar_select %p664, %s38, 1
        %s666 = scalar_lea.vmem %s4, %s665
        %p667 = scmp.lt.s32.totalorder %s38, 1
        %s668 = scalar_select %p667, %s38, 1
        %s669 = scalar_lea.vmem %s5, %s668
        %p670 = scmp.lt.s32.totalorder %s38, 1
        %s671 = scalar_select %p670, %s38, 1
        %s672 = scalar_lea.vmem %s6, %s671
        %s673 = smul.u32 4, %s39
        %v674 = vld [vmem:[%s663] sm:$0x1]
        %v675 = vld [vmem:[%s666] sm:$0x1]
        %v676 = vld [vmem:[%s669] sm:$0x1]
        %v677 = vld [vmem:[%s672] sm:$0x1]
        %678 = vst [vmem:[#allocation2] sm:$0x1] 0.0
        %679 = vst [vmem:[#allocation2 + $0x18] sm:$0x1] 0.0
        %680 = vst [vmem:[#allocation2 + $0x30] sm:$0x1] 0.0
        %681 = vst [vmem:[#allocation2 + $0x48] sm:$0x1] 0.0
        %682 = vst [vmem:[#allocation2 + $0x60] sm:$0x1] 0.0
        %683 = vst [vmem:[#allocation2 + $0x78] sm:$0x1] 0.0
        %684 = vst [vmem:[#allocation2 + $0x90] sm:$0x1] 0.0
        %685 = vst [vmem:[#allocation2 + $0xa8] sm:$0x1] 0.0
        %686 = vst [vmem:[#allocation2 + $0x11] sm:$0x1] 0.0
        %687 = vst [vmem:[#allocation2 + $0x29] sm:$0x1] 0.0
        %688 = vst [vmem:[#allocation2 + $0x41] sm:$0x1] 0.0
        %689 = vst [vmem:[#allocation2 + $0x59] sm:$0x1] 0.0
        %690 = vst [vmem:[#allocation2 + $0x71] sm:$0x1] 0.0
        %691 = vst [vmem:[#allocation2 + $0x89] sm:$0x1] 0.0
        %692 = vst [vmem:[#allocation2 + $0xa1] sm:$0x1] 0.0
        %693 = vst [vmem:[#allocation2 + $0xb9] sm:$0x1] 0.0
        %v694 = vld [vmem:[%s566] sm:$0xff]
        %v695 = vld [vmem:[%s566 + $0x8] sm:$0xff]
        %v696 = vld [vmem:[%s566 + $0x10] sm:$0xff]
        %v697 = vld [vmem:[%s566 + $0x18] sm:$0xff]
        %v699 = vlaneseq
        %v700 = vshrl.u32 %v699, 7
        %v701 = vsub.s32 0, %v700
        %v702 = vrot.slane %v674, %v701
        %v704 = vmul.f32 %v694, %v702
        %v705 = vmul.f32 %v695, %v702
        %v706 = vmul.f32 %v696, %v702
        %v707 = vmul.f32 %v697, %v702
        %708 = vst [vmem:[#allocation2 + $0x1] sm:$0xff] %v704
        %709 = vst [vmem:[#allocation2 + $0x9] sm:$0xff] %v705
        %710 = vst [vmem:[#allocation2 + $0x19] sm:$0xff] %v706
        %711 = vst [vmem:[#allocation2 + $0x21] sm:$0xff] %v707
        %v712 = vld [vmem:[%s557] sm:$0xff]
        %v713 = vld [vmem:[%s557 + $0x8] sm:$0xff]
        %v714 = vld [vmem:[%s557 + $0x10] sm:$0xff]
        %v715 = vld [vmem:[%s557 + $0x18] sm:$0xff]
        %v716 = vld [vmem:[%s557 + $0x20] sm:$0xff]
        %v717 = vld [vmem:[%s557 + $0x28] sm:$0xff]
        %v718 = vld [vmem:[%s557 + $0x30] sm:$0xff]
        %v719 = vld [vmem:[%s557 + $0x38] sm:$0xff]
        %v720 = vmul.f32 %v712, %v702
        %v721 = vmul.f32 %v713, %v702
        %v722 = vmul.f32 %v714, %v702
        %v723 = vmul.f32 %v715, %v702
        %v724 = vmul.f32 %v716, %v702
        %v725 = vmul.f32 %v717, %v702
        %v726 = vmul.f32 %v718, %v702
        %v727 = vmul.f32 %v719, %v702
        %s728 = scalar_lea.vmem [#allocation2], 48
        %729 = vst [vmem:[%s728 + $0x1] sm:$0xff] %v720
        %730 = vst [vmem:[%s728 + $0x9] sm:$0xff] %v721
        %731 = vst [vmem:[%s728 + $0x19] sm:$0xff] %v722
        %732 = vst [vmem:[%s728 + $0x21] sm:$0xff] %v723
        %733 = vst [vmem:[%s728 + $0x31] sm:$0xff] %v724
        %734 = vst [vmem:[%s728 + $0x39] sm:$0xff] %v725
        %735 = vst [vmem:[%s728 + $0x49] sm:$0xff] %v726
        %736 = vst [vmem:[%s728 + $0x51] sm:$0xff] %v727
        %v737 = vld [vmem:[%s575] sm:$0xff]
        %v738 = vld [vmem:[%s575 + $0x8] sm:$0xff]
        %v739 = vld [vmem:[%s575 + $0x10] sm:$0xff]
        %v740 = vld [vmem:[%s575 + $0x18] sm:$0xff]
        %v741 = vmul.f32 %v737, %v702
        %v742 = vmul.f32 %v738, %v702
        %v743 = vmul.f32 %v739, %v702
        %v744 = vmul.f32 %v740, %v702
        %s745 = scalar_lea.vmem [#allocation2], 144
        %746 = vst [vmem:[%s745 + $0x1] sm:$0xff] %v741
        %747 = vst [vmem:[%s745 + $0x9] sm:$0xff] %v742
        %748 = vst [vmem:[%s745 + $0x19] sm:$0xff] %v743
        %749 = vst [vmem:[%s745 + $0x21] sm:$0xff] %v744
        %p750 = scmp.eq.s32.totalorder %s39, 0
        // Predicated region
        $region93: #{tpu_custom_call.1} parent=67 // pred_check
          %p751 = pneg %p750
        $region94: #{tpu_custom_call.1} parent=67 // pred_check_branch
          %753 = sbr.rel (%p751) target = $region96
        $region95: #{tpu_custom_call.1} parent=67 // pred_region
          %754 = vst [vmem:[#allocation2] sm:$0xff] 0.0
          %755 = vst [vmem:[#allocation2 + $0x8] sm:$0xff] 0.0
          %756 = vst [vmem:[#allocation2 + $0x10] sm:$0x3] 0.0
          %757 = vst [vmem:[#allocation2 + $0x18] sm:$0xff] 0.0
          %758 = vst [vmem:[#allocation2 + $0x20] sm:$0xff] 0.0
          %759 = vst [vmem:[#allocation2 + $0x28] sm:$0x3] 0.0
        $region96: #{tpu_custom_call.1} parent=67 // pred_fallthru
          _
        %p760 = scmp.eq.s32.totalorder %s39, 3
        // Predicated region
        $region97: #{tpu_custom_call.1} parent=67 // pred_check
          %p761 = pneg %p760
        $region98: #{tpu_custom_call.1} parent=67 // pred_check_branch
          %763 = sbr.rel (%p761) target = $region100
        $region99: #{tpu_custom_call.1} parent=67 // pred_region
          %764 = vst [vmem:[%s745] sm:$0xff] 0.0
          %765 = vst [vmem:[%s745 + $0x8] sm:$0xff] 0.0
          %766 = vst [vmem:[%s745 + $0x10] sm:$0x3] 0.0
          %767 = vst [vmem:[%s745 + $0x18] sm:$0xff] 0.0
          %768 = vst [vmem:[%s745 + $0x20] sm:$0xff] 0.0
          %769 = vst [vmem:[%s745 + $0x28] sm:$0x3] 0.0
        $region100: #{tpu_custom_call.1} parent=67 // pred_fallthru
          _
        %v770 = vld [vmem:[%s7] sm:$0x1]
        %v771 = vld [vmem:[#allocation2] sm:$0xff]
        %v772 = vld [vmem:[#allocation2 + $0x8] sm:$0xff]
        %v773 = vld [vmem:[#allocation2 + $0x18] sm:$0xff]
        %v774 = vld [vmem:[#allocation2 + $0x20] sm:$0xff]
        %v775 = vld [vmem:[#allocation2 + $0x30] sm:$0xff]
        %v776 = vld [vmem:[#allocation2 + $0x38] sm:$0xff]
        %v777 = vld [vmem:[#allocation2 + $0x48] sm:$0xff]
        %v778 = vld [vmem:[#allocation2 + $0x50] sm:$0xff]
        %v779 = vld [vmem:[#allocation2 + $0x60] sm:$0xff]
        %v780 = vld [vmem:[#allocation2 + $0x68] sm:$0xff]
        %v781 = vld [vmem:[#allocation2 + $0x78] sm:$0xff]
        %v782 = vld [vmem:[#allocation2 + $0x80] sm:$0xff]
        %v783 = vld [vmem:[#allocation2 + $0x1] sm:$0xff]
        %v784 = vld [vmem:[#allocation2 + $0x9] sm:$0xff]
        %v785 = vld [vmem:[#allocation2 + $0x19] sm:$0xff]
        %v786 = vld [vmem:[#allocation2 + $0x21] sm:$0xff]
        %v787 = vld [vmem:[#allocation2 + $0x31] sm:$0xff]
        %v788 = vld [vmem:[#allocation2 + $0x39] sm:$0xff]
        %v789 = vld [vmem:[#allocation2 + $0x49] sm:$0xff]
        %v790 = vld [vmem:[#allocation2 + $0x51] sm:$0xff]
        %v791 = vld [vmem:[#allocation2 + $0x61] sm:$0xff]
        %v792 = vld [vmem:[#allocation2 + $0x69] sm:$0xff]
        %v793 = vld [vmem:[#allocation2 + $0x79] sm:$0xff]
        %v794 = vld [vmem:[#allocation2 + $0x81] sm:$0xff]
        %v795 = vld [vmem:[#allocation2 + $0x2] sm:$0xff]
        %v796 = vld [vmem:[#allocation2 + $0xa] sm:$0xff]
        %v797 = vld [vmem:[#allocation2 + $0x1a] sm:$0xff]
        %v798 = vld [vmem:[#allocation2 + $0x22] sm:$0xff]
        %v799 = vld [vmem:[#allocation2 + $0x32] sm:$0xff]
        %v800 = vld [vmem:[#allocation2 + $0x3a] sm:$0xff]
        %v801 = vld [vmem:[#allocation2 + $0x4a] sm:$0xff]
        %v802 = vld [vmem:[#allocation2 + $0x52] sm:$0xff]
        %v803 = vld [vmem:[#allocation2 + $0x62] sm:$0xff]
        %v804 = vld [vmem:[#allocation2 + $0x6a] sm:$0xff]
        %v805 = vld [vmem:[#allocation2 + $0x7a] sm:$0xff]
        %v806 = vld [vmem:[#allocation2 + $0x82] sm:$0xff]
        %v807 = vld [vmem:[#allocation10] sm:$0xff]
        %v808 = vld [vmem:[#allocation10 + $0x8] sm:$0xff]
        %v809 = vld [vmem:[#allocation10 + $0x10] sm:$0xff]
        %v810 = vld [vmem:[#allocation10 + $0x18] sm:$0xff]
        %v811 = vld [vmem:[#allocation10 + $0x20] sm:$0xff]
        %v812 = vld [vmem:[#allocation10 + $0x28] sm:$0xff]
        %v813 = vld [vmem:[#allocation10 + $0x30] sm:$0xff]
        %v814 = vld [vmem:[#allocation10 + $0x38] sm:$0xff]
        %v815 = vld [vmem:[#allocation10 + $0x40] sm:$0xff]
        %v816 = vld [vmem:[#allocation10 + $0x48] sm:$0xff]
        %v817 = vld [vmem:[#allocation10 + $0x50] sm:$0xff]
        %v818 = vld [vmem:[#allocation10 + $0x58] sm:$0xff]
        %v819 = vld [vmem:[#allocation10 + $0x60] sm:$0xff]
        %v820 = vld [vmem:[#allocation10 + $0x68] sm:$0xff]
        %v821 = vld [vmem:[#allocation10 + $0x70] sm:$0xff]
        %v822 = vld [vmem:[#allocation10 + $0x78] sm:$0xff]
        %v823 = vld [vmem:[#allocation10 + $0x80] sm:$0xff]
        %v824 = vld [vmem:[#allocation10 + $0x88] sm:$0xff]
        %v825 = vld [vmem:[#allocation10 + $0x90] sm:$0xff]
        %v826 = vld [vmem:[#allocation10 + $0x98] sm:$0xff]
        %v827 = vld [vmem:[#allocation10 + $0xa0] sm:$0xff]
        %v828 = vld [vmem:[#allocation10 + $0xa8] sm:$0xff]
        %v829 = vld [vmem:[#allocation10 + $0xb0] sm:$0xff]
        %v830 = vld [vmem:[#allocation10 + $0xb8] sm:$0xff]
        %v831 = vld [vmem:[#allocation10 + $0xc0] sm:$0xff]
        %v832 = vld [vmem:[#allocation10 + $0xc8] sm:$0xff]
        %v833 = vld [vmem:[#allocation10 + $0xd0] sm:$0xff]
        %v834 = vld [vmem:[#allocation10 + $0xd8] sm:$0xff]
        %v835 = vld [vmem:[#allocation10 + $0xe0] sm:$0xff]
        %v836 = vld [vmem:[#allocation10 + $0xe8] sm:$0xff]
        %v837 = vld [vmem:[#allocation10 + $0xf0] sm:$0xff]
        %v838 = vld [vmem:[#allocation10 + $0xf8] sm:$0xff]
        %v839 = vld [vmem:[#allocation10 + $0x100] sm:$0xff]
        %v840 = vld [vmem:[#allocation10 + $0x108] sm:$0xff]
        %v841 = vld [vmem:[#allocation10 + $0x110] sm:$0xff]
        %v842 = vld [vmem:[#allocation10 + $0x118] sm:$0xff]
        %v843 = vld [vmem:[#allocation10 + $0x120] sm:$0xff]
        %v844 = vld [vmem:[#allocation10 + $0x128] sm:$0xff]
        %v845 = vld [vmem:[#allocation10 + $0x130] sm:$0xff]
        %v846 = vld [vmem:[#allocation10 + $0x138] sm:$0xff]
        %v847 = vld [vmem:[#allocation10 + $0x140] sm:$0xff]
        %v848 = vld [vmem:[#allocation10 + $0x148] sm:$0xff]
        %v849 = vld [vmem:[#allocation10 + $0x150] sm:$0xff]
        %v850 = vld [vmem:[#allocation10 + $0x158] sm:$0xff]
        %v851 = vld [vmem:[#allocation10 + $0x160] sm:$0xff]
        %v852 = vld [vmem:[#allocation10 + $0x168] sm:$0xff]
        %v853 = vld [vmem:[#allocation10 + $0x170] sm:$0xff]
        %v854 = vld [vmem:[#allocation10 + $0x178] sm:$0xff]
        %s855 = scalar_lea.vmem [#allocation2], 24
        %v856 = vld [vmem:[%s855] sm:$0xff]
        %v857 = vld [vmem:[%s855 + $0x8] sm:$0xff]
        %v858 = vld [vmem:[%s855 + $0x18] sm:$0xff]
        %v859 = vld [vmem:[%s855 + $0x20] sm:$0xff]
        %v860 = vld [vmem:[%s855 + $0x30] sm:$0xff]
        %v861 = vld [vmem:[%s855 + $0x38] sm:$0xff]
        %v862 = vld [vmem:[%s855 + $0x48] sm:$0xff]
        %v863 = vld [vmem:[%s855 + $0x50] sm:$0xff]
        %v864 = vld [vmem:[%s855 + $0x60] sm:$0xff]
        %v865 = vld [vmem:[%s855 + $0x68] sm:$0xff]
        %v866 = vld [vmem:[%s855 + $0x78] sm:$0xff]
        %v867 = vld [vmem:[%s855 + $0x80] sm:$0xff]
        %v868 = vld [vmem:[%s855 + $0x1] sm:$0xff]
        %v869 = vld [vmem:[%s855 + $0x9] sm:$0xff]
        %v870 = vld [vmem:[%s855 + $0x19] sm:$0xff]
        %v871 = vld [vmem:[%s855 + $0x21] sm:$0xff]
        %v872 = vld [vmem:[%s855 + $0x31] sm:$0xff]
        %v873 = vld [vmem:[%s855 + $0x39] sm:$0xff]
        %v874 = vld [vmem:[%s855 + $0x49] sm:$0xff]
        %v875 = vld [vmem:[%s855 + $0x51] sm:$0xff]
        %v876 = vld [vmem:[%s855 + $0x61] sm:$0xff]
        %v877 = vld [vmem:[%s855 + $0x69] sm:$0xff]
        %v878 = vld [vmem:[%s855 + $0x79] sm:$0xff]
        %v879 = vld [vmem:[%s855 + $0x81] sm:$0xff]
        %v880 = vld [vmem:[%s855 + $0x2] sm:$0xff]
        %v881 = vld [vmem:[%s855 + $0xa] sm:$0xff]
        %v882 = vld [vmem:[%s855 + $0x1a] sm:$0xff]
        %v883 = vld [vmem:[%s855 + $0x22] sm:$0xff]
        %v884 = vld [vmem:[%s855 + $0x32] sm:$0xff]
        %v885 = vld [vmem:[%s855 + $0x3a] sm:$0xff]
        %v886 = vld [vmem:[%s855 + $0x4a] sm:$0xff]
        %v887 = vld [vmem:[%s855 + $0x52] sm:$0xff]
        %v888 = vld [vmem:[%s855 + $0x62] sm:$0xff]
        %v889 = vld [vmem:[%s855 + $0x6a] sm:$0xff]
        %v890 = vld [vmem:[%s855 + $0x7a] sm:$0xff]
        %v891 = vld [vmem:[%s855 + $0x82] sm:$0xff]
        %v892 = vld [vmem:[#allocation10 + $0x180] sm:$0xff]
        %v893 = vld [vmem:[#allocation10 + $0x188] sm:$0xff]
        %v894 = vld [vmem:[#allocation10 + $0x190] sm:$0xff]
        %v895 = vld [vmem:[#allocation10 + $0x198] sm:$0xff]
        %v896 = vld [vmem:[#allocation10 + $0x1a0] sm:$0xff]
        %v897 = vld [vmem:[#allocation10 + $0x1a8] sm:$0xff]
        %v898 = vld [vmem:[#allocation10 + $0x1b0] sm:$0xff]
        %v899 = vld [vmem:[#allocation10 + $0x1b8] sm:$0xff]
        %v900 = vld [vmem:[#allocation10 + $0x1c0] sm:$0xff]
        %v901 = vld [vmem:[#allocation10 + $0x1c8] sm:$0xff]
        %v902 = vld [vmem:[#allocation10 + $0x1d0] sm:$0xff]
        %v903 = vld [vmem:[#allocation10 + $0x1d8] sm:$0xff]
        %v904 = vld [vmem:[#allocation10 + $0x1e0] sm:$0xff]
        %v905 = vld [vmem:[#allocation10 + $0x1e8] sm:$0xff]
        %v906 = vld [vmem:[#allocation10 + $0x1f0] sm:$0xff]
        %v907 = vld [vmem:[#allocation10 + $0x1f8] sm:$0xff]
        %v908 = vld [vmem:[#allocation10 + $0x200] sm:$0xff]
        %v909 = vld [vmem:[#allocation10 + $0x208] sm:$0xff]
        %v910 = vld [vmem:[#allocation10 + $0x210] sm:$0xff]
        %v911 = vld [vmem:[#allocation10 + $0x218] sm:$0xff]
        %v912 = vld [vmem:[#allocation10 + $0x220] sm:$0xff]
        %v913 = vld [vmem:[#allocation10 + $0x228] sm:$0xff]
        %v914 = vld [vmem:[#allocation10 + $0x230] sm:$0xff]
        %v915 = vld [vmem:[#allocation10 + $0x238] sm:$0xff]
        %v916 = vld [vmem:[#allocation10 + $0x240] sm:$0xff]
        %v917 = vld [vmem:[#allocation10 + $0x248] sm:$0xff]
        %v918 = vld [vmem:[#allocation10 + $0x250] sm:$0xff]
        %v919 = vld [vmem:[#allocation10 + $0x258] sm:$0xff]
        %v920 = vld [vmem:[#allocation10 + $0x260] sm:$0xff]
        %v921 = vld [vmem:[#allocation10 + $0x268] sm:$0xff]
        %v922 = vld [vmem:[#allocation10 + $0x270] sm:$0xff]
        %v923 = vld [vmem:[#allocation10 + $0x278] sm:$0xff]
        %v924 = vld [vmem:[#allocation10 + $0x280] sm:$0xff]
        %v925 = vld [vmem:[#allocation10 + $0x288] sm:$0xff]
        %v926 = vld [vmem:[#allocation10 + $0x290] sm:$0xff]
        %v927 = vld [vmem:[#allocation10 + $0x298] sm:$0xff]
        %v928 = vld [vmem:[#allocation10 + $0x2a0] sm:$0xff]
        %v929 = vld [vmem:[#allocation10 + $0x2a8] sm:$0xff]
        %v930 = vld [vmem:[#allocation10 + $0x2b0] sm:$0xff]
        %v931 = vld [vmem:[#allocation10 + $0x2b8] sm:$0xff]
        %v932 = vld [vmem:[#allocation10 + $0x2c0] sm:$0xff]
        %v933 = vld [vmem:[#allocation10 + $0x2c8] sm:$0xff]
        %v934 = vld [vmem:[#allocation10 + $0x2d0] sm:$0xff]
        %v935 = vld [vmem:[#allocation10 + $0x2d8] sm:$0xff]
        %v936 = vld [vmem:[#allocation10 + $0x2e0] sm:$0xff]
        %v937 = vld [vmem:[#allocation10 + $0x2e8] sm:$0xff]
        %v938 = vld [vmem:[#allocation10 + $0x2f0] sm:$0xff]
        %v939 = vld [vmem:[#allocation10 + $0x2f8] sm:$0xff]
        %940 = vmatprep.subr.mxu0 0.0
        %941 = vmatpush1.msra.mxu0 %v892
        %942 = vmatprep.subr.mxu0 0.0
        %943 = vmatpush1.msra.mxu0 %v893
        %944 = vmatprep.subr.mxu0 0.0
        %945 = vmatpush1.msra.mxu0 %v894
        %946 = vmatprep.subr.mxu0 0.0
        %947 = vmatpush1.msra.mxu0 %v895
        %948 = vmatprep.subr.mxu0 0.0
        %949 = vmatpush1.msra.mxu0 %v896
        %950 = vmatprep.subr.mxu0 0.0
        %951 = vmatpush1.msra.mxu0 %v897
        %952 = vmatprep.subr.mxu0 0.0
        %953 = vmatpush1.msra.mxu0 %v898
        %954 = vmatprep.subr.mxu0 0.0
        %955 = vmatpush1.msra.mxu0 %v899
        %956 = vmatprep.subr.mxu0 0.0
        %957 = vmatpush1.msra.mxu0 %v900
        %958 = vmatprep.subr.mxu0 0.0
        %959 = vmatpush1.msra.mxu0 %v901
        %960 = vmatprep.subr.mxu0 0.0
        %961 = vmatpush1.msra.mxu0 %v902
        %962 = vmatprep.subr.mxu0 0.0
        %963 = vmatpush1.msra.mxu0 %v903
        %964 = vmatprep.subr.mxu0 0.0
        %965 = vmatpush1.msra.mxu0 %v904
        %966 = vmatprep.subr.mxu0 0.0
        %967 = vmatpush1.msra.mxu0 %v905
        %968 = vmatprep.subr.mxu0 0.0
        %969 = vmatpush1.msra.mxu0 %v906
        %970 = vmatprep.subr.mxu0 0.0
        %971 = vmatpush1.msra.mxu0 %v907
        %972 = vmatprep.subr.mxu0 0.0
        %973 = vmatpush1.msra.mxu0 %v908
        %974 = vmatprep.subr.mxu0 0.0
        %975 = vmatpush1.msra.mxu0 %v909
        %976 = vmatprep.subr.mxu0 0.0
        %977 = vmatpush1.msra.mxu0 %v910
        %978 = vmatprep.subr.mxu0 0.0
        %979 = vmatpush1.msra.mxu0 %v911
        %980 = vmatprep.subr.mxu0 0.0
        %981 = vmatpush1.msra.mxu0 %v912
        %982 = vmatprep.subr.mxu0 0.0
        %983 = vmatpush1.msra.mxu0 %v913
        %984 = vmatprep.subr.mxu0 0.0
        %985 = vmatpush1.msra.mxu0 %v914
        %986 = vmatprep.subr.mxu0 0.0
        %987 = vmatpush1.msra.mxu0 %v915
        %988 = vmatprep.subr.mxu0 0.0
        %989 = vmatpush1.msra.mxu0 %v916
        %990 = vmatprep.subr.mxu0 0.0
        %991 = vmatpush1.msra.mxu0 %v917
        %992 = vmatprep.subr.mxu0 0.0
        %993 = vmatpush1.msra.mxu0 %v918
        %994 = vmatprep.subr.mxu0 0.0
        %995 = vmatpush1.msra.mxu0 %v919
        %996 = vmatprep.subr.mxu0 0.0
        %997 = vmatpush1.msra.mxu0 %v920
        %998 = vmatprep.subr.mxu0 0.0
        %999 = vmatpush1.msra.mxu0 %v921
        %1000 = vmatprep.subr.mxu0 0.0
        %1001 = vmatpush1.msra.mxu0 %v922
        %1002 = vmatprep.subr.mxu0 0.0
        %1003 = vmatpush1.msra.mxu0 %v923
        %1004 = vmatprep.mubr.f32.mxu0 %v868
        %1005 = vmatmul.mubr.f32.gmra.mrb[0].mxu0 %v856
        %v1006 = vpop.f32.mrb[0].mxu0
        %v1007 = vadd.f32 0.0, %v1006
        %v1008 = vpop.f32.mrb[0].mxu0
        %1009 = vmatprep.mubr.f32.mxu0 %v869
        %1010 = vmatmul.mubr.f32.gmra.mrb[0].mxu0 %v857
        %v1011 = vpop.f32.mrb[0].mxu0
        %v1012 = vadd.f32 0.0, %v1011
        %v1013 = vpop.f32.mrb[0].mxu0
        %1014 = vmatprep.mubr.f32.mxu0 %v870
        %1015 = vmatmul.mubr.f32.gmra.mrb[0].mxu0 %v858
        %v1016 = vpop.f32.mrb[0].mxu0
        %v1017 = vadd.f32 0.0, %v1016
        %v1018 = vpop.f32.mrb[0].mxu0
        %1019 = vmatprep.mubr.f32.mxu0 %v871
        %1020 = vmatmul.mubr.f32.gmra.mrb[0].mxu0 %v859
        %v1021 = vpop.f32.mrb[0].mxu0
        %v1022 = vadd.f32 0.0, %v1021
        %v1023 = vpop.f32.mrb[0].mxu0
        %1024 = vmatprep.mubr.f32.mxu0 %v872
        %1025 = vmatmul.mubr.f32.gmra.mrb[0].mxu0 %v860
        %v1026 = vpop.f32.mrb[0].mxu0
        %v1027 = vadd.f32 0.0, %v1026
        %v1028 = vpop.f32.mrb[0].mxu0
        %1029 = vmatprep.mubr.f32.mxu0 %v873
        %1030 = vmatmul.mubr.f32.gmra.mrb[0].mxu0 %v861
        %v1031 = vpop.f32.mrb[0].mxu0
        %v1032 = vadd.f32 0.0, %v1031
        %v1033 = vpop.f32.mrb[0].mxu0
        %1034 = vmatprep.mubr.f32.mxu0 %v874
        %1035 = vmatmul.mubr.f32.gmra.mrb[0].mxu0 %v862
        %v1036 = vpop.f32.mrb[0].mxu0
        %v1037 = vadd.f32 0.0, %v1036
        %v1038 = vpop.f32.mrb[0].mxu0
        %1039 = vmatprep.mubr.f32.mxu0 %v875
        %1040 = vmatmul.mubr.f32.gmra.mrb[0].mxu0 %v863
        %v1041 = vpop.f32.mrb[0].mxu0
        %v1042 = vadd.f32 0.0, %v1041
        %v1043 = vpop.f32.mrb[0].mxu0
        %1044 = vmatprep.mubr.f32.mxu0 %v876
        %1045 = vmatmul.mubr.f32.gmra.mrb[0].mxu0 %v864
        %v1046 = vpop.f32.mrb[0].mxu0
        %v1047 = vadd.f32 0.0, %v1046
        %v1048 = vpop.f32.mrb[0].mxu0
        %1049 = vmatprep.mubr.f32.mxu0 %v877
        %1050 = vmatmul.mubr.f32.gmra.mrb[0].mxu0 %v865
        %v1051 = vpop.f32.mrb[0].mxu0
        %v1052 = vadd.f32 0.0, %v1051
        %v1053 = vpop.f32.mrb[0].mxu0
        %1054 = vmatprep.mubr.f32.mxu0 %v878
        %1055 = vmatmul.mubr.f32.gmra.mrb[0].mxu0 %v866
        %v1056 = vpop.f32.mrb[0].mxu0
        %v1057 = vadd.f32 0.0, %v1056
        %v1058 = vpop.f32.mrb[0].mxu0
        %1059 = vmatprep.mubr.f32.mxu0 %v879
        %1060 = vmatmul.mubr.f32.gmra.mrb[0].mxu0 %v867
        %v1061 = vpop.f32.mrb[0].mxu0
        %v1062 = vadd.f32 0.0, %v1061
        %v1063 = vpop.f32.mrb[0].mxu0
        %1064 = vdwg.mxu0
        %1065 = vmatprep.subr.mxu0 0.0
        %1066 = vmatpush1.msra.mxu0 %v924
        %1067 = vmatprep.subr.mxu0 0.0
        %1068 = vmatpush1.msra.mxu0 %v925
        %1069 = vmatprep.subr.mxu0 0.0
        %1070 = vmatpush1.msra.mxu0 %v926
        %1071 = vmatprep.subr.mxu0 0.0
        %1072 = vmatpush1.msra.mxu0 %v927
        %1073 = vmatprep.subr.mxu0 0.0
        %1074 = vmatpush1.msra.mxu0 %v928
        %1075 = vmatprep.subr.mxu0 0.0
        %1076 = vmatpush1.msra.mxu0 %v929
        %1077 = vmatprep.subr.mxu0 0.0
        %1078 = vmatpush1.msra.mxu0 %v930
        %1079 = vmatprep.subr.mxu0 0.0
        %1080 = vmatpush1.msra.mxu0 %v931
        %1081 = vmatprep.subr.mxu0 0.0
        %1082 = vmatpush1.msra.mxu0 %v932
        %1083 = vmatprep.subr.mxu0 0.0
        %1084 = vmatpush1.msra.mxu0 %v933
        %1085 = vmatprep.subr.mxu0 0.0
        %1086 = vmatpush1.msra.mxu0 %v934
        %1087 = vmatprep.subr.mxu0 0.0
        %1088 = vmatpush1.msra.mxu0 %v935
        %1089 = vmatprep.subr.mxu0 0.0
        %1090 = vmatpush1.msra.mxu0 %v936
        %1091 = vmatprep.subr.mxu0 0.0
        %1092 = vmatpush1.msra.mxu0 %v937
        %1093 = vmatprep.subr.mxu0 0.0
        %1094 = vmatpush1.msra.mxu0 %v938
        %1095 = vmatprep.subr.mxu0 0.0
        %1096 = vmatpush1.msra.mxu0 %v939
        %1097 = vmatprep.subr.mxu0 0.0
        %1098 = vmatpush1.msra.mxu0 0.0
        %1099 = vmatprep.subr.mxu0 0.0
        %1100 = vmatpush1.msra.mxu0 0.0
        %1101 = vmatprep.subr.mxu0 0.0
        %1102 = vmatpush1.msra.mxu0 0.0
        %1103 = vmatprep.subr.mxu0 0.0
        %1104 = vmatpush1.msra.mxu0 0.0
        %1105 = vmatprep.subr.mxu0 0.0
        %1106 = vmatpush1.msra.mxu0 0.0
        %1107 = vmatprep.subr.mxu0 0.0
        %1108 = vmatpush1.msra.mxu0 0.0
        %1109 = vmatprep.subr.mxu0 0.0
        %1110 = vmatpush1.msra.mxu0 0.0
        %1111 = vmatprep.subr.mxu0 0.0
        %1112 = vmatpush1.msra.mxu0 0.0
        %1113 = vmatprep.subr.mxu0 0.0
        %1114 = vmatpush1.msra.mxu0 0.0
        %1115 = vmatprep.subr.mxu0 0.0
        %1116 = vmatpush1.msra.mxu0 0.0
        %1117 = vmatprep.subr.mxu0 0.0
        %1118 = vmatpush1.msra.mxu0 0.0
        %1119 = vmatprep.subr.mxu0 0.0
        %1120 = vmatpush1.msra.mxu0 0.0
        %1121 = vmatprep.subr.mxu0 0.0
        %1122 = vmatpush1.msra.mxu0 0.0
        %1123 = vmatprep.subr.mxu0 0.0
        %1124 = vmatpush1.msra.mxu0 0.0
        %1125 = vmatprep.subr.mxu0 0.0
        %1126 = vmatpush1.msra.mxu0 0.0
        %1127 = vmatprep.subr.mxu0 0.0
        %1128 = vmatpush1.msra.mxu0 0.0
        %1129 = vmatprep.mubr.f32.mxu0 0.0
        %1130 = vmatmul.mubr.f32.gmra.mrb[0].mxu0 %v880
        %v1131 = vpop.f32.mrb[0].mxu0
        %v1132 = vadd.f32 %v1007, %v1131
        %v1133 = vpop.f32.mrb[0].mxu0
        %1134 = vmatprep.mubr.f32.mxu0 0.0
        %1135 = vmatmul.mubr.f32.gmra.mrb[0].mxu0 %v881
        %v1136 = vpop.f32.mrb[0].mxu0
        %v1137 = vadd.f32 %v1012, %v1136
        %v1138 = vpop.f32.mrb[0].mxu0
        %1139 = vmatprep.mubr.f32.mxu0 0.0
        %1140 = vmatmul.mubr.f32.gmra.mrb[0].mxu0 %v882
        %v1141 = vpop.f32.mrb[0].mxu0
        %v1142 = vadd.f32 %v1017, %v1141
        %v1143 = vpop.f32.mrb[0].mxu0
        %1144 = vmatprep.mubr.f32.mxu0 0.0
        %1145 = vmatmul.mubr.f32.gmra.mrb[0].mxu0 %v883
        %v1146 = vpop.f32.mrb[0].mxu0
        %v1147 = vadd.f32 %v1022, %v1146
        %v1148 = vpop.f32.mrb[0].mxu0
        %1149 = vmatprep.mubr.f32.mxu0 0.0
        %1150 = vmatmul.mubr.f32.gmra.mrb[0].mxu0 %v884
        %v1151 = vpop.f32.mrb[0].mxu0
        %v1152 = vadd.f32 %v1027, %v1151
        %v1153 = vpop.f32.mrb[0].mxu0
        %1154 = vmatprep.mubr.f32.mxu0 0.0
        %1155 = vmatmul.mubr.f32.gmra.mrb[0].mxu0 %v885
        %v1156 = vpop.f32.mrb[0].mxu0
        %v1157 = vadd.f32 %v1032, %v1156
        %v1158 = vpop.f32.mrb[0].mxu0
        %1159 = vmatprep.mubr.f32.mxu0 0.0
        %1160 = vmatmul.mubr.f32.gmra.mrb[0].mxu0 %v886
        %v1161 = vpop.f32.mrb[0].mxu0
        %v1162 = vadd.f32 %v1037, %v1161
        %v1163 = vpop.f32.mrb[0].mxu0
        %1164 = vmatprep.mubr.f32.mxu0 0.0
        %1165 = vmatmul.mubr.f32.gmra.mrb[0].mxu0 %v887
        %v1166 = vpop.f32.mrb[0].mxu0
        %v1167 = vadd.f32 %v1042, %v1166
        %v1168 = vpop.f32.mrb[0].mxu0
        %1169 = vmatprep.mubr.f32.mxu0 0.0
        %1170 = vmatmul.mubr.f32.gmra.mrb[0].mxu0 %v888
        %v1171 = vpop.f32.mrb[0].mxu0
        %v1172 = vadd.f32 %v1047, %v1171
        %v1173 = vpop.f32.mrb[0].mxu0
        %1174 = vmatprep.mubr.f32.mxu0 0.0
        %1175 = vmatmul.mubr.f32.gmra.mrb[0].mxu0 %v889
        %v1176 = vpop.f32.mrb[0].mxu0
        %v1177 = vadd.f32 %v1052, %v1176
        %v1178 = vpop.f32.mrb[0].mxu0
        %1179 = vmatprep.mubr.f32.mxu0 0.0
        %1180 = vmatmul.mubr.f32.gmra.mrb[0].mxu0 %v890
        %v1181 = vpop.f32.mrb[0].mxu0
        %v1182 = vadd.f32 %v1057, %v1181
        %v1183 = vpop.f32.mrb[0].mxu0
        %1184 = vmatprep.mubr.f32.mxu0 0.0
        %1185 = vmatmul.mubr.f32.gmra.mrb[0].mxu0 %v891
        %v1186 = vpop.f32.mrb[0].mxu0
        %v1187 = vadd.f32 %v1062, %v1186
        %v1188 = vpop.f32.mrb[0].mxu0
        %1189 = vdwg.mxu0
        %1190 = vmatprep.subr.mxu0 0.0
        %1191 = vmatpush1.msra.mxu0 %v807
        %1192 = vmatprep.subr.mxu0 0.0
        %1193 = vmatpush1.msra.mxu0 %v808
        %1194 = vmatprep.subr.mxu0 0.0
        %1195 = vmatpush1.msra.mxu0 %v809
        %1196 = vmatprep.subr.mxu0 0.0
        %1197 = vmatpush1.msra.mxu0 %v810
        %1198 = vmatprep.subr.mxu0 0.0
        %1199 = vmatpush1.msra.mxu0 %v811
        %1200 = vmatprep.subr.mxu0 0.0
        %1201 = vmatpush1.msra.mxu0 %v812
        %1202 = vmatprep.subr.mxu0 0.0
        %1203 = vmatpush1.msra.mxu0 %v813
        %1204 = vmatprep.subr.mxu0 0.0
        %1205 = vmatpush1.msra.mxu0 %v814
        %1206 = vmatprep.subr.mxu0 0.0
        %1207 = vmatpush1.msra.mxu0 %v815
        %1208 = vmatprep.subr.mxu0 0.0
        %1209 = vmatpush1.msra.mxu0 %v816
        %1210 = vmatprep.subr.mxu0 0.0
        %1211 = vmatpush1.msra.mxu0 %v817
        %1212 = vmatprep.subr.mxu0 0.0
        %1213 = vmatpush1.msra.mxu0 %v818
        %1214 = vmatprep.subr.mxu0 0.0
        %1215 = vmatpush1.msra.mxu0 %v819
        %1216 = vmatprep.subr.mxu0 0.0
        %1217 = vmatpush1.msra.mxu0 %v820
        %1218 = vmatprep.subr.mxu0 0.0
        %1219 = vmatpush1.msra.mxu0 %v821
        %1220 = vmatprep.subr.mxu0 0.0
        %1221 = vmatpush1.msra.mxu0 %v822
        %1222 = vmatprep.subr.mxu0 0.0
        %1223 = vmatpush1.msra.mxu0 %v823
        %1224 = vmatprep.subr.mxu0 0.0
        %1225 = vmatpush1.msra.mxu0 %v824
        %1226 = vmatprep.subr.mxu0 0.0
        %1227 = vmatpush1.msra.mxu0 %v825
        %1228 = vmatprep.subr.mxu0 0.0
        %1229 = vmatpush1.msra.mxu0 %v826
        %1230 = vmatprep.subr.mxu0 0.0
        %1231 = vmatpush1.msra.mxu0 %v827
        %1232 = vmatprep.subr.mxu0 0.0
        %1233 = vmatpush1.msra.mxu0 %v828
        %1234 = vmatprep.subr.mxu0 0.0
        %1235 = vmatpush1.msra.mxu0 %v829
        %1236 = vmatprep.subr.mxu0 0.0
        %1237 = vmatpush1.msra.mxu0 %v830
        %1238 = vmatprep.subr.mxu0 0.0
        %1239 = vmatpush1.msra.mxu0 %v831
        %1240 = vmatprep.subr.mxu0 0.0
        %1241 = vmatpush1.msra.mxu0 %v832
        %1242 = vmatprep.subr.mxu0 0.0
        %1243 = vmatpush1.msra.mxu0 %v833
        %1244 = vmatprep.subr.mxu0 0.0
        %1245 = vmatpush1.msra.mxu0 %v834
        %1246 = vmatprep.subr.mxu0 0.0
        %1247 = vmatpush1.msra.mxu0 %v835
        %1248 = vmatprep.subr.mxu0 0.0
        %1249 = vmatpush1.msra.mxu0 %v836
        %1250 = vmatprep.subr.mxu0 0.0
        %1251 = vmatpush1.msra.mxu0 %v837
        %1252 = vmatprep.subr.mxu0 0.0
        %1253 = vmatpush1.msra.mxu0 %v838
        %1254 = vmatprep.mubr.f32.mxu0 %v783
        %1255 = vmatmul.mubr.f32.gmra.mrb[0].mxu0 %v771
        %v1256 = vpop.f32.mrb[0].mxu0
        %v1257 = vadd.f32 %v1132, %v1256
        %v1258 = vpop.f32.mrb[0].mxu0
        %1259 = vmatprep.mubr.f32.mxu0 %v784
        %1260 = vmatmul.mubr.f32.gmra.mrb[0].mxu0 %v772
        %v1261 = vpop.f32.mrb[0].mxu0
        %v1262 = vadd.f32 %v1137, %v1261
        %v1263 = vpop.f32.mrb[0].mxu0
        %1264 = vmatprep.mubr.f32.mxu0 %v785
        %1265 = vmatmul.mubr.f32.gmra.mrb[0].mxu0 %v773
        %v1266 = vpop.f32.mrb[0].mxu0
        %v1267 = vadd.f32 %v1142, %v1266
        %v1268 = vpop.f32.mrb[0].mxu0
        %1269 = vmatprep.mubr.f32.mxu0 %v786
        %1270 = vmatmul.mubr.f32.gmra.mrb[0].mxu0 %v774
        %v1271 = vpop.f32.mrb[0].mxu0
        %v1272 = vadd.f32 %v1147, %v1271
        %v1273 = vpop.f32.mrb[0].mxu0
        %1274 = vmatprep.mubr.f32.mxu0 %v787
        %1275 = vmatmul.mubr.f32.gmra.mrb[0].mxu0 %v775
        %v1276 = vpop.f32.mrb[0].mxu0
        %v1277 = vadd.f32 %v1152, %v1276
        %v1278 = vpop.f32.mrb[0].mxu0
        %1279 = vmatprep.mubr.f32.mxu0 %v788
        %1280 = vmatmul.mubr.f32.gmra.mrb[0].mxu0 %v776
        %v1281 = vpop.f32.mrb[0].mxu0
        %v1282 = vadd.f32 %v1157, %v1281
        %v1283 = vpop.f32.mrb[0].mxu0
        %1284 = vmatprep.mubr.f32.mxu0 %v789
        %1285 = vmatmul.mubr.f32.gmra.mrb[0].mxu0 %v777
        %v1286 = vpop.f32.mrb[0].mxu0
        %v1287 = vadd.f32 %v1162, %v1286
        %v1288 = vpop.f32.mrb[0].mxu0
        %1289 = vmatprep.mubr.f32.mxu0 %v790
        %1290 = vmatmul.mubr.f32.gmra.mrb[0].mxu0 %v778
        %v1291 = vpop.f32.mrb[0].mxu0
        %v1292 = vadd.f32 %v1167, %v1291
        %v1293 = vpop.f32.mrb[0].mxu0
        %1294 = vmatprep.mubr.f32.mxu0 %v791
        %1295 = vmatmul.mubr.f32.gmra.mrb[0].mxu0 %v779
        %v1296 = vpop.f32.mrb[0].mxu0
        %v1297 = vadd.f32 %v1172, %v1296
        %v1298 = vpop.f32.mrb[0].mxu0
        %1299 = vmatprep.mubr.f32.mxu0 %v792
        %1300 = vmatmul.mubr.f32.gmra.mrb[0].mxu0 %v780
        %v1301 = vpop.f32.mrb[0].mxu0
        %v1302 = vadd.f32 %v1177, %v1301
        %v1303 = vpop.f32.mrb[0].mxu0
        %1304 = vmatprep.mubr.f32.mxu0 %v793
        %1305 = vmatmul.mubr.f32.gmra.mrb[0].mxu0 %v781
        %v1306 = vpop.f32.mrb[0].mxu0
        %v1307 = vadd.f32 %v1182, %v1306
        %v1308 = vpop.f32.mrb[0].mxu0
        %1309 = vmatprep.mubr.f32.mxu0 %v794
        %1310 = vmatmul.mubr.f32.gmra.mrb[0].mxu0 %v782
        %v1311 = vpop.f32.mrb[0].mxu0
        %v1312 = vadd.f32 %v1187, %v1311
        %v1313 = vpop.f32.mrb[0].mxu0
        %1314 = vdwg.mxu0
        %1315 = vmatprep.subr.mxu0 0.0
        %1316 = vmatpush1.msra.mxu0 %v839
        %1317 = vmatprep.subr.mxu0 0.0
        %1318 = vmatpush1.msra.mxu0 %v840
        %1319 = vmatprep.subr.mxu0 0.0
        %1320 = vmatpush1.msra.mxu0 %v841
        %1321 = vmatprep.subr.mxu0 0.0
        %1322 = vmatpush1.msra.mxu0 %v842
        %1323 = vmatprep.subr.mxu0 0.0
        %1324 = vmatpush1.msra.mxu0 %v843
        %1325 = vmatprep.subr.mxu0 0.0
        %1326 = vmatpush1.msra.mxu0 %v844
        %1327 = vmatprep.subr.mxu0 0.0
        %1328 = vmatpush1.msra.mxu0 %v845
        %1329 = vmatprep.subr.mxu0 0.0
        %1330 = vmatpush1.msra.mxu0 %v846
        %1331 = vmatprep.subr.mxu0 0.0
        %1332 = vmatpush1.msra.mxu0 %v847
        %1333 = vmatprep.subr.mxu0 0.0
        %1334 = vmatpush1.msra.mxu0 %v848
        %1335 = vmatprep.subr.mxu0 0.0
        %1336 = vmatpush1.msra.mxu0 %v849
        %1337 = vmatprep.subr.mxu0 0.0
        %1338 = vmatpush1.msra.mxu0 %v850
        %1339 = vmatprep.subr.mxu0 0.0
        %1340 = vmatpush1.msra.mxu0 %v851
        %1341 = vmatprep.subr.mxu0 0.0
        %1342 = vmatpush1.msra.mxu0 %v852
        %1343 = vmatprep.subr.mxu0 0.0
        %1344 = vmatpush1.msra.mxu0 %v853
        %1345 = vmatprep.subr.mxu0 0.0
        %1346 = vmatpush1.msra.mxu0 %v854
        %1347 = vmatprep.subr.mxu0 0.0
        %1348 = vmatpush1.msra.mxu0 0.0
        %1349 = vmatprep.subr.mxu0 0.0
        %1350 = vmatpush1.msra.mxu0 0.0
        %1351 = vmatprep.subr.mxu0 0.0
        %1352 = vmatpush1.msra.mxu0 0.0
        %1353 = vmatprep.subr.mxu0 0.0
        %1354 = vmatpush1.msra.mxu0 0.0
        %1355 = vmatprep.subr.mxu0 0.0
        %1356 = vmatpush1.msra.mxu0 0.0
        %1357 = vmatprep.subr.mxu0 0.0
        %1358 = vmatpush1.msra.mxu0 0.0
        %1359 = vmatprep.subr.mxu0 0.0
        %1360 = vmatpush1.msra.mxu0 0.0
        %1361 = vmatprep.subr.mxu0 0.0
        %1362 = vmatpush1.msra.mxu0 0.0
        %1363 = vmatprep.subr.mxu0 0.0
        %1364 = vmatpush1.msra.mxu0 0.0
        %1365 = vmatprep.subr.mxu0 0.0
        %1366 = vmatpush1.msra.mxu0 0.0
        %1367 = vmatprep.subr.mxu0 0.0
        %1368 = vmatpush1.msra.mxu0 0.0
        %1369 = vmatprep.subr.mxu0 0.0
        %1370 = vmatpush1.msra.mxu0 0.0
        %1371 = vmatprep.subr.mxu0 0.0
        %1372 = vmatpush1.msra.mxu0 0.0
        %1373 = vmatprep.subr.mxu0 0.0
        %1374 = vmatpush1.msra.mxu0 0.0
        %1375 = vmatprep.subr.mxu0 0.0
        %1376 = vmatpush1.msra.mxu0 0.0
        %1377 = vmatprep.subr.mxu0 0.0
        %1378 = vmatpush1.msra.mxu0 0.0
        %1379 = vmatprep.mubr.f32.mxu0 0.0
        %1380 = vmatmul.mubr.f32.gmra.mrb[0].mxu0 %v795
        %v1381 = vpop.f32.mrb[0].mxu0
        %v1382 = vadd.f32 %v1257, %v1381
        %v1383 = vpop.f32.mrb[0].mxu0
        %1384 = vmatprep.mubr.f32.mxu0 0.0
        %1385 = vmatmul.mubr.f32.gmra.mrb[0].mxu0 %v796
        %v1386 = vpop.f32.mrb[0].mxu0
        %v1387 = vadd.f32 %v1262, %v1386
        %v1388 = vpop.f32.mrb[0].mxu0
        %1389 = vmatprep.mubr.f32.mxu0 0.0
        %1390 = vmatmul.mubr.f32.gmra.mrb[0].mxu0 %v797
        %v1391 = vpop.f32.mrb[0].mxu0
        %v1392 = vadd.f32 %v1267, %v1391
        %v1393 = vpop.f32.mrb[0].mxu0
        %1394 = vmatprep.mubr.f32.mxu0 0.0
        %1395 = vmatmul.mubr.f32.gmra.mrb[0].mxu0 %v798
        %v1396 = vpop.f32.mrb[0].mxu0
        %v1397 = vadd.f32 %v1272, %v1396
        %v1398 = vpop.f32.mrb[0].mxu0
        %1399 = vmatprep.mubr.f32.mxu0 0.0
        %1400 = vmatmul.mubr.f32.gmra.mrb[0].mxu0 %v799
        %v1401 = vpop.f32.mrb[0].mxu0
        %v1402 = vadd.f32 %v1277, %v1401
        %v1403 = vpop.f32.mrb[0].mxu0
        %1404 = vmatprep.mubr.f32.mxu0 0.0
        %1405 = vmatmul.mubr.f32.gmra.mrb[0].mxu0 %v800
        %v1406 = vpop.f32.mrb[0].mxu0
        %v1407 = vadd.f32 %v1282, %v1406
        %v1408 = vpop.f32.mrb[0].mxu0
        %1409 = vmatprep.mubr.f32.mxu0 0.0
        %1410 = vmatmul.mubr.f32.gmra.mrb[0].mxu0 %v801
        %v1411 = vpop.f32.mrb[0].mxu0
        %v1412 = vadd.f32 %v1287, %v1411
        %v1413 = vpop.f32.mrb[0].mxu0
        %1414 = vmatprep.mubr.f32.mxu0 0.0
        %1415 = vmatmul.mubr.f32.gmra.mrb[0].mxu0 %v802
        %v1416 = vpop.f32.mrb[0].mxu0
        %v1417 = vadd.f32 %v1292, %v1416
        %v1418 = vpop.f32.mrb[0].mxu0
        %1419 = vmatprep.mubr.f32.mxu0 0.0
        %1420 = vmatmul.mubr.f32.gmra.mrb[0].mxu0 %v803
        %v1421 = vpop.f32.mrb[0].mxu0
        %v1422 = vadd.f32 %v1297, %v1421
        %v1423 = vpop.f32.mrb[0].mxu0
        %1424 = vmatprep.mubr.f32.mxu0 0.0
        %1425 = vmatmul.mubr.f32.gmra.mrb[0].mxu0 %v804
        %v1426 = vpop.f32.mrb[0].mxu0
        %v1427 = vadd.f32 %v1302, %v1426
        %v1428 = vpop.f32.mrb[0].mxu0
        %1429 = vmatprep.mubr.f32.mxu0 0.0
        %1430 = vmatmul.mubr.f32.gmra.mrb[0].mxu0 %v805
        %v1431 = vpop.f32.mrb[0].mxu0
        %v1432 = vadd.f32 %v1307, %v1431
        %v1433 = vpop.f32.mrb[0].mxu0
        %1434 = vmatprep.mubr.f32.mxu0 0.0
        %1435 = vmatmul.mubr.f32.gmra.mrb[0].mxu0 %v806
        %v1436 = vpop.f32.mrb[0].mxu0
        %v1437 = vadd.f32 %v1312, %v1436
        %v1438 = vpop.f32.mrb[0].mxu0
        %1439 = vdwg.mxu0
        %v1440 = vld [vmem:[%s728] sm:$0xff]
        %v1441 = vld [vmem:[%s728 + $0x8] sm:$0xff]
        %v1442 = vld [vmem:[%s728 + $0x18] sm:$0xff]
        %v1443 = vld [vmem:[%s728 + $0x20] sm:$0xff]
        %v1444 = vld [vmem:[%s728 + $0x30] sm:$0xff]
        %v1445 = vld [vmem:[%s728 + $0x38] sm:$0xff]
        %v1446 = vld [vmem:[%s728 + $0x48] sm:$0xff]
        %v1447 = vld [vmem:[%s728 + $0x50] sm:$0xff]
        %v1448 = vld [vmem:[%s728 + $0x60] sm:$0xff]
        %v1449 = vld [vmem:[%s728 + $0x68] sm:$0xff]
        %v1450 = vld [vmem:[%s728 + $0x78] sm:$0xff]
        %v1451 = vld [vmem:[%s728 + $0x80] sm:$0xff]
        %v1452 = vld [vmem:[%s728 + $0x1] sm:$0xff]
        %v1453 = vld [vmem:[%s728 + $0x9] sm:$0xff]
        %v1454 = vld [vmem:[%s728 + $0x19] sm:$0xff]
        %v1455 = vld [vmem:[%s728 + $0x21] sm:$0xff]
        %v1456 = vld [vmem:[%s728 + $0x31] sm:$0xff]
        %v1457 = vld [vmem:[%s728 + $0x39] sm:$0xff]
        %v1458 = vld [vmem:[%s728 + $0x49] sm:$0xff]
        %v1459 = vld [vmem:[%s728 + $0x51] sm:$0xff]
        %v1460 = vld [vmem:[%s728 + $0x61] sm:$0xff]
        %v1461 = vld [vmem:[%s728 + $0x69] sm:$0xff]
        %v1462 = vld [vmem:[%s728 + $0x79] sm:$0xff]
        %v1463 = vld [vmem:[%s728 + $0x81] sm:$0xff]
        %v1464 = vld [vmem:[%s728 + $0x2] sm:$0xff]
        %v1465 = vld [vmem:[%s728 + $0xa] sm:$0xff]
        %v1466 = vld [vmem:[%s728 + $0x1a] sm:$0xff]
        %v1467 = vld [vmem:[%s728 + $0x22] sm:$0xff]
        %v1468 = vld [vmem:[%s728 + $0x32] sm:$0xff]
        %v1469 = vld [vmem:[%s728 + $0x3a] sm:$0xff]
        %v1470 = vld [vmem:[%s728 + $0x4a] sm:$0xff]
        %v1471 = vld [vmem:[%s728 + $0x52] sm:$0xff]
        %v1472 = vld [vmem:[%s728 + $0x62] sm:$0xff]
        %v1473 = vld [vmem:[%s728 + $0x6a] sm:$0xff]
        %v1474 = vld [vmem:[%s728 + $0x7a] sm:$0xff]
        %v1475 = vld [vmem:[%s728 + $0x82] sm:$0xff]
        %v1476 = vld [vmem:[#allocation10 + $0x300] sm:$0xff]
        %v1477 = vld [vmem:[#allocation10 + $0x308] sm:$0xff]
        %v1478 = vld [vmem:[#allocation10 + $0x310] sm:$0xff]
        %v1479 = vld [vmem:[#allocation10 + $0x318] sm:$0xff]
        %v1480 = vld [vmem:[#allocation10 + $0x320] sm:$0xff]
        %v1481 = vld [vmem:[#allocation10 + $0x328] sm:$0xff]
        %v1482 = vld [vmem:[#allocation10 + $0x330] sm:$0xff]
        %v1483 = vld [vmem:[#allocation10 + $0x338] sm:$0xff]
        %v1484 = vld [vmem:[#allocation10 + $0x340] sm:$0xff]
        %v1485 = vld [vmem:[#allocation10 + $0x348] sm:$0xff]
        %v1486 = vld [vmem:[#allocation10 + $0x350] sm:$0xff]
        %v1487 = vld [vmem:[#allocation10 + $0x358] sm:$0xff]
        %v1488 = vld [vmem:[#allocation10 + $0x360] sm:$0xff]
        %v1489 = vld [vmem:[#allocation10 + $0x368] sm:$0xff]
        %v1490 = vld [vmem:[#allocation10 + $0x370] sm:$0xff]
        %v1491 = vld [vmem:[#allocation10 + $0x378] sm:$0xff]
        %v1492 = vld [vmem:[#allocation10 + $0x380] sm:$0xff]
        %v1493 = vld [vmem:[#allocation10 + $0x388] sm:$0xff]
        %v1494 = vld [vmem:[#allocation10 + $0x390] sm:$0xff]
        %v1495 = vld [vmem:[#allocation10 + $0x398] sm:$0xff]
        %v1496 = vld [vmem:[#allocation10 + $0x3a0] sm:$0xff]
        %v1497 = vld [vmem:[#allocation10 + $0x3a8] sm:$0xff]
        %v1498 = vld [vmem:[#allocation10 + $0x3b0] sm:$0xff]
        %v1499 = vld [vmem:[#allocation10 + $0x3b8] sm:$0xff]
        %v1500 = vld [vmem:[#allocation10 + $0x3c0] sm:$0xff]
        %v1501 = vld [vmem:[#allocation10 + $0x3c8] sm:$0xff]
        %v1502 = vld [vmem:[#allocation10 + $0x3d0] sm:$0xff]
        %v1503 = vld [vmem:[#allocation10 + $0x3d8] sm:$0xff]
        %v1504 = vld [vmem:[#allocation10 + $0x3e0] sm:$0xff]
        %v1505 = vld [vmem:[#allocation10 + $0x3e8] sm:$0xff]
        %v1506 = vld [vmem:[#allocation10 + $0x3f0] sm:$0xff]
        %v1507 = vld [vmem:[#allocation10 + $0x3f8] sm:$0xff]
        %v1508 = vld [vmem:[#allocation10 + $0x400] sm:$0xff]
        %v1509 = vld [vmem:[#allocation10 + $0x408] sm:$0xff]
        %v1510 = vld [vmem:[#allocation10 + $0x410] sm:$0xff]
        %v1511 = vld [vmem:[#allocation10 + $0x418] sm:$0xff]
        %v1512 = vld [vmem:[#allocation10 + $0x420] sm:$0xff]
        %v1513 = vld [vmem:[#allocation10 + $0x428] sm:$0xff]
        %v1514 = vld [vmem:[#allocation10 + $0x430] sm:$0xff]
        %v1515 = vld [vmem:[#allocation10 + $0x438] sm:$0xff]
        %v1516 = vld [vmem:[#allocation10 + $0x440] sm:$0xff]
        %v1517 = vld [vmem:[#allocation10 + $0x448] sm:$0xff]
        %v1518 = vld [vmem:[#allocation10 + $0x450] sm:$0xff]
        %v1519 = vld [vmem:[#allocation10 + $0x458] sm:$0xff]
        %v1520 = vld [vmem:[#allocation10 + $0x460] sm:$0xff]
        %v1521 = vld [vmem:[#allocation10 + $0x468] sm:$0xff]
        %v1522 = vld [vmem:[#allocation10 + $0x470] sm:$0xff]
        %v1523 = vld [vmem:[#allocation10 + $0x478] sm:$0xff]
        %1524 = vmatprep.subr.mxu0 0.0
        %1525 = vmatpush1.msra.mxu0 %v1476
        %1526 = vmatprep.subr.mxu0 0.0
        %1527 = vmatpush1.msra.mxu0 %v1477
        %1528 = vmatprep.subr.mxu0 0.0
        %1529 = vmatpush1.msra.mxu0 %v1478
        %1530 = vmatprep.subr.mxu0 0.0
        %1531 = vmatpush1.msra.mxu0 %v1479
        %1532 = vmatprep.subr.mxu0 0.0
        %1533 = vmatpush1.msra.mxu0 %v1480
        %1534 = vmatprep.subr.mxu0 0.0
        %1535 = vmatpush1.msra.mxu0 %v1481
        %1536 = vmatprep.subr.mxu0 0.0
        %1537 = vmatpush1.msra.mxu0 %v1482
        %1538 = vmatprep.subr.mxu0 0.0
        %1539 = vmatpush1.msra.mxu0 %v1483
        %1540 = vmatprep.subr.mxu0 0.0
        %1541 = vmatpush1.msra.mxu0 %v1484
        %1542 = vmatprep.subr.mxu0 0.0
        %1543 = vmatpush1.msra.mxu0 %v1485
        %1544 = vmatprep.subr.mxu0 0.0
        %1545 = vmatpush1.msra.mxu0 %v1486
        %1546 = vmatprep.subr.mxu0 0.0
        %1547 = vmatpush1.msra.mxu0 %v1487
        %1548 = vmatprep.subr.mxu0 0.0
        %1549 = vmatpush1.msra.mxu0 %v1488
        %1550 = vmatprep.subr.mxu0 0.0
        %1551 = vmatpush1.msra.mxu0 %v1489
        %1552 = vmatprep.subr.mxu0 0.0
        %1553 = vmatpush1.msra.mxu0 %v1490
        %1554 = vmatprep.subr.mxu0 0.0
        %1555 = vmatpush1.msra.mxu0 %v1491
        %1556 = vmatprep.subr.mxu0 0.0
        %1557 = vmatpush1.msra.mxu0 %v1492
        %1558 = vmatprep.subr.mxu0 0.0
        %1559 = vmatpush1.msra.mxu0 %v1493
        %1560 = vmatprep.subr.mxu0 0.0
        %1561 = vmatpush1.msra.mxu0 %v1494
        %1562 = vmatprep.subr.mxu0 0.0
        %1563 = vmatpush1.msra.mxu0 %v1495
        %1564 = vmatprep.subr.mxu0 0.0
        %1565 = vmatpush1.msra.mxu0 %v1496
        %1566 = vmatprep.subr.mxu0 0.0
        %1567 = vmatpush1.msra.mxu0 %v1497
        %1568 = vmatprep.subr.mxu0 0.0
        %1569 = vmatpush1.msra.mxu0 %v1498
        %1570 = vmatprep.subr.mxu0 0.0
        %1571 = vmatpush1.msra.mxu0 %v1499
        %1572 = vmatprep.subr.mxu0 0.0
        %1573 = vmatpush1.msra.mxu0 %v1500
        %1574 = vmatprep.subr.mxu0 0.0
        %1575 = vmatpush1.msra.mxu0 %v1501
        %1576 = vmatprep.subr.mxu0 0.0
        %1577 = vmatpush1.msra.mxu0 %v1502
        %1578 = vmatprep.subr.mxu0 0.0
        %1579 = vmatpush1.msra.mxu0 %v1503
        %1580 = vmatprep.subr.mxu0 0.0
        %1581 = vmatpush1.msra.mxu0 %v1504
        %1582 = vmatprep.subr.mxu0 0.0
        %1583 = vmatpush1.msra.mxu0 %v1505
        %1584 = vmatprep.subr.mxu0 0.0
        %1585 = vmatpush1.msra.mxu0 %v1506
        %1586 = vmatprep.subr.mxu0 0.0
        %1587 = vmatpush1.msra.mxu0 %v1507
        %1588 = vmatprep.mubr.f32.mxu0 %v1452
        %1589 = vmatmul.mubr.f32.gmra.mrb[0].mxu0 %v1440
        %v1590 = vpop.f32.mrb[0].mxu0
        %v1591 = vadd.f32 0.0, %v1590
        %v1592 = vpop.f32.mrb[0].mxu0
        %1593 = vmatprep.mubr.f32.mxu0 %v1453
        %1594 = vmatmul.mubr.f32.gmra.mrb[0].mxu0 %v1441
        %v1595 = vpop.f32.mrb[0].mxu0
        %v1596 = vadd.f32 0.0, %v1595
        %v1597 = vpop.f32.mrb[0].mxu0
        %1598 = vmatprep.mubr.f32.mxu0 %v1454
        %1599 = vmatmul.mubr.f32.gmra.mrb[0].mxu0 %v1442
        %v1600 = vpop.f32.mrb[0].mxu0
        %v1601 = vadd.f32 0.0, %v1600
        %v1602 = vpop.f32.mrb[0].mxu0
        %1603 = vmatprep.mubr.f32.mxu0 %v1455
        %1604 = vmatmul.mubr.f32.gmra.mrb[0].mxu0 %v1443
        %v1605 = vpop.f32.mrb[0].mxu0
        %v1606 = vadd.f32 0.0, %v1605
        %v1607 = vpop.f32.mrb[0].mxu0
        %1608 = vmatprep.mubr.f32.mxu0 %v1456
        %1609 = vmatmul.mubr.f32.gmra.mrb[0].mxu0 %v1444
        %v1610 = vpop.f32.mrb[0].mxu0
        %v1611 = vadd.f32 0.0, %v1610
        %v1612 = vpop.f32.mrb[0].mxu0
        %1613 = vmatprep.mubr.f32.mxu0 %v1457
        %1614 = vmatmul.mubr.f32.gmra.mrb[0].mxu0 %v1445
        %v1615 = vpop.f32.mrb[0].mxu0
        %v1616 = vadd.f32 0.0, %v1615
        %v1617 = vpop.f32.mrb[0].mxu0
        %1618 = vmatprep.mubr.f32.mxu0 %v1458
        %1619 = vmatmul.mubr.f32.gmra.mrb[0].mxu0 %v1446
        %v1620 = vpop.f32.mrb[0].mxu0
        %v1621 = vadd.f32 0.0, %v1620
        %v1622 = vpop.f32.mrb[0].mxu0
        %1623 = vmatprep.mubr.f32.mxu0 %v1459
        %1624 = vmatmul.mubr.f32.gmra.mrb[0].mxu0 %v1447
        %v1625 = vpop.f32.mrb[0].mxu0
        %v1626 = vadd.f32 0.0, %v1625
        %v1627 = vpop.f32.mrb[0].mxu0
        %1628 = vmatprep.mubr.f32.mxu0 %v1460
        %1629 = vmatmul.mubr.f32.gmra.mrb[0].mxu0 %v1448
        %v1630 = vpop.f32.mrb[0].mxu0
        %v1631 = vadd.f32 0.0, %v1630
        %v1632 = vpop.f32.mrb[0].mxu0
        %1633 = vmatprep.mubr.f32.mxu0 %v1461
        %1634 = vmatmul.mubr.f32.gmra.mrb[0].mxu0 %v1449
        %v1635 = vpop.f32.mrb[0].mxu0
        %v1636 = vadd.f32 0.0, %v1635
        %v1637 = vpop.f32.mrb[0].mxu0
        %1638 = vmatprep.mubr.f32.mxu0 %v1462
        %1639 = vmatmul.mubr.f32.gmra.mrb[0].mxu0 %v1450
        %v1640 = vpop.f32.mrb[0].mxu0
        %v1641 = vadd.f32 0.0, %v1640
        %v1642 = vpop.f32.mrb[0].mxu0
        %1643 = vmatprep.mubr.f32.mxu0 %v1463
        %1644 = vmatmul.mubr.f32.gmra.mrb[0].mxu0 %v1451
        %v1645 = vpop.f32.mrb[0].mxu0
        %v1646 = vadd.f32 0.0, %v1645
        %v1647 = vpop.f32.mrb[0].mxu0
        %1648 = vdwg.mxu0
        %1649 = vmatprep.subr.mxu0 0.0
        %1650 = vmatpush1.msra.mxu0 %v1508
        %1651 = vmatprep.subr.mxu0 0.0
        %1652 = vmatpush1.msra.mxu0 %v1509
        %1653 = vmatprep.subr.mxu0 0.0
        %1654 = vmatpush1.msra.mxu0 %v1510
        %1655 = vmatprep.subr.mxu0 0.0
        %1656 = vmatpush1.msra.mxu0 %v1511
        %1657 = vmatprep.subr.mxu0 0.0
        %1658 = vmatpush1.msra.mxu0 %v1512
        %1659 = vmatprep.subr.mxu0 0.0
        %1660 = vmatpush1.msra.mxu0 %v1513
        %1661 = vmatprep.subr.mxu0 0.0
        %1662 = vmatpush1.msra.mxu0 %v1514
        %1663 = vmatprep.subr.mxu0 0.0
        %1664 = vmatpush1.msra.mxu0 %v1515
        %1665 = vmatprep.subr.mxu0 0.0
        %1666 = vmatpush1.msra.mxu0 %v1516
        %1667 = vmatprep.subr.mxu0 0.0
        %1668 = vmatpush1.msra.mxu0 %v1517
        %1669 = vmatprep.subr.mxu0 0.0
        %1670 = vmatpush1.msra.mxu0 %v1518
        %1671 = vmatprep.subr.mxu0 0.0
        %1672 = vmatpush1.msra.mxu0 %v1519
        %1673 = vmatprep.subr.mxu0 0.0
        %1674 = vmatpush1.msra.mxu0 %v1520
        %1675 = vmatprep.subr.mxu0 0.0
        %1676 = vmatpush1.msra.mxu0 %v1521
        %1677 = vmatprep.subr.mxu0 0.0
        %1678 = vmatpush1.msra.mxu0 %v1522
        %1679 = vmatprep.subr.mxu0 0.0
        %1680 = vmatpush1.msra.mxu0 %v1523
        %1681 = vmatprep.subr.mxu0 0.0
        %1682 = vmatpush1.msra.mxu0 0.0
        %1683 = vmatprep.subr.mxu0 0.0
        %1684 = vmatpush1.msra.mxu0 0.0
        %1685 = vmatprep.subr.mxu0 0.0
        %1686 = vmatpush1.msra.mxu0 0.0
        %1687 = vmatprep.subr.mxu0 0.0
        %1688 = vmatpush1.msra.mxu0 0.0
        %1689 = vmatprep.subr.mxu0 0.0
        %1690 = vmatpush1.msra.mxu0 0.0
        %1691 = vmatprep.subr.mxu0 0.0
        %1692 = vmatpush1.msra.mxu0 0.0
        %1693 = vmatprep.subr.mxu0 0.0
        %1694 = vmatpush1.msra.mxu0 0.0
        %1695 = vmatprep.subr.mxu0 0.0
        %1696 = vmatpush1.msra.mxu0 0.0
        %1697 = vmatprep.subr.mxu0 0.0
        %1698 = vmatpush1.msra.mxu0 0.0
        %1699 = vmatprep.subr.mxu0 0.0
        %1700 = vmatpush1.msra.mxu0 0.0
        %1701 = vmatprep.subr.mxu0 0.0
        %1702 = vmatpush1.msra.mxu0 0.0
        %1703 = vmatprep.subr.mxu0 0.0
        %1704 = vmatpush1.msra.mxu0 0.0
        %1705 = vmatprep.subr.mxu0 0.0
        %1706 = vmatpush1.msra.mxu0 0.0
        %1707 = vmatprep.subr.mxu0 0.0
        %1708 = vmatpush1.msra.mxu0 0.0
        %1709 = vmatprep.subr.mxu0 0.0
        %1710 = vmatpush1.msra.mxu0 0.0
        %1711 = vmatprep.subr.mxu0 0.0
        %1712 = vmatpush1.msra.mxu0 0.0
        %1713 = vmatprep.mubr.f32.mxu0 0.0
        %1714 = vmatmul.mubr.f32.gmra.mrb[0].mxu0 %v1464
        %v1715 = vpop.f32.mrb[0].mxu0
        %v1716 = vadd.f32 %v1591, %v1715
        %v1717 = vpop.f32.mrb[0].mxu0
        %1718 = vmatprep.mubr.f32.mxu0 0.0
        %1719 = vmatmul.mubr.f32.gmra.mrb[0].mxu0 %v1465
        %v1720 = vpop.f32.mrb[0].mxu0
        %v1721 = vadd.f32 %v1596, %v1720
        %v1722 = vpop.f32.mrb[0].mxu0
        %1723 = vmatprep.mubr.f32.mxu0 0.0
        %1724 = vmatmul.mubr.f32.gmra.mrb[0].mxu0 %v1466
        %v1725 = vpop.f32.mrb[0].mxu0
        %v1726 = vadd.f32 %v1601, %v1725
        %v1727 = vpop.f32.mrb[0].mxu0
        %1728 = vmatprep.mubr.f32.mxu0 0.0
        %1729 = vmatmul.mubr.f32.gmra.mrb[0].mxu0 %v1467
        %v1730 = vpop.f32.mrb[0].mxu0
        %v1731 = vadd.f32 %v1606, %v1730
        %v1732 = vpop.f32.mrb[0].mxu0
        %1733 = vmatprep.mubr.f32.mxu0 0.0
        %1734 = vmatmul.mubr.f32.gmra.mrb[0].mxu0 %v1468
        %v1735 = vpop.f32.mrb[0].mxu0
        %v1736 = vadd.f32 %v1611, %v1735
        %v1737 = vpop.f32.mrb[0].mxu0
        %1738 = vmatprep.mubr.f32.mxu0 0.0
        %1739 = vmatmul.mubr.f32.gmra.mrb[0].mxu0 %v1469
        %v1740 = vpop.f32.mrb[0].mxu0
        %v1741 = vadd.f32 %v1616, %v1740
        %v1742 = vpop.f32.mrb[0].mxu0
        %1743 = vmatprep.mubr.f32.mxu0 0.0
        %1744 = vmatmul.mubr.f32.gmra.mrb[0].mxu0 %v1470
        %v1745 = vpop.f32.mrb[0].mxu0
        %v1746 = vadd.f32 %v1621, %v1745
        %v1747 = vpop.f32.mrb[0].mxu0
        %1748 = vmatprep.mubr.f32.mxu0 0.0
        %1749 = vmatmul.mubr.f32.gmra.mrb[0].mxu0 %v1471
        %v1750 = vpop.f32.mrb[0].mxu0
        %v1751 = vadd.f32 %v1626, %v1750
        %v1752 = vpop.f32.mrb[0].mxu0
        %1753 = vmatprep.mubr.f32.mxu0 0.0
        %1754 = vmatmul.mubr.f32.gmra.mrb[0].mxu0 %v1472
        %v1755 = vpop.f32.mrb[0].mxu0
        %v1756 = vadd.f32 %v1631, %v1755
        %v1757 = vpop.f32.mrb[0].mxu0
        %1758 = vmatprep.mubr.f32.mxu0 0.0
        %1759 = vmatmul.mubr.f32.gmra.mrb[0].mxu0 %v1473
        %v1760 = vpop.f32.mrb[0].mxu0
        %v1761 = vadd.f32 %v1636, %v1760
        %v1762 = vpop.f32.mrb[0].mxu0
        %1763 = vmatprep.mubr.f32.mxu0 0.0
        %1764 = vmatmul.mubr.f32.gmra.mrb[0].mxu0 %v1474
        %v1765 = vpop.f32.mrb[0].mxu0
        %v1766 = vadd.f32 %v1641, %v1765
        %v1767 = vpop.f32.mrb[0].mxu0
        %1768 = vmatprep.mubr.f32.mxu0 0.0
        %1769 = vmatmul.mubr.f32.gmra.mrb[0].mxu0 %v1475
        %v1770 = vpop.f32.mrb[0].mxu0
        %v1771 = vadd.f32 %v1646, %v1770
        %v1772 = vpop.f32.mrb[0].mxu0
        %1773 = vdwg.mxu0
        %v1774 = vadd.f32 %v1382, %v1716
        %v1775 = vadd.f32 %v1387, %v1721
        %v1776 = vadd.f32 %v1392, %v1726
        %v1777 = vadd.f32 %v1397, %v1731
        %v1778 = vadd.f32 %v1402, %v1736
        %v1779 = vadd.f32 %v1407, %v1741
        %v1780 = vadd.f32 %v1412, %v1746
        %v1781 = vadd.f32 %v1417, %v1751
        %v1782 = vadd.f32 %v1422, %v1756
        %v1783 = vadd.f32 %v1427, %v1761
        %v1784 = vadd.f32 %v1432, %v1766
        %v1785 = vadd.f32 %v1437, %v1771
        %v1787 = vlaneseq
        %v1788 = vshrl.u32 %v1787, 7
        %v1789 = vsub.s32 0, %v1788
        %v1790 = vrot.slane %v676, %v1789
        %v1792 = vmul.f32 %v1774, %v1790
        %v1793 = vmul.f32 %v1775, %v1790
        %v1794 = vmul.f32 %v1776, %v1790
        %v1795 = vmul.f32 %v1777, %v1790
        %v1796 = vmul.f32 %v1778, %v1790
        %v1797 = vmul.f32 %v1779, %v1790
        %v1798 = vmul.f32 %v1780, %v1790
        %v1799 = vmul.f32 %v1781, %v1790
        %v1800 = vmul.f32 %v1782, %v1790
        %v1801 = vmul.f32 %v1783, %v1790
        %v1802 = vmul.f32 %v1784, %v1790
        %v1803 = vmul.f32 %v1785, %v1790
        %v1805 = vlaneseq
        %v1806 = vshrl.u32 %v1805, 7
        %v1807 = vsub.s32 0, %v1806
        %v1808 = vrot.slane %v770, %v1807
        %v1810 = vadd.f32 %v1792, %v1808
        %v1811 = vadd.f32 %v1793, %v1808
        %v1812 = vadd.f32 %v1794, %v1808
        %v1813 = vadd.f32 %v1795, %v1808
        %v1814 = vadd.f32 %v1796, %v1808
        %v1815 = vadd.f32 %v1797, %v1808
        %v1816 = vadd.f32 %v1798, %v1808
        %v1817 = vadd.f32 %v1799, %v1808
        %v1818 = vadd.f32 %v1800, %v1808
        %v1819 = vadd.f32 %v1801, %v1808
        %v1820 = vadd.f32 %v1802, %v1808
        %v1821 = vadd.f32 %v1803, %v1808
        %vm1822 = vcmp.ge.f32.partialorder %v1810, 0.0
        %vm1823 = vcmp.ge.f32.partialorder %v1811, 0.0
        %vm1824 = vcmp.ge.f32.partialorder %v1812, 0.0
        %vm1825 = vcmp.ge.f32.partialorder %v1813, 0.0
        %vm1826 = vcmp.ge.f32.partialorder %v1814, 0.0
        %vm1827 = vcmp.ge.f32.partialorder %v1815, 0.0
        %vm1828 = vcmp.ge.f32.partialorder %v1816, 0.0
        %vm1829 = vcmp.ge.f32.partialorder %v1817, 0.0
        %vm1830 = vcmp.ge.f32.partialorder %v1818, 0.0
        %vm1831 = vcmp.ge.f32.partialorder %v1819, 0.0
        %vm1832 = vcmp.ge.f32.partialorder %v1820, 0.0
        %vm1833 = vcmp.ge.f32.partialorder %v1821, 0.0
        %v1834 = vmul.f32 %v1810, 0.2
        %v1835 = vmul.f32 %v1811, 0.2
        %v1836 = vmul.f32 %v1812, 0.2
        %v1837 = vmul.f32 %v1813, 0.2
        %v1838 = vmul.f32 %v1814, 0.2
        %v1839 = vmul.f32 %v1815, 0.2
        %v1840 = vmul.f32 %v1816, 0.2
        %v1841 = vmul.f32 %v1817, 0.2
        %v1842 = vmul.f32 %v1818, 0.2
        %v1843 = vmul.f32 %v1819, 0.2
        %v1844 = vmul.f32 %v1820, 0.2
        %v1845 = vmul.f32 %v1821, 0.2
        %v1846 = vsel %vm1822, %v1810, %v1834
        %v1847 = vsel %vm1823, %v1811, %v1835
        %v1848 = vsel %vm1824, %v1812, %v1836
        %v1849 = vsel %vm1825, %v1813, %v1837
        %v1850 = vsel %vm1826, %v1814, %v1838
        %v1851 = vsel %vm1827, %v1815, %v1839
        %v1852 = vsel %vm1828, %v1816, %v1840
        %v1853 = vsel %vm1829, %v1817, %v1841
        %v1854 = vsel %vm1830, %v1818, %v1842
        %v1855 = vsel %vm1831, %v1819, %v1843
        %v1856 = vsel %vm1832, %v1820, %v1844
        %v1857 = vsel %vm1833, %v1821, %v1845
        %1858 = vst [vmem:[#allocation3] sm:$0x1] 0.0
        %1859 = vst [vmem:[#allocation3 + $0x18] sm:$0x1] 0.0
        %1860 = vst [vmem:[#allocation3 + $0x30] sm:$0x1] 0.0
        %1861 = vst [vmem:[#allocation3 + $0x48] sm:$0x1] 0.0
        %1862 = vst [vmem:[#allocation3 + $0x60] sm:$0x1] 0.0
        %1863 = vst [vmem:[#allocation3 + $0x78] sm:$0x1] 0.0
        %1864 = vst [vmem:[#allocation3 + $0x11] sm:$0x1] 0.0
        %1865 = vst [vmem:[#allocation3 + $0x29] sm:$0x1] 0.0
        %1866 = vst [vmem:[#allocation3 + $0x41] sm:$0x1] 0.0
        %1867 = vst [vmem:[#allocation3 + $0x59] sm:$0x1] 0.0
        %1868 = vst [vmem:[#allocation3 + $0x71] sm:$0x1] 0.0
        %1869 = vst [vmem:[#allocation3 + $0x89] sm:$0x1] 0.0
        %v1871 = vlaneseq
        %v1872 = vshrl.u32 %v1871, 7
        %v1873 = vsub.s32 0, %v1872
        %v1874 = vrot.slane %v675, %v1873
        %v1876 = vmul.f32 %v1846, %v1874
        %v1877 = vmul.f32 %v1847, %v1874
        %v1878 = vmul.f32 %v1848, %v1874
        %v1879 = vmul.f32 %v1849, %v1874
        %v1880 = vmul.f32 %v1850, %v1874
        %v1881 = vmul.f32 %v1851, %v1874
        %v1882 = vmul.f32 %v1852, %v1874
        %v1883 = vmul.f32 %v1853, %v1874
        %v1884 = vmul.f32 %v1854, %v1874
        %v1885 = vmul.f32 %v1855, %v1874
        %v1886 = vmul.f32 %v1856, %v1874
        %v1887 = vmul.f32 %v1857, %v1874
        %1888 = vst [vmem:[#allocation3 + $0x1] sm:$0xff] %v1876
        %1889 = vst [vmem:[#allocation3 + $0x9] sm:$0xff] %v1877
        %1890 = vst [vmem:[#allocation3 + $0x19] sm:$0xff] %v1878
        %1891 = vst [vmem:[#allocation3 + $0x21] sm:$0xff] %v1879
        %1892 = vst [vmem:[#allocation3 + $0x31] sm:$0xff] %v1880
        %1893 = vst [vmem:[#allocation3 + $0x39] sm:$0xff] %v1881
        %1894 = vst [vmem:[#allocation3 + $0x49] sm:$0xff] %v1882
        %1895 = vst [vmem:[#allocation3 + $0x51] sm:$0xff] %v1883
        %1896 = vst [vmem:[#allocation3 + $0x61] sm:$0xff] %v1884
        %1897 = vst [vmem:[#allocation3 + $0x69] sm:$0xff] %v1885
        %1898 = vst [vmem:[#allocation3 + $0x79] sm:$0xff] %v1886
        %1899 = vst [vmem:[#allocation3 + $0x81] sm:$0xff] %v1887
        // Predicated region
        $region101: #{tpu_custom_call.1} parent=67 // pred_check
          %p1900 = pneg %p750
        $region102: #{tpu_custom_call.1} parent=67 // pred_check_branch
          %1902 = sbr.rel (%p1900) target = $region104
        $region103: #{tpu_custom_call.1} parent=67 // pred_region
          %1903 = vst [vmem:[#allocation3] sm:$0xff] 0.0
          %1904 = vst [vmem:[#allocation3 + $0x8] sm:$0xff] 0.0
          %1905 = vst [vmem:[#allocation3 + $0x10] sm:$0x3] 0.0
        $region104: #{tpu_custom_call.1} parent=67 // pred_fallthru
          _
        // Predicated region
        $region105: #{tpu_custom_call.1} parent=67 // pred_check
          %p1906 = pneg %p760
        $region106: #{tpu_custom_call.1} parent=67 // pred_check_branch
          %1908 = sbr.rel (%p1906) target = $region108
        $region107: #{tpu_custom_call.1} parent=67 // pred_region
          %s1909 = scalar_lea.vmem [#allocation3], 120
          %1910 = vst [vmem:[%s1909] sm:$0xff] 0.0
          %1911 = vst [vmem:[%s1909 + $0x8] sm:$0xff] 0.0
          %1912 = vst [vmem:[%s1909 + $0x10] sm:$0x3] 0.0
        $region108: #{tpu_custom_call.1} parent=67 // pred_fallthru
          _
        %v1913 = vld [vmem:[%s8] sm:$0x1]
        %v1914 = vld [vmem:[#allocation3] sm:$0xff]
        %v1915 = vld [vmem:[#allocation3 + $0x8] sm:$0xff]
        %v1916 = vld [vmem:[#allocation3 + $0x18] sm:$0xff]
        %v1917 = vld [vmem:[#allocation3 + $0x20] sm:$0xff]
        %v1918 = vld [vmem:[#allocation3 + $0x30] sm:$0xff]
        %v1919 = vld [vmem:[#allocation3 + $0x38] sm:$0xff]
        %v1920 = vld [vmem:[#allocation3 + $0x48] sm:$0xff]
        %v1921 = vld [vmem:[#allocation3 + $0x50] sm:$0xff]
        %v1922 = vld [vmem:[#allocation3 + $0x1] sm:$0xff]
        %v1923 = vld [vmem:[#allocation3 + $0x9] sm:$0xff]
        %v1924 = vld [vmem:[#allocation3 + $0x19] sm:$0xff]
        %v1925 = vld [vmem:[#allocation3 + $0x21] sm:$0xff]
        %v1926 = vld [vmem:[#allocation3 + $0x31] sm:$0xff]
        %v1927 = vld [vmem:[#allocation3 + $0x39] sm:$0xff]
        %v1928 = vld [vmem:[#allocation3 + $0x49] sm:$0xff]
        %v1929 = vld [vmem:[#allocation3 + $0x51] sm:$0xff]
        %v1930 = vld [vmem:[#allocation3 + $0x2] sm:$0xff]
        %v1931 = vld [vmem:[#allocation3 + $0xa] sm:$0xff]
        %v1932 = vld [vmem:[#allocation3 + $0x1a] sm:$0xff]
        %v1933 = vld [vmem:[#allocation3 + $0x22] sm:$0xff]
        %v1934 = vld [vmem:[#allocation3 + $0x32] sm:$0xff]
        %v1935 = vld [vmem:[#allocation3 + $0x3a] sm:$0xff]
        %v1936 = vld [vmem:[#allocation3 + $0x4a] sm:$0xff]
        %v1937 = vld [vmem:[#allocation3 + $0x52] sm:$0xff]
        %v1938 = vld [vmem:[#allocation12] sm:$0xff]
        %v1939 = vld [vmem:[#allocation12 + $0x8] sm:$0xff]
        %v1940 = vld [vmem:[#allocation12 + $0x10] sm:$0xff]
        %v1941 = vld [vmem:[#allocation12 + $0x18] sm:$0xff]
        %v1942 = vld [vmem:[#allocation12 + $0x20] sm:$0xff]
        %v1943 = vld [vmem:[#allocation12 + $0x28] sm:$0xff]
        %v1944 = vld [vmem:[#allocation12 + $0x30] sm:$0xff]
        %v1945 = vld [vmem:[#allocation12 + $0x38] sm:$0xff]
        %v1946 = vld [vmem:[#allocation12 + $0x40] sm:$0xff]
        %v1947 = vld [vmem:[#allocation12 + $0x48] sm:$0xff]
        %v1948 = vld [vmem:[#allocation12 + $0x50] sm:$0xff]
        %v1949 = vld [vmem:[#allocation12 + $0x58] sm:$0xff]
        %v1950 = vld [vmem:[#allocation12 + $0x60] sm:$0xff]
        %v1951 = vld [vmem:[#allocation12 + $0x68] sm:$0xff]
        %v1952 = vld [vmem:[#allocation12 + $0x70] sm:$0xff]
        %v1953 = vld [vmem:[#allocation12 + $0x78] sm:$0xff]
        %v1954 = vld [vmem:[#allocation12 + $0x80] sm:$0xff]
        %v1955 = vld [vmem:[#allocation12 + $0x88] sm:$0xff]
        %v1956 = vld [vmem:[#allocation12 + $0x90] sm:$0xff]
        %v1957 = vld [vmem:[#allocation12 + $0x98] sm:$0xff]
        %v1958 = vld [vmem:[#allocation12 + $0xa0] sm:$0xff]
        %v1959 = vld [vmem:[#allocation12 + $0xa8] sm:$0xff]
        %v1960 = vld [vmem:[#allocation12 + $0xb0] sm:$0xff]
        %v1961 = vld [vmem:[#allocation12 + $0xb8] sm:$0xff]
        %v1962 = vld [vmem:[#allocation12 + $0xc0] sm:$0xff]
        %v1963 = vld [vmem:[#allocation12 + $0xc8] sm:$0xff]
        %v1964 = vld [vmem:[#allocation12 + $0xd0] sm:$0xff]
        %v1965 = vld [vmem:[#allocation12 + $0xd8] sm:$0xff]
        %v1966 = vld [vmem:[#allocation12 + $0xe0] sm:$0xff]
        %v1967 = vld [vmem:[#allocation12 + $0xe8] sm:$0xff]
        %v1968 = vld [vmem:[#allocation12 + $0xf0] sm:$0xff]
        %v1969 = vld [vmem:[#allocation12 + $0xf8] sm:$0xff]
        %v1970 = vld [vmem:[#allocation12 + $0x100] sm:$0xff]
        %v1971 = vld [vmem:[#allocation12 + $0x108] sm:$0xff]
        %v1972 = vld [vmem:[#allocation12 + $0x110] sm:$0xff]
        %v1973 = vld [vmem:[#allocation12 + $0x118] sm:$0xff]
        %v1974 = vld [vmem:[#allocation12 + $0x120] sm:$0xff]
        %v1975 = vld [vmem:[#allocation12 + $0x128] sm:$0xff]
        %v1976 = vld [vmem:[#allocation12 + $0x130] sm:$0xff]
        %v1977 = vld [vmem:[#allocation12 + $0x138] sm:$0xff]
        %v1978 = vld [vmem:[#allocation12 + $0x140] sm:$0xff]
        %v1979 = vld [vmem:[#allocation12 + $0x148] sm:$0xff]
        %v1980 = vld [vmem:[#allocation12 + $0x150] sm:$0xff]
        %v1981 = vld [vmem:[#allocation12 + $0x158] sm:$0xff]
        %v1982 = vld [vmem:[#allocation12 + $0x160] sm:$0xff]
        %v1983 = vld [vmem:[#allocation12 + $0x168] sm:$0xff]
        %v1984 = vld [vmem:[#allocation12 + $0x170] sm:$0xff]
        %v1985 = vld [vmem:[#allocation12 + $0x178] sm:$0xff]
        %s1986 = scalar_lea.vmem [#allocation3], 24
        %v1987 = vld [vmem:[%s1986] sm:$0xff]
        %v1988 = vld [vmem:[%s1986 + $0x8] sm:$0xff]
        %v1989 = vld [vmem:[%s1986 + $0x18] sm:$0xff]
        %v1990 = vld [vmem:[%s1986 + $0x20] sm:$0xff]
        %v1991 = vld [vmem:[%s1986 + $0x30] sm:$0xff]
        %v1992 = vld [vmem:[%s1986 + $0x38] sm:$0xff]
        %v1993 = vld [vmem:[%s1986 + $0x48] sm:$0xff]
        %v1994 = vld [vmem:[%s1986 + $0x50] sm:$0xff]
        %v1995 = vld [vmem:[%s1986 + $0x1] sm:$0xff]
        %v1996 = vld [vmem:[%s1986 + $0x9] sm:$0xff]
        %v1997 = vld [vmem:[%s1986 + $0x19] sm:$0xff]
        %v1998 = vld [vmem:[%s1986 + $0x21] sm:$0xff]
        %v1999 = vld [vmem:[%s1986 + $0x31] sm:$0xff]
        %v2000 = vld [vmem:[%s1986 + $0x39] sm:$0xff]
        %v2001 = vld [vmem:[%s1986 + $0x49] sm:$0xff]
        %v2002 = vld [vmem:[%s1986 + $0x51] sm:$0xff]
        %v2003 = vld [vmem:[%s1986 + $0x2] sm:$0xff]
        %v2004 = vld [vmem:[%s1986 + $0xa] sm:$0xff]
        %v2005 = vld [vmem:[%s1986 + $0x1a] sm:$0xff]
        %v2006 = vld [vmem:[%s1986 + $0x22] sm:$0xff]
        %v2007 = vld [vmem:[%s1986 + $0x32] sm:$0xff]
        %v2008 = vld [vmem:[%s1986 + $0x3a] sm:$0xff]
        %v2009 = vld [vmem:[%s1986 + $0x4a] sm:$0xff]
        %v2010 = vld [vmem:[%s1986 + $0x52] sm:$0xff]
        %v2011 = vld [vmem:[#allocation12 + $0x180] sm:$0xff]
        %v2012 = vld [vmem:[#allocation12 + $0x188] sm:$0xff]
        %v2013 = vld [vmem:[#allocation12 + $0x190] sm:$0xff]
        %v2014 = vld [vmem:[#allocation12 + $0x198] sm:$0xff]
        %v2015 = vld [vmem:[#allocation12 + $0x1a0] sm:$0xff]
        %v2016 = vld [vmem:[#allocation12 + $0x1a8] sm:$0xff]
        %v2017 = vld [vmem:[#allocation12 + $0x1b0] sm:$0xff]
        %v2018 = vld [vmem:[#allocation12 + $0x1b8] sm:$0xff]
        %v2019 = vld [vmem:[#allocation12 + $0x1c0] sm:$0xff]
        %v2020 = vld [vmem:[#allocation12 + $0x1c8] sm:$0xff]
        %v2021 = vld [vmem:[#allocation12 + $0x1d0] sm:$0xff]
        %v2022 = vld [vmem:[#allocation12 + $0x1d8] sm:$0xff]
        %v2023 = vld [vmem:[#allocation12 + $0x1e0] sm:$0xff]
        %v2024 = vld [vmem:[#allocation12 + $0x1e8] sm:$0xff]
        %v2025 = vld [vmem:[#allocation12 + $0x1f0] sm:$0xff]
        %v2026 = vld [vmem:[#allocation12 + $0x1f8] sm:$0xff]
        %v2027 = vld [vmem:[#allocation12 + $0x200] sm:$0xff]
        %v2028 = vld [vmem:[#allocation12 + $0x208] sm:$0xff]
        %v2029 = vld [vmem:[#allocation12 + $0x210] sm:$0xff]
        %v2030 = vld [vmem:[#allocation12 + $0x218] sm:$0xff]
        %v2031 = vld [vmem:[#allocation12 + $0x220] sm:$0xff]
        %v2032 = vld [vmem:[#allocation12 + $0x228] sm:$0xff]
        %v2033 = vld [vmem:[#allocation12 + $0x230] sm:$0xff]
        %v2034 = vld [vmem:[#allocation12 + $0x238] sm:$0xff]
        %v2035 = vld [vmem:[#allocation12 + $0x240] sm:$0xff]
        %v2036 = vld [vmem:[#allocation12 + $0x248] sm:$0xff]
        %v2037 = vld [vmem:[#allocation12 + $0x250] sm:$0xff]
        %v2038 = vld [vmem:[#allocation12 + $0x258] sm:$0xff]
        %v2039 = vld [vmem:[#allocation12 + $0x260] sm:$0xff]
        %v2040 = vld [vmem:[#allocation12 + $0x268] sm:$0xff]
        %v2041 = vld [vmem:[#allocation12 + $0x270] sm:$0xff]
        %v2042 = vld [vmem:[#allocation12 + $0x278] sm:$0xff]
        %v2043 = vld [vmem:[#allocation12 + $0x280] sm:$0xff]
        %v2044 = vld [vmem:[#allocation12 + $0x288] sm:$0xff]
        %v2045 = vld [vmem:[#allocation12 + $0x290] sm:$0xff]
        %v2046 = vld [vmem:[#allocation12 + $0x298] sm:$0xff]
        %v2047 = vld [vmem:[#allocation12 + $0x2a0] sm:$0xff]
        %v2048 = vld [vmem:[#allocation12 + $0x2a8] sm:$0xff]
        %v2049 = vld [vmem:[#allocation12 + $0x2b0] sm:$0xff]
        %v2050 = vld [vmem:[#allocation12 + $0x2b8] sm:$0xff]
        %v2051 = vld [vmem:[#allocation12 + $0x2c0] sm:$0xff]
        %v2052 = vld [vmem:[#allocation12 + $0x2c8] sm:$0xff]
        %v2053 = vld [vmem:[#allocation12 + $0x2d0] sm:$0xff]
        %v2054 = vld [vmem:[#allocation12 + $0x2d8] sm:$0xff]
        %v2055 = vld [vmem:[#allocation12 + $0x2e0] sm:$0xff]
        %v2056 = vld [vmem:[#allocation12 + $0x2e8] sm:$0xff]
        %v2057 = vld [vmem:[#allocation12 + $0x2f0] sm:$0xff]
        %v2058 = vld [vmem:[#allocation12 + $0x2f8] sm:$0xff]
        %2059 = vmatprep.subr.mxu0 0.0
        %2060 = vmatpush1.msra.mxu0 %v2011
        %2061 = vmatprep.subr.mxu0 0.0
        %2062 = vmatpush1.msra.mxu0 %v2012
        %2063 = vmatprep.subr.mxu0 0.0
        %2064 = vmatpush1.msra.mxu0 %v2013
        %2065 = vmatprep.subr.mxu0 0.0
        %2066 = vmatpush1.msra.mxu0 %v2014
        %2067 = vmatprep.subr.mxu0 0.0
        %2068 = vmatpush1.msra.mxu0 %v2015
        %2069 = vmatprep.subr.mxu0 0.0
        %2070 = vmatpush1.msra.mxu0 %v2016
        %2071 = vmatprep.subr.mxu0 0.0
        %2072 = vmatpush1.msra.mxu0 %v2017
        %2073 = vmatprep.subr.mxu0 0.0
        %2074 = vmatpush1.msra.mxu0 %v2018
        %2075 = vmatprep.subr.mxu0 0.0
        %2076 = vmatpush1.msra.mxu0 %v2019
        %2077 = vmatprep.subr.mxu0 0.0
        %2078 = vmatpush1.msra.mxu0 %v2020
        %2079 = vmatprep.subr.mxu0 0.0
        %2080 = vmatpush1.msra.mxu0 %v2021
        %2081 = vmatprep.subr.mxu0 0.0
        %2082 = vmatpush1.msra.mxu0 %v2022
        %2083 = vmatprep.subr.mxu0 0.0
        %2084 = vmatpush1.msra.mxu0 %v2023
        %2085 = vmatprep.subr.mxu0 0.0
        %2086 = vmatpush1.msra.mxu0 %v2024
        %2087 = vmatprep.subr.mxu0 0.0
        %2088 = vmatpush1.msra.mxu0 %v2025
        %2089 = vmatprep.subr.mxu0 0.0
        %2090 = vmatpush1.msra.mxu0 %v2026
        %2091 = vmatprep.subr.mxu0 0.0
        %2092 = vmatpush1.msra.mxu0 %v2027
        %2093 = vmatprep.subr.mxu0 0.0
        %2094 = vmatpush1.msra.mxu0 %v2028
        %2095 = vmatprep.subr.mxu0 0.0
        %2096 = vmatpush1.msra.mxu0 %v2029
        %2097 = vmatprep.subr.mxu0 0.0
        %2098 = vmatpush1.msra.mxu0 %v2030
        %2099 = vmatprep.subr.mxu0 0.0
        %2100 = vmatpush1.msra.mxu0 %v2031
        %2101 = vmatprep.subr.mxu0 0.0
        %2102 = vmatpush1.msra.mxu0 %v2032
        %2103 = vmatprep.subr.mxu0 0.0
        %2104 = vmatpush1.msra.mxu0 %v2033
        %2105 = vmatprep.subr.mxu0 0.0
        %2106 = vmatpush1.msra.mxu0 %v2034
        %2107 = vmatprep.subr.mxu0 0.0
        %2108 = vmatpush1.msra.mxu0 %v2035
        %2109 = vmatprep.subr.mxu0 0.0
        %2110 = vmatpush1.msra.mxu0 %v2036
        %2111 = vmatprep.subr.mxu0 0.0
        %2112 = vmatpush1.msra.mxu0 %v2037
        %2113 = vmatprep.subr.mxu0 0.0
        %2114 = vmatpush1.msra.mxu0 %v2038
        %2115 = vmatprep.subr.mxu0 0.0
        %2116 = vmatpush1.msra.mxu0 %v2039
        %2117 = vmatprep.subr.mxu0 0.0
        %2118 = vmatpush1.msra.mxu0 %v2040
        %2119 = vmatprep.subr.mxu0 0.0
        %2120 = vmatpush1.msra.mxu0 %v2041
        %2121 = vmatprep.subr.mxu0 0.0
        %2122 = vmatpush1.msra.mxu0 %v2042
        %2123 = vmatprep.mubr.f32.mxu0 %v1995
        %2124 = vmatmul.mubr.f32.gmra.mrb[0].mxu0 %v1987
        %v2125 = vpop.f32.mrb[0].mxu0
        %v2126 = vadd.f32 0.0, %v2125
        %v2127 = vpop.f32.mrb[0].mxu0
        %2128 = vmatprep.mubr.f32.mxu0 %v1996
        %2129 = vmatmul.mubr.f32.gmra.mrb[0].mxu0 %v1988
        %v2130 = vpop.f32.mrb[0].mxu0
        %v2131 = vadd.f32 0.0, %v2130
        %v2132 = vpop.f32.mrb[0].mxu0
        %2133 = vmatprep.mubr.f32.mxu0 %v1997
        %2134 = vmatmul.mubr.f32.gmra.mrb[0].mxu0 %v1989
        %v2135 = vpop.f32.mrb[0].mxu0
        %v2136 = vadd.f32 0.0, %v2135
        %v2137 = vpop.f32.mrb[0].mxu0
        %2138 = vmatprep.mubr.f32.mxu0 %v1998
        %2139 = vmatmul.mubr.f32.gmra.mrb[0].mxu0 %v1990
        %v2140 = vpop.f32.mrb[0].mxu0
        %v2141 = vadd.f32 0.0, %v2140
        %v2142 = vpop.f32.mrb[0].mxu0
        %2143 = vmatprep.mubr.f32.mxu0 %v1999
        %2144 = vmatmul.mubr.f32.gmra.mrb[0].mxu0 %v1991
        %v2145 = vpop.f32.mrb[0].mxu0
        %v2146 = vadd.f32 0.0, %v2145
        %v2147 = vpop.f32.mrb[0].mxu0
        %2148 = vmatprep.mubr.f32.mxu0 %v2000
        %2149 = vmatmul.mubr.f32.gmra.mrb[0].mxu0 %v1992
        %v2150 = vpop.f32.mrb[0].mxu0
        %v2151 = vadd.f32 0.0, %v2150
        %v2152 = vpop.f32.mrb[0].mxu0
        %2153 = vmatprep.mubr.f32.mxu0 %v2001
        %2154 = vmatmul.mubr.f32.gmra.mrb[0].mxu0 %v1993
        %v2155 = vpop.f32.mrb[0].mxu0
        %v2156 = vadd.f32 0.0, %v2155
        %v2157 = vpop.f32.mrb[0].mxu0
        %2158 = vmatprep.mubr.f32.mxu0 %v2002
        %2159 = vmatmul.mubr.f32.gmra.mrb[0].mxu0 %v1994
        %v2160 = vpop.f32.mrb[0].mxu0
        %v2161 = vadd.f32 0.0, %v2160
        %v2162 = vpop.f32.mrb[0].mxu0
        %2163 = vdwg.mxu0
        %2164 = vmatprep.subr.mxu0 0.0
        %2165 = vmatpush1.msra.mxu0 %v2043
        %2166 = vmatprep.subr.mxu0 0.0
        %2167 = vmatpush1.msra.mxu0 %v2044
        %2168 = vmatprep.subr.mxu0 0.0
        %2169 = vmatpush1.msra.mxu0 %v2045
        %2170 = vmatprep.subr.mxu0 0.0
        %2171 = vmatpush1.msra.mxu0 %v2046
        %2172 = vmatprep.subr.mxu0 0.0
        %2173 = vmatpush1.msra.mxu0 %v2047
        %2174 = vmatprep.subr.mxu0 0.0
        %2175 = vmatpush1.msra.mxu0 %v2048
        %2176 = vmatprep.subr.mxu0 0.0
        %2177 = vmatpush1.msra.mxu0 %v2049
        %2178 = vmatprep.subr.mxu0 0.0
        %2179 = vmatpush1.msra.mxu0 %v2050
        %2180 = vmatprep.subr.mxu0 0.0
        %2181 = vmatpush1.msra.mxu0 %v2051
        %2182 = vmatprep.subr.mxu0 0.0
        %2183 = vmatpush1.msra.mxu0 %v2052
        %2184 = vmatprep.subr.mxu0 0.0
        %2185 = vmatpush1.msra.mxu0 %v2053
        %2186 = vmatprep.subr.mxu0 0.0
        %2187 = vmatpush1.msra.mxu0 %v2054
        %2188 = vmatprep.subr.mxu0 0.0
        %2189 = vmatpush1.msra.mxu0 %v2055
        %2190 = vmatprep.subr.mxu0 0.0
        %2191 = vmatpush1.msra.mxu0 %v2056
        %2192 = vmatprep.subr.mxu0 0.0
        %2193 = vmatpush1.msra.mxu0 %v2057
        %2194 = vmatprep.subr.mxu0 0.0
        %2195 = vmatpush1.msra.mxu0 %v2058
        %2196 = vmatprep.subr.mxu0 0.0
        %2197 = vmatpush1.msra.mxu0 0.0
        %2198 = vmatprep.subr.mxu0 0.0
        %2199 = vmatpush1.msra.mxu0 0.0
        %2200 = vmatprep.subr.mxu0 0.0
        %2201 = vmatpush1.msra.mxu0 0.0
        %2202 = vmatprep.subr.mxu0 0.0
        %2203 = vmatpush1.msra.mxu0 0.0
        %2204 = vmatprep.subr.mxu0 0.0
        %2205 = vmatpush1.msra.mxu0 0.0
        %2206 = vmatprep.subr.mxu0 0.0
        %2207 = vmatpush1.msra.mxu0 0.0
        %2208 = vmatprep.subr.mxu0 0.0
        %2209 = vmatpush1.msra.mxu0 0.0
        %2210 = vmatprep.subr.mxu0 0.0
        %2211 = vmatpush1.msra.mxu0 0.0
        %2212 = vmatprep.subr.mxu0 0.0
        %2213 = vmatpush1.msra.mxu0 0.0
        %2214 = vmatprep.subr.mxu0 0.0
        %2215 = vmatpush1.msra.mxu0 0.0
        %2216 = vmatprep.subr.mxu0 0.0
        %2217 = vmatpush1.msra.mxu0 0.0
        %2218 = vmatprep.subr.mxu0 0.0
        %2219 = vmatpush1.msra.mxu0 0.0
        %2220 = vmatprep.subr.mxu0 0.0
        %2221 = vmatpush1.msra.mxu0 0.0
        %2222 = vmatprep.subr.mxu0 0.0
        %2223 = vmatpush1.msra.mxu0 0.0
        %2224 = vmatprep.subr.mxu0 0.0
        %2225 = vmatpush1.msra.mxu0 0.0
        %2226 = vmatprep.subr.mxu0 0.0
        %2227 = vmatpush1.msra.mxu0 0.0
        %2228 = vmatprep.mubr.f32.mxu0 0.0
        %2229 = vmatmul.mubr.f32.gmra.mrb[0].mxu0 %v2003
        %v2230 = vpop.f32.mrb[0].mxu0
        %v2231 = vadd.f32 %v2126, %v2230
        %v2232 = vpop.f32.mrb[0].mxu0
        %2233 = vmatprep.mubr.f32.mxu0 0.0
        %2234 = vmatmul.mubr.f32.gmra.mrb[0].mxu0 %v2004
        %v2235 = vpop.f32.mrb[0].mxu0
        %v2236 = vadd.f32 %v2131, %v2235
        %v2237 = vpop.f32.mrb[0].mxu0
        %2238 = vmatprep.mubr.f32.mxu0 0.0
        %2239 = vmatmul.mubr.f32.gmra.mrb[0].mxu0 %v2005
        %v2240 = vpop.f32.mrb[0].mxu0
        %v2241 = vadd.f32 %v2136, %v2240
        %v2242 = vpop.f32.mrb[0].mxu0
        %2243 = vmatprep.mubr.f32.mxu0 0.0
        %2244 = vmatmul.mubr.f32.gmra.mrb[0].mxu0 %v2006
        %v2245 = vpop.f32.mrb[0].mxu0
        %v2246 = vadd.f32 %v2141, %v2245
        %v2247 = vpop.f32.mrb[0].mxu0
        %2248 = vmatprep.mubr.f32.mxu0 0.0
        %2249 = vmatmul.mubr.f32.gmra.mrb[0].mxu0 %v2007
        %v2250 = vpop.f32.mrb[0].mxu0
        %v2251 = vadd.f32 %v2146, %v2250
        %v2252 = vpop.f32.mrb[0].mxu0
        %2253 = vmatprep.mubr.f32.mxu0 0.0
        %2254 = vmatmul.mubr.f32.gmra.mrb[0].mxu0 %v2008
        %v2255 = vpop.f32.mrb[0].mxu0
        %v2256 = vadd.f32 %v2151, %v2255
        %v2257 = vpop.f32.mrb[0].mxu0
        %2258 = vmatprep.mubr.f32.mxu0 0.0
        %2259 = vmatmul.mubr.f32.gmra.mrb[0].mxu0 %v2009
        %v2260 = vpop.f32.mrb[0].mxu0
        %v2261 = vadd.f32 %v2156, %v2260
        %v2262 = vpop.f32.mrb[0].mxu0
        %2263 = vmatprep.mubr.f32.mxu0 0.0
        %2264 = vmatmul.mubr.f32.gmra.mrb[0].mxu0 %v2010
        %v2265 = vpop.f32.mrb[0].mxu0
        %v2266 = vadd.f32 %v2161, %v2265
        %v2267 = vpop.f32.mrb[0].mxu0
        %2268 = vdwg.mxu0
        %2269 = vmatprep.subr.mxu0 0.0
        %2270 = vmatpush1.msra.mxu0 %v1938
        %2271 = vmatprep.subr.mxu0 0.0
        %2272 = vmatpush1.msra.mxu0 %v1939
        %2273 = vmatprep.subr.mxu0 0.0
        %2274 = vmatpush1.msra.mxu0 %v1940
        %2275 = vmatprep.subr.mxu0 0.0
        %2276 = vmatpush1.msra.mxu0 %v1941
        %2277 = vmatprep.subr.mxu0 0.0
        %2278 = vmatpush1.msra.mxu0 %v1942
        %2279 = vmatprep.subr.mxu0 0.0
        %2280 = vmatpush1.msra.mxu0 %v1943
        %2281 = vmatprep.subr.mxu0 0.0
        %2282 = vmatpush1.msra.mxu0 %v1944
        %2283 = vmatprep.subr.mxu0 0.0
        %2284 = vmatpush1.msra.mxu0 %v1945
        %2285 = vmatprep.subr.mxu0 0.0
        %2286 = vmatpush1.msra.mxu0 %v1946
        %2287 = vmatprep.subr.mxu0 0.0
        %2288 = vmatpush1.msra.mxu0 %v1947
        %2289 = vmatprep.subr.mxu0 0.0
        %2290 = vmatpush1.msra.mxu0 %v1948
        %2291 = vmatprep.subr.mxu0 0.0
        %2292 = vmatpush1.msra.mxu0 %v1949
        %2293 = vmatprep.subr.mxu0 0.0
        %2294 = vmatpush1.msra.mxu0 %v1950
        %2295 = vmatprep.subr.mxu0 0.0
        %2296 = vmatpush1.msra.mxu0 %v1951
        %2297 = vmatprep.subr.mxu0 0.0
        %2298 = vmatpush1.msra.mxu0 %v1952
        %2299 = vmatprep.subr.mxu0 0.0
        %2300 = vmatpush1.msra.mxu0 %v1953
        %2301 = vmatprep.subr.mxu0 0.0
        %2302 = vmatpush1.msra.mxu0 %v1954
        %2303 = vmatprep.subr.mxu0 0.0
        %2304 = vmatpush1.msra.mxu0 %v1955
        %2305 = vmatprep.subr.mxu0 0.0
        %2306 = vmatpush1.msra.mxu0 %v1956
        %2307 = vmatprep.subr.mxu0 0.0
        %2308 = vmatpush1.msra.mxu0 %v1957
        %2309 = vmatprep.subr.mxu0 0.0
        %2310 = vmatpush1.msra.mxu0 %v1958
        %2311 = vmatprep.subr.mxu0 0.0
        %2312 = vmatpush1.msra.mxu0 %v1959
        %2313 = vmatprep.subr.mxu0 0.0
        %2314 = vmatpush1.msra.mxu0 %v1960
        %2315 = vmatprep.subr.mxu0 0.0
        %2316 = vmatpush1.msra.mxu0 %v1961
        %2317 = vmatprep.subr.mxu0 0.0
        %2318 = vmatpush1.msra.mxu0 %v1962
        %2319 = vmatprep.subr.mxu0 0.0
        %2320 = vmatpush1.msra.mxu0 %v1963
        %2321 = vmatprep.subr.mxu0 0.0
        %2322 = vmatpush1.msra.mxu0 %v1964
        %2323 = vmatprep.subr.mxu0 0.0
        %2324 = vmatpush1.msra.mxu0 %v1965
        %2325 = vmatprep.subr.mxu0 0.0
        %2326 = vmatpush1.msra.mxu0 %v1966
        %2327 = vmatprep.subr.mxu0 0.0
        %2328 = vmatpush1.msra.mxu0 %v1967
        %2329 = vmatprep.subr.mxu0 0.0
        %2330 = vmatpush1.msra.mxu0 %v1968
        %2331 = vmatprep.subr.mxu0 0.0
        %2332 = vmatpush1.msra.mxu0 %v1969
        %2333 = vmatprep.mubr.f32.mxu0 %v1922
        %2334 = vmatmul.mubr.f32.gmra.mrb[0].mxu0 %v1914
        %v2335 = vpop.f32.mrb[0].mxu0
        %v2336 = vadd.f32 %v2231, %v2335
        %v2337 = vpop.f32.mrb[0].mxu0
        %2338 = vmatprep.mubr.f32.mxu0 %v1923
        %2339 = vmatmul.mubr.f32.gmra.mrb[0].mxu0 %v1915
        %v2340 = vpop.f32.mrb[0].mxu0
        %v2341 = vadd.f32 %v2236, %v2340
        %v2342 = vpop.f32.mrb[0].mxu0
        %2343 = vmatprep.mubr.f32.mxu0 %v1924
        %2344 = vmatmul.mubr.f32.gmra.mrb[0].mxu0 %v1916
        %v2345 = vpop.f32.mrb[0].mxu0
        %v2346 = vadd.f32 %v2241, %v2345
        %v2347 = vpop.f32.mrb[0].mxu0
        %2348 = vmatprep.mubr.f32.mxu0 %v1925
        %2349 = vmatmul.mubr.f32.gmra.mrb[0].mxu0 %v1917
        %v2350 = vpop.f32.mrb[0].mxu0
        %v2351 = vadd.f32 %v2246, %v2350
        %v2352 = vpop.f32.mrb[0].mxu0
        %2353 = vmatprep.mubr.f32.mxu0 %v1926
        %2354 = vmatmul.mubr.f32.gmra.mrb[0].mxu0 %v1918
        %v2355 = vpop.f32.mrb[0].mxu0
        %v2356 = vadd.f32 %v2251, %v2355
        %v2357 = vpop.f32.mrb[0].mxu0
        %2358 = vmatprep.mubr.f32.mxu0 %v1927
        %2359 = vmatmul.mubr.f32.gmra.mrb[0].mxu0 %v1919
        %v2360 = vpop.f32.mrb[0].mxu0
        %v2361 = vadd.f32 %v2256, %v2360
        %v2362 = vpop.f32.mrb[0].mxu0
        %2363 = vmatprep.mubr.f32.mxu0 %v1928
        %2364 = vmatmul.mubr.f32.gmra.mrb[0].mxu0 %v1920
        %v2365 = vpop.f32.mrb[0].mxu0
        %v2366 = vadd.f32 %v2261, %v2365
        %v2367 = vpop.f32.mrb[0].mxu0
        %2368 = vmatprep.mubr.f32.mxu0 %v1929
        %2369 = vmatmul.mubr.f32.gmra.mrb[0].mxu0 %v1921
        %v2370 = vpop.f32.mrb[0].mxu0
        %v2371 = vadd.f32 %v2266, %v2370
        %v2372 = vpop.f32.mrb[0].mxu0
        %2373 = vdwg.mxu0
        %2374 = vmatprep.subr.mxu0 0.0
        %2375 = vmatpush1.msra.mxu0 %v1970
        %2376 = vmatprep.subr.mxu0 0.0
        %2377 = vmatpush1.msra.mxu0 %v1971
        %2378 = vmatprep.subr.mxu0 0.0
        %2379 = vmatpush1.msra.mxu0 %v1972
        %2380 = vmatprep.subr.mxu0 0.0
        %2381 = vmatpush1.msra.mxu0 %v1973
        %2382 = vmatprep.subr.mxu0 0.0
        %2383 = vmatpush1.msra.mxu0 %v1974
        %2384 = vmatprep.subr.mxu0 0.0
        %2385 = vmatpush1.msra.mxu0 %v1975
        %2386 = vmatprep.subr.mxu0 0.0
        %2387 = vmatpush1.msra.mxu0 %v1976
        %2388 = vmatprep.subr.mxu0 0.0
        %2389 = vmatpush1.msra.mxu0 %v1977
        %2390 = vmatprep.subr.mxu0 0.0
        %2391 = vmatpush1.msra.mxu0 %v1978
        %2392 = vmatprep.subr.mxu0 0.0
        %2393 = vmatpush1.msra.mxu0 %v1979
        %2394 = vmatprep.subr.mxu0 0.0
        %2395 = vmatpush1.msra.mxu0 %v1980
        %2396 = vmatprep.subr.mxu0 0.0
        %2397 = vmatpush1.msra.mxu0 %v1981
        %2398 = vmatprep.subr.mxu0 0.0
        %2399 = vmatpush1.msra.mxu0 %v1982
        %2400 = vmatprep.subr.mxu0 0.0
        %2401 = vmatpush1.msra.mxu0 %v1983
        %2402 = vmatprep.subr.mxu0 0.0
        %2403 = vmatpush1.msra.mxu0 %v1984
        %2404 = vmatprep.subr.mxu0 0.0
        %2405 = vmatpush1.msra.mxu0 %v1985
        %2406 = vmatprep.subr.mxu0 0.0
        %2407 = vmatpush1.msra.mxu0 0.0
        %2408 = vmatprep.subr.mxu0 0.0
        %2409 = vmatpush1.msra.mxu0 0.0
        %2410 = vmatprep.subr.mxu0 0.0
        %2411 = vmatpush1.msra.mxu0 0.0
        %2412 = vmatprep.subr.mxu0 0.0
        %2413 = vmatpush1.msra.mxu0 0.0
        %2414 = vmatprep.subr.mxu0 0.0
        %2415 = vmatpush1.msra.mxu0 0.0
        %2416 = vmatprep.subr.mxu0 0.0
        %2417 = vmatpush1.msra.mxu0 0.0
        %2418 = vmatprep.subr.mxu0 0.0
        %2419 = vmatpush1.msra.mxu0 0.0
        %2420 = vmatprep.subr.mxu0 0.0
        %2421 = vmatpush1.msra.mxu0 0.0
        %2422 = vmatprep.subr.mxu0 0.0
        %2423 = vmatpush1.msra.mxu0 0.0
        %2424 = vmatprep.subr.mxu0 0.0
        %2425 = vmatpush1.msra.mxu0 0.0
        %2426 = vmatprep.subr.mxu0 0.0
        %2427 = vmatpush1.msra.mxu0 0.0
        %2428 = vmatprep.subr.mxu0 0.0
        %2429 = vmatpush1.msra.mxu0 0.0
        %2430 = vmatprep.subr.mxu0 0.0
        %2431 = vmatpush1.msra.mxu0 0.0
        %2432 = vmatprep.subr.mxu0 0.0
        %2433 = vmatpush1.msra.mxu0 0.0
        %2434 = vmatprep.subr.mxu0 0.0
        %2435 = vmatpush1.msra.mxu0 0.0
        %2436 = vmatprep.subr.mxu0 0.0
        %2437 = vmatpush1.msra.mxu0 0.0
        %2438 = vmatprep.mubr.f32.mxu0 0.0
        %2439 = vmatmul.mubr.f32.gmra.mrb[0].mxu0 %v1930
        %v2440 = vpop.f32.mrb[0].mxu0
        %v2441 = vadd.f32 %v2336, %v2440
        %v2442 = vpop.f32.mrb[0].mxu0
        %2443 = vmatprep.mubr.f32.mxu0 0.0
        %2444 = vmatmul.mubr.f32.gmra.mrb[0].mxu0 %v1931
        %v2445 = vpop.f32.mrb[0].mxu0
        %v2446 = vadd.f32 %v2341, %v2445
        %v2447 = vpop.f32.mrb[0].mxu0
        %2448 = vmatprep.mubr.f32.mxu0 0.0
        %2449 = vmatmul.mubr.f32.gmra.mrb[0].mxu0 %v1932
        %v2450 = vpop.f32.mrb[0].mxu0
        %v2451 = vadd.f32 %v2346, %v2450
        %v2452 = vpop.f32.mrb[0].mxu0
        %2453 = vmatprep.mubr.f32.mxu0 0.0
        %2454 = vmatmul.mubr.f32.gmra.mrb[0].mxu0 %v1933
        %v2455 = vpop.f32.mrb[0].mxu0
        %v2456 = vadd.f32 %v2351, %v2455
        %v2457 = vpop.f32.mrb[0].mxu0
        %2458 = vmatprep.mubr.f32.mxu0 0.0
        %2459 = vmatmul.mubr.f32.gmra.mrb[0].mxu0 %v1934
        %v2460 = vpop.f32.mrb[0].mxu0
        %v2461 = vadd.f32 %v2356, %v2460
        %v2462 = vpop.f32.mrb[0].mxu0
        %2463 = vmatprep.mubr.f32.mxu0 0.0
        %2464 = vmatmul.mubr.f32.gmra.mrb[0].mxu0 %v1935
        %v2465 = vpop.f32.mrb[0].mxu0
        %v2466 = vadd.f32 %v2361, %v2465
        %v2467 = vpop.f32.mrb[0].mxu0
        %2468 = vmatprep.mubr.f32.mxu0 0.0
        %2469 = vmatmul.mubr.f32.gmra.mrb[0].mxu0 %v1936
        %v2470 = vpop.f32.mrb[0].mxu0
        %v2471 = vadd.f32 %v2366, %v2470
        %v2472 = vpop.f32.mrb[0].mxu0
        %2473 = vmatprep.mubr.f32.mxu0 0.0
        %2474 = vmatmul.mubr.f32.gmra.mrb[0].mxu0 %v1937
        %v2475 = vpop.f32.mrb[0].mxu0
        %v2476 = vadd.f32 %v2371, %v2475
        %v2477 = vpop.f32.mrb[0].mxu0
        %2478 = vdwg.mxu0
        %s2479 = scalar_lea.vmem [#allocation3], 48
        %v2480 = vld [vmem:[%s2479] sm:$0xff]
        %v2481 = vld [vmem:[%s2479 + $0x8] sm:$0xff]
        %v2482 = vld [vmem:[%s2479 + $0x18] sm:$0xff]
        %v2483 = vld [vmem:[%s2479 + $0x20] sm:$0xff]
        %v2484 = vld [vmem:[%s2479 + $0x30] sm:$0xff]
        %v2485 = vld [vmem:[%s2479 + $0x38] sm:$0xff]
        %v2486 = vld [vmem:[%s2479 + $0x48] sm:$0xff]
        %v2487 = vld [vmem:[%s2479 + $0x50] sm:$0xff]
        %v2488 = vld [vmem:[%s2479 + $0x1] sm:$0xff]
        %v2489 = vld [vmem:[%s2479 + $0x9] sm:$0xff]
        %v2490 = vld [vmem:[%s2479 + $0x19] sm:$0xff]
        %v2491 = vld [vmem:[%s2479 + $0x21] sm:$0xff]
        %v2492 = vld [vmem:[%s2479 + $0x31] sm:$0xff]
        %v2493 = vld [vmem:[%s2479 + $0x39] sm:$0xff]
        %v2494 = vld [vmem:[%s2479 + $0x49] sm:$0xff]
        %v2495 = vld [vmem:[%s2479 + $0x51] sm:$0xff]
        %v2496 = vld [vmem:[%s2479 + $0x2] sm:$0xff]
        %v2497 = vld [vmem:[%s2479 + $0xa] sm:$0xff]
        %v2498 = vld [vmem:[%s2479 + $0x1a] sm:$0xff]
        %v2499 = vld [vmem:[%s2479 + $0x22] sm:$0xff]
        %v2500 = vld [vmem:[%s2479 + $0x32] sm:$0xff]
        %v2501 = vld [vmem:[%s2479 + $0x3a] sm:$0xff]
        %v2502 = vld [vmem:[%s2479 + $0x4a] sm:$0xff]
        %v2503 = vld [vmem:[%s2479 + $0x52] sm:$0xff]
        %v2504 = vld [vmem:[#allocation12 + $0x300] sm:$0xff]
        %v2505 = vld [vmem:[#allocation12 + $0x308] sm:$0xff]
        %v2506 = vld [vmem:[#allocation12 + $0x310] sm:$0xff]
        %v2507 = vld [vmem:[#allocation12 + $0x318] sm:$0xff]
        %v2508 = vld [vmem:[#allocation12 + $0x320] sm:$0xff]
        %v2509 = vld [vmem:[#allocation12 + $0x328] sm:$0xff]
        %v2510 = vld [vmem:[#allocation12 + $0x330] sm:$0xff]
        %v2511 = vld [vmem:[#allocation12 + $0x338] sm:$0xff]
        %v2512 = vld [vmem:[#allocation12 + $0x340] sm:$0xff]
        %v2513 = vld [vmem:[#allocation12 + $0x348] sm:$0xff]
        %v2514 = vld [vmem:[#allocation12 + $0x350] sm:$0xff]
        %v2515 = vld [vmem:[#allocation12 + $0x358] sm:$0xff]
        %v2516 = vld [vmem:[#allocation12 + $0x360] sm:$0xff]
        %v2517 = vld [vmem:[#allocation12 + $0x368] sm:$0xff]
        %v2518 = vld [vmem:[#allocation12 + $0x370] sm:$0xff]
        %v2519 = vld [vmem:[#allocation12 + $0x378] sm:$0xff]
        %v2520 = vld [vmem:[#allocation12 + $0x380] sm:$0xff]
        %v2521 = vld [vmem:[#allocation12 + $0x388] sm:$0xff]
        %v2522 = vld [vmem:[#allocation12 + $0x390] sm:$0xff]
        %v2523 = vld [vmem:[#allocation12 + $0x398] sm:$0xff]
        %v2524 = vld [vmem:[#allocation12 + $0x3a0] sm:$0xff]
        %v2525 = vld [vmem:[#allocation12 + $0x3a8] sm:$0xff]
        %v2526 = vld [vmem:[#allocation12 + $0x3b0] sm:$0xff]
        %v2527 = vld [vmem:[#allocation12 + $0x3b8] sm:$0xff]
        %v2528 = vld [vmem:[#allocation12 + $0x3c0] sm:$0xff]
        %v2529 = vld [vmem:[#allocation12 + $0x3c8] sm:$0xff]
        %v2530 = vld [vmem:[#allocation12 + $0x3d0] sm:$0xff]
        %v2531 = vld [vmem:[#allocation12 + $0x3d8] sm:$0xff]
        %v2532 = vld [vmem:[#allocation12 + $0x3e0] sm:$0xff]
        %v2533 = vld [vmem:[#allocation12 + $0x3e8] sm:$0xff]
        %v2534 = vld [vmem:[#allocation12 + $0x3f0] sm:$0xff]
        %v2535 = vld [vmem:[#allocation12 + $0x3f8] sm:$0xff]
        %v2536 = vld [vmem:[#allocation12 + $0x400] sm:$0xff]
        %v2537 = vld [vmem:[#allocation12 + $0x408] sm:$0xff]
        %v2538 = vld [vmem:[#allocation12 + $0x410] sm:$0xff]
        %v2539 = vld [vmem:[#allocation12 + $0x418] sm:$0xff]
        %v2540 = vld [vmem:[#allocation12 + $0x420] sm:$0xff]
        %v2541 = vld [vmem:[#allocation12 + $0x428] sm:$0xff]
        %v2542 = vld [vmem:[#allocation12 + $0x430] sm:$0xff]
        %v2543 = vld [vmem:[#allocation12 + $0x438] sm:$0xff]
        %v2544 = vld [vmem:[#allocation12 + $0x440] sm:$0xff]
        %v2545 = vld [vmem:[#allocation12 + $0x448] sm:$0xff]
        %v2546 = vld [vmem:[#allocation12 + $0x450] sm:$0xff]
        %v2547 = vld [vmem:[#allocation12 + $0x458] sm:$0xff]
        %v2548 = vld [vmem:[#allocation12 + $0x460] sm:$0xff]
        %v2549 = vld [vmem:[#allocation12 + $0x468] sm:$0xff]
        %v2550 = vld [vmem:[#allocation12 + $0x470] sm:$0xff]
        %v2551 = vld [vmem:[#allocation12 + $0x478] sm:$0xff]
        %2552 = vmatprep.subr.mxu0 0.0
        %2553 = vmatpush1.msra.mxu0 %v2504
        %2554 = vmatprep.subr.mxu0 0.0
        %2555 = vmatpush1.msra.mxu0 %v2505
        %2556 = vmatprep.subr.mxu0 0.0
        %2557 = vmatpush1.msra.mxu0 %v2506
        %2558 = vmatprep.subr.mxu0 0.0
        %2559 = vmatpush1.msra.mxu0 %v2507
        %2560 = vmatprep.subr.mxu0 0.0
        %2561 = vmatpush1.msra.mxu0 %v2508
        %2562 = vmatprep.subr.mxu0 0.0
        %2563 = vmatpush1.msra.mxu0 %v2509
        %2564 = vmatprep.subr.mxu0 0.0
        %2565 = vmatpush1.msra.mxu0 %v2510
        %2566 = vmatprep.subr.mxu0 0.0
        %2567 = vmatpush1.msra.mxu0 %v2511
        %2568 = vmatprep.subr.mxu0 0.0
        %2569 = vmatpush1.msra.mxu0 %v2512
        %2570 = vmatprep.subr.mxu0 0.0
        %2571 = vmatpush1.msra.mxu0 %v2513
        %2572 = vmatprep.subr.mxu0 0.0
        %2573 = vmatpush1.msra.mxu0 %v2514
        %2574 = vmatprep.subr.mxu0 0.0
        %2575 = vmatpush1.msra.mxu0 %v2515
        %2576 = vmatprep.subr.mxu0 0.0
        %2577 = vmatpush1.msra.mxu0 %v2516
        %2578 = vmatprep.subr.mxu0 0.0
        %2579 = vmatpush1.msra.mxu0 %v2517
        %2580 = vmatprep.subr.mxu0 0.0
        %2581 = vmatpush1.msra.mxu0 %v2518
        %2582 = vmatprep.subr.mxu0 0.0
        %2583 = vmatpush1.msra.mxu0 %v2519
        %2584 = vmatprep.subr.mxu0 0.0
        %2585 = vmatpush1.msra.mxu0 %v2520
        %2586 = vmatprep.subr.mxu0 0.0
        %2587 = vmatpush1.msra.mxu0 %v2521
        %2588 = vmatprep.subr.mxu0 0.0
        %2589 = vmatpush1.msra.mxu0 %v2522
        %2590 = vmatprep.subr.mxu0 0.0
        %2591 = vmatpush1.msra.mxu0 %v2523
        %2592 = vmatprep.subr.mxu0 0.0
        %2593 = vmatpush1.msra.mxu0 %v2524
        %2594 = vmatprep.subr.mxu0 0.0
        %2595 = vmatpush1.msra.mxu0 %v2525
        %2596 = vmatprep.subr.mxu0 0.0
        %2597 = vmatpush1.msra.mxu0 %v2526
        %2598 = vmatprep.subr.mxu0 0.0
        %2599 = vmatpush1.msra.mxu0 %v2527
        %2600 = vmatprep.subr.mxu0 0.0
        %2601 = vmatpush1.msra.mxu0 %v2528
        %2602 = vmatprep.subr.mxu0 0.0
        %2603 = vmatpush1.msra.mxu0 %v2529
        %2604 = vmatprep.subr.mxu0 0.0
        %2605 = vmatpush1.msra.mxu0 %v2530
        %2606 = vmatprep.subr.mxu0 0.0
        %2607 = vmatpush1.msra.mxu0 %v2531
        %2608 = vmatprep.subr.mxu0 0.0
        %2609 = vmatpush1.msra.mxu0 %v2532
        %2610 = vmatprep.subr.mxu0 0.0
        %2611 = vmatpush1.msra.mxu0 %v2533
        %2612 = vmatprep.subr.mxu0 0.0
        %2613 = vmatpush1.msra.mxu0 %v2534
        %2614 = vmatprep.subr.mxu0 0.0
        %2615 = vmatpush1.msra.mxu0 %v2535
        %2616 = vmatprep.mubr.f32.mxu0 %v2488
        %2617 = vmatmul.mubr.f32.gmra.mrb[0].mxu0 %v2480
        %v2618 = vpop.f32.mrb[0].mxu0
        %v2619 = vadd.f32 0.0, %v2618
        %v2620 = vpop.f32.mrb[0].mxu0
        %2621 = vmatprep.mubr.f32.mxu0 %v2489
        %2622 = vmatmul.mubr.f32.gmra.mrb[0].mxu0 %v2481
        %v2623 = vpop.f32.mrb[0].mxu0
        %v2624 = vadd.f32 0.0, %v2623
        %v2625 = vpop.f32.mrb[0].mxu0
        %2626 = vmatprep.mubr.f32.mxu0 %v2490
        %2627 = vmatmul.mubr.f32.gmra.mrb[0].mxu0 %v2482
        %v2628 = vpop.f32.mrb[0].mxu0
        %v2629 = vadd.f32 0.0, %v2628
        %v2630 = vpop.f32.mrb[0].mxu0
        %2631 = vmatprep.mubr.f32.mxu0 %v2491
        %2632 = vmatmul.mubr.f32.gmra.mrb[0].mxu0 %v2483
        %v2633 = vpop.f32.mrb[0].mxu0
        %v2634 = vadd.f32 0.0, %v2633
        %v2635 = vpop.f32.mrb[0].mxu0
        %2636 = vmatprep.mubr.f32.mxu0 %v2492
        %2637 = vmatmul.mubr.f32.gmra.mrb[0].mxu0 %v2484
        %v2638 = vpop.f32.mrb[0].mxu0
        %v2639 = vadd.f32 0.0, %v2638
        %v2640 = vpop.f32.mrb[0].mxu0
        %2641 = vmatprep.mubr.f32.mxu0 %v2493
        %2642 = vmatmul.mubr.f32.gmra.mrb[0].mxu0 %v2485
        %v2643 = vpop.f32.mrb[0].mxu0
        %v2644 = vadd.f32 0.0, %v2643
        %v2645 = vpop.f32.mrb[0].mxu0
        %2646 = vmatprep.mubr.f32.mxu0 %v2494
        %2647 = vmatmul.mubr.f32.gmra.mrb[0].mxu0 %v2486
        %v2648 = vpop.f32.mrb[0].mxu0
        %v2649 = vadd.f32 0.0, %v2648
        %v2650 = vpop.f32.mrb[0].mxu0
        %2651 = vmatprep.mubr.f32.mxu0 %v2495
        %2652 = vmatmul.mubr.f32.gmra.mrb[0].mxu0 %v2487
        %v2653 = vpop.f32.mrb[0].mxu0
        %v2654 = vadd.f32 0.0, %v2653
        %v2655 = vpop.f32.mrb[0].mxu0
        %2656 = vdwg.mxu0
        %2657 = vmatprep.subr.mxu0 0.0
        %2658 = vmatpush1.msra.mxu0 %v2536
        %2659 = vmatprep.subr.mxu0 0.0
        %2660 = vmatpush1.msra.mxu0 %v2537
        %2661 = vmatprep.subr.mxu0 0.0
        %2662 = vmatpush1.msra.mxu0 %v2538
        %2663 = vmatprep.subr.mxu0 0.0
        %2664 = vmatpush1.msra.mxu0 %v2539
        %2665 = vmatprep.subr.mxu0 0.0
        %2666 = vmatpush1.msra.mxu0 %v2540
        %2667 = vmatprep.subr.mxu0 0.0
        %2668 = vmatpush1.msra.mxu0 %v2541
        %2669 = vmatprep.subr.mxu0 0.0
        %2670 = vmatpush1.msra.mxu0 %v2542
        %2671 = vmatprep.subr.mxu0 0.0
        %2672 = vmatpush1.msra.mxu0 %v2543
        %2673 = vmatprep.subr.mxu0 0.0
        %2674 = vmatpush1.msra.mxu0 %v2544
        %2675 = vmatprep.subr.mxu0 0.0
        %2676 = vmatpush1.msra.mxu0 %v2545
        %2677 = vmatprep.subr.mxu0 0.0
        %2678 = vmatpush1.msra.mxu0 %v2546
        %2679 = vmatprep.subr.mxu0 0.0
        %2680 = vmatpush1.msra.mxu0 %v2547
        %2681 = vmatprep.subr.mxu0 0.0
        %2682 = vmatpush1.msra.mxu0 %v2548
        %2683 = vmatprep.subr.mxu0 0.0
        %2684 = vmatpush1.msra.mxu0 %v2549
        %2685 = vmatprep.subr.mxu0 0.0
        %2686 = vmatpush1.msra.mxu0 %v2550
        %2687 = vmatprep.subr.mxu0 0.0
        %2688 = vmatpush1.msra.mxu0 %v2551
        %2689 = vmatprep.subr.mxu0 0.0
        %2690 = vmatpush1.msra.mxu0 0.0
        %2691 = vmatprep.subr.mxu0 0.0
        %2692 = vmatpush1.msra.mxu0 0.0
        %2693 = vmatprep.subr.mxu0 0.0
        %2694 = vmatpush1.msra.mxu0 0.0
        %2695 = vmatprep.subr.mxu0 0.0
        %2696 = vmatpush1.msra.mxu0 0.0
        %2697 = vmatprep.subr.mxu0 0.0
        %2698 = vmatpush1.msra.mxu0 0.0
        %2699 = vmatprep.subr.mxu0 0.0
        %2700 = vmatpush1.msra.mxu0 0.0
        %2701 = vmatprep.subr.mxu0 0.0
        %2702 = vmatpush1.msra.mxu0 0.0
        %2703 = vmatprep.subr.mxu0 0.0
        %2704 = vmatpush1.msra.mxu0 0.0
        %2705 = vmatprep.subr.mxu0 0.0
        %2706 = vmatpush1.msra.mxu0 0.0
        %2707 = vmatprep.subr.mxu0 0.0
        %2708 = vmatpush1.msra.mxu0 0.0
        %2709 = vmatprep.subr.mxu0 0.0
        %2710 = vmatpush1.msra.mxu0 0.0
        %2711 = vmatprep.subr.mxu0 0.0
        %2712 = vmatpush1.msra.mxu0 0.0
        %2713 = vmatprep.subr.mxu0 0.0
        %2714 = vmatpush1.msra.mxu0 0.0
        %2715 = vmatprep.subr.mxu0 0.0
        %2716 = vmatpush1.msra.mxu0 0.0
        %2717 = vmatprep.subr.mxu0 0.0
        %2718 = vmatpush1.msra.mxu0 0.0
        %2719 = vmatprep.subr.mxu0 0.0
        %2720 = vmatpush1.msra.mxu0 0.0
        %2721 = vmatprep.mubr.f32.mxu0 0.0
        %2722 = vmatmul.mubr.f32.gmra.mrb[0].mxu0 %v2496
        %v2723 = vpop.f32.mrb[0].mxu0
        %v2724 = vadd.f32 %v2619, %v2723
        %v2725 = vpop.f32.mrb[0].mxu0
        %2726 = vmatprep.mubr.f32.mxu0 0.0
        %2727 = vmatmul.mubr.f32.gmra.mrb[0].mxu0 %v2497
        %v2728 = vpop.f32.mrb[0].mxu0
        %v2729 = vadd.f32 %v2624, %v2728
        %v2730 = vpop.f32.mrb[0].mxu0
        %2731 = vmatprep.mubr.f32.mxu0 0.0
        %2732 = vmatmul.mubr.f32.gmra.mrb[0].mxu0 %v2498
        %v2733 = vpop.f32.mrb[0].mxu0
        %v2734 = vadd.f32 %v2629, %v2733
        %v2735 = vpop.f32.mrb[0].mxu0
        %2736 = vmatprep.mubr.f32.mxu0 0.0
        %2737 = vmatmul.mubr.f32.gmra.mrb[0].mxu0 %v2499
        %v2738 = vpop.f32.mrb[0].mxu0
        %v2739 = vadd.f32 %v2634, %v2738
        %v2740 = vpop.f32.mrb[0].mxu0
        %2741 = vmatprep.mubr.f32.mxu0 0.0
        %2742 = vmatmul.mubr.f32.gmra.mrb[0].mxu0 %v2500
        %v2743 = vpop.f32.mrb[0].mxu0
        %v2744 = vadd.f32 %v2639, %v2743
        %v2745 = vpop.f32.mrb[0].mxu0
        %2746 = vmatprep.mubr.f32.mxu0 0.0
        %2747 = vmatmul.mubr.f32.gmra.mrb[0].mxu0 %v2501
        %v2748 = vpop.f32.mrb[0].mxu0
        %v2749 = vadd.f32 %v2644, %v2748
        %v2750 = vpop.f32.mrb[0].mxu0
        %2751 = vmatprep.mubr.f32.mxu0 0.0
        %2752 = vmatmul.mubr.f32.gmra.mrb[0].mxu0 %v2502
        %v2753 = vpop.f32.mrb[0].mxu0
        %v2754 = vadd.f32 %v2649, %v2753
        %v2755 = vpop.f32.mrb[0].mxu0
        %2756 = vmatprep.mubr.f32.mxu0 0.0
        %2757 = vmatmul.mubr.f32.gmra.mrb[0].mxu0 %v2503
        %v2758 = vpop.f32.mrb[0].mxu0
        %v2759 = vadd.f32 %v2654, %v2758
        %v2760 = vpop.f32.mrb[0].mxu0
        %2761 = vdwg.mxu0
        %v2762 = vadd.f32 %v2441, %v2724
        %v2763 = vadd.f32 %v2446, %v2729
        %v2764 = vadd.f32 %v2451, %v2734
        %v2765 = vadd.f32 %v2456, %v2739
        %v2766 = vadd.f32 %v2461, %v2744
        %v2767 = vadd.f32 %v2466, %v2749
        %v2768 = vadd.f32 %v2471, %v2754
        %v2769 = vadd.f32 %v2476, %v2759
        %v2771 = vlaneseq
        %v2772 = vshrl.u32 %v2771, 7
        %v2773 = vsub.s32 0, %v2772
        %v2774 = vrot.slane %v677, %v2773
        %v2776 = vmul.f32 %v2762, %v2774
        %v2777 = vmul.f32 %v2763, %v2774
        %v2778 = vmul.f32 %v2764, %v2774
        %v2779 = vmul.f32 %v2765, %v2774
        %v2780 = vmul.f32 %v2766, %v2774
        %v2781 = vmul.f32 %v2767, %v2774
        %v2782 = vmul.f32 %v2768, %v2774
        %v2783 = vmul.f32 %v2769, %v2774
        %v2785 = vlaneseq
        %v2786 = vshrl.u32 %v2785, 7
        %v2787 = vsub.s32 0, %v2786
        %v2788 = vrot.slane %v1913, %v2787
        %v2790 = vadd.f32 %v2776, %v2788
        %v2791 = vadd.f32 %v2777, %v2788
        %v2792 = vadd.f32 %v2778, %v2788
        %v2793 = vadd.f32 %v2779, %v2788
        %v2794 = vadd.f32 %v2780, %v2788
        %v2795 = vadd.f32 %v2781, %v2788
        %v2796 = vadd.f32 %v2782, %v2788
        %v2797 = vadd.f32 %v2783, %v2788
        %vm2798 = vcmp.ge.f32.partialorder %v2790, 0.0
        %vm2799 = vcmp.ge.f32.partialorder %v2791, 0.0
        %vm2800 = vcmp.ge.f32.partialorder %v2792, 0.0
        %vm2801 = vcmp.ge.f32.partialorder %v2793, 0.0
        %vm2802 = vcmp.ge.f32.partialorder %v2794, 0.0
        %vm2803 = vcmp.ge.f32.partialorder %v2795, 0.0
        %vm2804 = vcmp.ge.f32.partialorder %v2796, 0.0
        %vm2805 = vcmp.ge.f32.partialorder %v2797, 0.0
        %v2806 = vmul.f32 %v2790, 0.2
        %v2807 = vmul.f32 %v2791, 0.2
        %v2808 = vmul.f32 %v2792, 0.2
        %v2809 = vmul.f32 %v2793, 0.2
        %v2810 = vmul.f32 %v2794, 0.2
        %v2811 = vmul.f32 %v2795, 0.2
        %v2812 = vmul.f32 %v2796, 0.2
        %v2813 = vmul.f32 %v2797, 0.2
        %v2814 = vsel %vm2798, %v2790, %v2806
        %v2815 = vsel %vm2799, %v2791, %v2807
        %v2816 = vsel %vm2800, %v2792, %v2808
        %v2817 = vsel %vm2801, %v2793, %v2809
        %v2818 = vsel %vm2802, %v2794, %v2810
        %v2819 = vsel %vm2803, %v2795, %v2811
        %v2820 = vsel %vm2804, %v2796, %v2812
        %v2821 = vsel %vm2805, %v2797, %v2813
        %v2822 = vld [vmem:[%s557] sm:$0xff]
        %v2823 = vld [vmem:[%s557 + $0x8] sm:$0xff]
        %v2824 = vld [vmem:[%s557 + $0x10] sm:$0xff]
        %v2825 = vld [vmem:[%s557 + $0x18] sm:$0xff]
        %v2826 = vld [vmem:[%s557 + $0x20] sm:$0xff]
        %v2827 = vld [vmem:[%s557 + $0x28] sm:$0xff]
        %v2828 = vld [vmem:[%s557 + $0x30] sm:$0xff]
        %v2829 = vld [vmem:[%s557 + $0x38] sm:$0xff]
        %v2830 = vld [vmem:[#allocation13] sm:$0xff]
        %v2831 = vld [vmem:[#allocation13 + $0x8] sm:$0xff]
        %v2832 = vld [vmem:[#allocation13 + $0x10] sm:$0xff]
        %v2833 = vld [vmem:[#allocation13 + $0x18] sm:$0xff]
        %v2834 = vld [vmem:[#allocation13 + $0x20] sm:$0xff]
        %v2835 = vld [vmem:[#allocation13 + $0x28] sm:$0xff]
        %v2836 = vld [vmem:[#allocation13 + $0x30] sm:$0xff]
        %v2837 = vld [vmem:[#allocation13 + $0x38] sm:$0xff]
        %v2838 = vld [vmem:[#allocation13 + $0x40] sm:$0xff]
        %v2839 = vld [vmem:[#allocation13 + $0x48] sm:$0xff]
        %v2840 = vld [vmem:[#allocation13 + $0x50] sm:$0xff]
        %v2841 = vld [vmem:[#allocation13 + $0x58] sm:$0xff]
        %v2842 = vld [vmem:[#allocation13 + $0x60] sm:$0xff]
        %v2843 = vld [vmem:[#allocation13 + $0x68] sm:$0xff]
        %v2844 = vld [vmem:[#allocation13 + $0x70] sm:$0xff]
        %v2845 = vld [vmem:[#allocation13 + $0x78] sm:$0xff]
        %2846 = vmatprep.subr.mxu0 0.0
        %2847 = vmatpush1.msra.mxu0 %v2830
        %2848 = vmatprep.subr.mxu0 0.0
        %2849 = vmatpush1.msra.mxu0 %v2831
        %2850 = vmatprep.subr.mxu0 0.0
        %2851 = vmatpush1.msra.mxu0 %v2832
        %2852 = vmatprep.subr.mxu0 0.0
        %2853 = vmatpush1.msra.mxu0 %v2833
        %2854 = vmatprep.subr.mxu0 0.0
        %2855 = vmatpush1.msra.mxu0 %v2834
        %2856 = vmatprep.subr.mxu0 0.0
        %2857 = vmatpush1.msra.mxu0 %v2835
        %2858 = vmatprep.subr.mxu0 0.0
        %2859 = vmatpush1.msra.mxu0 %v2836
        %2860 = vmatprep.subr.mxu0 0.0
        %2861 = vmatpush1.msra.mxu0 %v2837
        %2862 = vmatprep.subr.mxu0 0.0
        %2863 = vmatpush1.msra.mxu0 %v2838
        %2864 = vmatprep.subr.mxu0 0.0
        %2865 = vmatpush1.msra.mxu0 %v2839
        %2866 = vmatprep.subr.mxu0 0.0
        %2867 = vmatpush1.msra.mxu0 %v2840
        %2868 = vmatprep.subr.mxu0 0.0
        %2869 = vmatpush1.msra.mxu0 %v2841
        %2870 = vmatprep.subr.mxu0 0.0
        %2871 = vmatpush1.msra.mxu0 %v2842
        %2872 = vmatprep.subr.mxu0 0.0
        %2873 = vmatpush1.msra.mxu0 %v2843
        %2874 = vmatprep.subr.mxu0 0.0
        %2875 = vmatpush1.msra.mxu0 %v2844
        %2876 = vmatprep.subr.mxu0 0.0
        %2877 = vmatpush1.msra.mxu0 %v2845
        %2878 = vmatprep.subr.mxu0 0.0
        %2879 = vmatpush1.msra.mxu0 0.0
        %2880 = vmatprep.subr.mxu0 0.0
        %2881 = vmatpush1.msra.mxu0 0.0
        %2882 = vmatprep.subr.mxu0 0.0
        %2883 = vmatpush1.msra.mxu0 0.0
        %2884 = vmatprep.subr.mxu0 0.0
        %2885 = vmatpush1.msra.mxu0 0.0
        %2886 = vmatprep.subr.mxu0 0.0
        %2887 = vmatpush1.msra.mxu0 0.0
        %2888 = vmatprep.subr.mxu0 0.0
        %2889 = vmatpush1.msra.mxu0 0.0
        %2890 = vmatprep.subr.mxu0 0.0
        %2891 = vmatpush1.msra.mxu0 0.0
        %2892 = vmatprep.subr.mxu0 0.0
        %2893 = vmatpush1.msra.mxu0 0.0
        %2894 = vmatprep.subr.mxu0 0.0
        %2895 = vmatpush1.msra.mxu0 0.0
        %2896 = vmatprep.subr.mxu0 0.0
        %2897 = vmatpush1.msra.mxu0 0.0
        %2898 = vmatprep.subr.mxu0 0.0
        %2899 = vmatpush1.msra.mxu0 0.0
        %2900 = vmatprep.subr.mxu0 0.0
        %2901 = vmatpush1.msra.mxu0 0.0
        %2902 = vmatprep.subr.mxu0 0.0
        %2903 = vmatpush1.msra.mxu0 0.0
        %2904 = vmatprep.subr.mxu0 0.0
        %2905 = vmatpush1.msra.mxu0 0.0
        %2906 = vmatprep.subr.mxu0 0.0
        %2907 = vmatpush1.msra.mxu0 0.0
        %2908 = vmatprep.subr.mxu0 0.0
        %2909 = vmatpush1.msra.mxu0 0.0
        %2910 = vmatprep.mubr.f32.mxu0 0.0
        %2911 = vmatmul.mubr.f32.gmra.mrb[0].mxu0 %v2822
        %v2912 = vpop.f32.mrb[0].mxu0
        %v2913 = vadd.f32 %v2814, %v2912
        %v2914 = vpop.f32.mrb[0].mxu0
        %2915 = vmatprep.mubr.f32.mxu0 0.0
        %2916 = vmatmul.mubr.f32.gmra.mrb[0].mxu0 %v2823
        %v2917 = vpop.f32.mrb[0].mxu0
        %v2918 = vadd.f32 %v2815, %v2917
        %v2919 = vpop.f32.mrb[0].mxu0
        %2920 = vmatprep.mubr.f32.mxu0 0.0
        %2921 = vmatmul.mubr.f32.gmra.mrb[0].mxu0 %v2824
        %v2922 = vpop.f32.mrb[0].mxu0
        %v2923 = vadd.f32 %v2816, %v2922
        %v2924 = vpop.f32.mrb[0].mxu0
        %2925 = vmatprep.mubr.f32.mxu0 0.0
        %2926 = vmatmul.mubr.f32.gmra.mrb[0].mxu0 %v2825
        %v2927 = vpop.f32.mrb[0].mxu0
        %v2928 = vadd.f32 %v2817, %v2927
        %v2929 = vpop.f32.mrb[0].mxu0
        %2930 = vmatprep.mubr.f32.mxu0 0.0
        %2931 = vmatmul.mubr.f32.gmra.mrb[0].mxu0 %v2826
        %v2932 = vpop.f32.mrb[0].mxu0
        %v2933 = vadd.f32 %v2818, %v2932
        %v2934 = vpop.f32.mrb[0].mxu0
        %2935 = vmatprep.mubr.f32.mxu0 0.0
        %2936 = vmatmul.mubr.f32.gmra.mrb[0].mxu0 %v2827
        %v2937 = vpop.f32.mrb[0].mxu0
        %v2938 = vadd.f32 %v2819, %v2937
        %v2939 = vpop.f32.mrb[0].mxu0
        %2940 = vmatprep.mubr.f32.mxu0 0.0
        %2941 = vmatmul.mubr.f32.gmra.mrb[0].mxu0 %v2828
        %v2942 = vpop.f32.mrb[0].mxu0
        %v2943 = vadd.f32 %v2820, %v2942
        %v2944 = vpop.f32.mrb[0].mxu0
        %2945 = vmatprep.mubr.f32.mxu0 0.0
        %2946 = vmatmul.mubr.f32.gmra.mrb[0].mxu0 %v2829
        %v2947 = vpop.f32.mrb[0].mxu0
        %v2948 = vadd.f32 %v2821, %v2947
        %v2949 = vpop.f32.mrb[0].mxu0
        %2950 = vdwg.mxu0
        %2951 = vst [vmem:[%s649] sm:$0xff] %v2913
        %2952 = vst [vmem:[%s649 + $0x8] sm:$0xff] %v2918
        %2953 = vst [vmem:[%s649 + $0x10] sm:$0xff] %v2923
        %2954 = vst [vmem:[%s649 + $0x18] sm:$0xff] %v2928
        %2955 = vst [vmem:[%s649 + $0x20] sm:$0xff] %v2933
        %2956 = vst [vmem:[%s649 + $0x28] sm:$0xff] %v2938
        %2957 = vst [vmem:[%s649 + $0x30] sm:$0xff] %v2943
        %2958 = vst [vmem:[%s649 + $0x38] sm:$0xff] %v2948
        %s2959 = sand.u32 %s365, 1
        %s2960 = scalar_lea.sflag [#allocation6], %s2959
        %s2961 = sand.u32 %s365, 1
        %s2962 = smul.addr %s2961, 64
        %s2963 = scalar_lea.vmem [#allocation15], %s2962
        // Predicated region
        $region109: #{tpu_custom_call.1} parent=67 // pred_check
          %p2964 = pneg %p375
        $region110: #{tpu_custom_call.1} parent=67 // pred_check_branch
          %2966 = sbr.rel (%p2964) target = $region112
        $region111: #{tpu_custom_call.1} parent=67 // pred_region
          %s2967 = smul.u32 4, %s39
          %s2969 = ssub.s32 1024, 1024
          %2970 = vsyncadd %s2960, %s2969
          %s2971 = smul.addr %s2967, 2
          %s2972 = smul.addr %s38, 32
          %s2973 = sadd.s32 %s2971, %s2972
          %s2974 = smul.addr %s2973, 128
          %s2975 = scalar_lea.hbm %s12, %s2974
          %s2976 = sshll.u32 %s2963, 4
          %s2977 = int_to_ptr.vmem [resolvable:$true] %s2976
          %2982 = dma.vmem_to_hbm [thread:$0]  %s2977, 1024, %s2975, %s2960, 128, 128, 8
        $region112: #{tpu_custom_call.1} parent=67 // pred_fallthru
          _
      $region68: #{tpu_custom_call.1} parent=5 // pred_fallthru
        _
      %p2983 = scmp.le.s32.totalorder 2, %s29
      // Predicated region
      $region113: #{tpu_custom_call.1} parent=5 // pred_check
        %p2984 = pneg %p2983
      $region114: #{tpu_custom_call.1} parent=5 // pred_check_branch
        %2986 = sbr.rel (%p2984) target = $region116
      $region115: #{tpu_custom_call.1} parent=5 // pred_region
        %s2987 = ssub.s32 %s29, 2
        // Predicated region
        $region117: #{tpu_custom_call.1} parent=115 // pred_check
          %p2988 = pneg %p381
        $region118: #{tpu_custom_call.1} parent=115 // pred_check_branch
          %2990 = sbr.rel (%p2988) target = $region120
        $region119: #{tpu_custom_call.1} parent=115 // pred_region
          %s2991 = sand.u32 %s366, 1
          %s2992 = scalar_lea.sflag [#allocation6], %s2991
          %s2993 = sand.u32 %s366, 1
          %s2994 = smul.addr %s2993, 64
          %s2995 = scalar_lea.vmem [#allocation15], %s2994
          %2996 = dma.done %s2992, 1024
        $region120: #{tpu_custom_call.1} parent=115 // pred_fallthru
          _
      $region116: #{tpu_custom_call.1} parent=5 // pred_fallthru
        _
    $region6: #{tpu_custom_call.1} parent=1 // loop_footer
      %s33 = sadd.s32 1, %s29
    $region7: #{tpu_custom_call.1} parent=1 // loop_footer_branch
      %28 = sbr.rel target = $region3
    $region8: #{tpu_custom_call.1} parent=1 // loop_exit
      _
    %2997 = vsyncpa [#allocation5], 1
    %s2998 = scalar_lea.sflag [#allocation5], 1
    %2999 = vsyncpa %s2998, 1
    %3000 = vsyncpa [#allocation8], 1
    %s3001 = scalar_lea.sflag [#allocation8], 1
    %3002 = vsyncpa %s3001, 1
    %3003 = vsyncpa [#allocation11], 1
    %3004 = vsyncpa [#allocation14], 1
    %3005 = vsyncpa [#allocation6], 1
    %s3006 = scalar_lea.sflag [#allocation6], 1
    %3007 = vsyncpa %s3006, 1

</llo_original>
